<compile_context>
chip_gen: v5e
topology: v5e:2x2
jax: 0.10.0
libtpu: 0.0.40
codegen_flags: <defaults>
</compile_context>

<pallas_src>
import functools
import math

import jax
import jax.numpy as jnp
from jax.experimental import pallas as pl
from jax.experimental.pallas import tpu as pltpu

_MEAN = (0.485, 0.456, 0.406)
_STD = (0.229, 0.224, 0.225)

# MXU operand dtype (f32 accumulate).  Elementwise math stays f32 everywhere.
_MXU_DTYPE = jnp.bfloat16

_K_RAW = 27   # 3 input channels * 3x3 taps
_K_PAD = 32   # zero-padded contraction depth (lane/sublane friendlier than 27)


# ----------------------------- Pallas kernels ------------------------------

def _stem_kernel(xpad_ref, wt_ref, b_ref, o_ref, *, tile_h, w_out):
    """Fused (folded) ImageNet-norm + in-kernel im2col + 3x3 conv + ReLU.

    xpad_ref : (1, 3, H+2, W+2) f32   raw RGB padded with per-channel ImageNet mean
    wt_ref   : (enc_ch, K_PAD)  bf16  normalization-folded conv weight (transposed)
    b_ref    : (enc_ch, 1)      f32   normalization-folded bias
    o_ref    : (1, tile_h, enc_ch, W) f32
    """
    row0 = pl.multiple_of(pl.program_id(1) * tile_h, tile_h)
    wt = wt_ref[...]                                             # (enc_ch, K_PAD)
    bias = b_ref[...]                                            # (enc_ch, 1)
    zpad = jnp.zeros((_K_PAD - _K_RAW, w_out), jnp.float32)

    for r in range(tile_h):                                      # static unroll
        pieces = []
        for c in range(3):
            for dy in range(3):
                row = xpad_ref[0, c, pl.ds(row0 + r + dy, 1), :]  # (1, W+2)
                for dx in range(3):
                    pieces.append(row[:, dx:dx + w_out])          # (1, W)
        patches = jnp.concatenate(pieces + [zpad], axis=0)        # (K_PAD, W)
        acc = jnp.dot(wt, patches.astype(_MXU_DTYPE),
                      preferred_element_type=jnp.float32)         # (enc_ch, W)
        o_ref[0, r] = jnp.maximum(acc + bias, 0.0)


def _vit_kernel(tok_ref, wp_ref, bp_ref, pos_ref,
                ln1g_ref, ln1b_ref, wqkv_ref, bqkv_ref, wpr_ref, bpr_ref,
                ln2g_ref, ln2b_ref, wm1_ref, bm1_ref, wm2_ref, bm2_ref,
                lnfg_ref, lnfb_ref, wh_ref, bh_ref, o_ref, *, emb, heads, scale):
    """Whole ViT stand-in for one batch element, fully fused:
    patch-embed -> pre-LN MHA -> MLP -> final LN -> fused bon/cor heads."""
    f32 = jnp.float32

    def mm(a, w_ref_):
        # bf16 MXU operands, f32 accumulation.
        return jnp.dot(a.astype(_MXU_DTYPE), w_ref_[...], preferred_element_type=f32)

    def mm_nt(a, b):
        # a (n, d) @ b (m, d)^T  -> (n, m), avoids an explicit transpose.
        return jax.lax.dot_general(a.astype(_MXU_DTYPE), b.astype(_MXU_DTYPE),
                                   (((1,), (1,)), ((), ())),
                                   preferred_element_type=f32)

    def ln(v, g_ref, b_ref_):
        mu = jnp.mean(v, axis=-1, keepdims=True)
        var = jnp.mean(jnp.square(v - mu), axis=-1, keepdims=True)
        return (v - mu) * jax.lax.rsqrt(var + 1e-5) * g_ref[...] + b_ref_[...]

    # patch embedding + positional embedding
    tok = mm(tok_ref[0], wp_ref) + bp_ref[...] + pos_ref[...]          # (N, emb) f32

    # pre-LN multi-head self-attention
    h = ln(tok, ln1g_ref, ln1b_ref)
    qkv = mm(h, wqkv_ref) + bqkv_ref[...]                              # (N, 3*emb)
    dh = emb // heads
    head_outs = []
    # TODO(synk): for long sequences switch to a flash-style loop so the (N, N)
    # score matrix never materializes; at this model's token counts it fits VMEM.
    for hd in range(heads):                                            # static unroll
        q = qkv[:, hd * dh:(hd + 1) * dh]
        k = qkv[:, emb + hd * dh:emb + (hd + 1) * dh]
        v = qkv[:, 2 * emb + hd * dh:2 * emb + (hd + 1) * dh]
        s = mm_nt(q, k) * scale                                        # (N, N) f32
        s = s - jnp.max(s, axis=-1, keepdims=True)
        p = jnp.exp(s)
        p = p * pl.reciprocal(jnp.sum(p, axis=-1, keepdims=True), approx=True)
        head_outs.append(jnp.dot(p.astype(_MXU_DTYPE), v.astype(_MXU_DTYPE),
                                 preferred_element_type=f32))          # (N, dh)
    attn = jnp.concatenate(head_outs, axis=1)                          # (N, emb)
    tok = tok + mm(attn, wpr_ref) + bpr_ref[...]

    # MLP
    h = ln(tok, ln2g_ref, ln2b_ref)
    # TODO(synk): torch nn.GELU defaults to exact erf; tanh approximation kept here.
    h = jax.nn.gelu(mm(h, wm1_ref) + bm1_ref[...])
    tok = tok + mm(h, wm2_ref) + bm2_ref[...]

    feat = ln(tok, lnfg_ref, lnfb_ref)                                 # (N, emb)

    # fused boundary(2) + corner(1) heads, written lane-dense as (3, N)
    o_ref[0] = mm_nt(wh_ref[...], feat) + bh_ref[...]


# ----------------------------- kernel wrappers ------------------------------

def conv_stem(xpad, w_enc_t, b_enc, *, enc_ch, tile_h):
    B, _, hp2, wp2 = xpad.shape
    H, W = hp2 - 2, wp2 - 2
    kernel = functools.partial(_stem_kernel, tile_h=tile_h, w_out=W)
    return pl.pallas_call(
        kernel,
        grid=(B, H // tile_h),
        out_shape=jax.ShapeDtypeStruct((B, H, enc_ch, W), jnp.float32),
        in_specs=[
            pl.BlockSpec((1, 3, hp2, wp2), lambda b, h: (b, 0, 0, 0)),
            pl.BlockSpec(w_enc_t.shape, lambda b, h: (0, 0)),
            pl.BlockSpec(b_enc.shape, lambda b, h: (0, 0)),
        ],
        out_specs=pl.BlockSpec((1, tile_h, enc_ch, W), lambda b, h: (b, h, 0, 0)),
        compiler_params=pltpu.CompilerParams(
            dimension_semantics=("parallel", "parallel")),
    )(xpad, w_enc_t, b_enc)


_VIT_PARAM_ORDER = ("w_patch", "b_patch", "pos_emb",
                    "ln1_g", "ln1_b", "w_qkv", "b_qkv", "w_proj", "b_proj",
                    "ln2_g", "ln2_b", "w_mlp1", "b_mlp1", "w_mlp2", "b_mlp2",
                    "lnf_g", "lnf_b", "w_head_t", "b_head")


def vit_forward(tok, kp, *, emb, heads):
    B, n_tokens, _ = tok.shape
    weights = [kp[name] for name in _VIT_PARAM_ORDER]
    in_specs = [pl.BlockSpec((1,) + tok.shape[1:], lambda b: (b, 0, 0))]
    for w in weights:
        in_specs.append(pl.BlockSpec(w.shape, lambda b, _z=(0,) * w.ndim: _z))
    kernel = functools.partial(_vit_kernel, emb=emb, heads=heads,
                               scale=1.0 / math.sqrt(emb // heads))
    return pl.pallas_call(
        kernel,
        grid=(B,),
        out_shape=jax.ShapeDtypeStruct((B, 3, n_tokens), jnp.float32),
        in_specs=in_specs,
        out_specs=pl.BlockSpec((1, 3, n_tokens), lambda b: (b, 0, 0)),
        compiler_params=pltpu.CompilerParams(dimension_semantics=("parallel",)),
    )(tok, *weights)


# ------------------------------ host-side glue ------------------------------

def _patchify(x, p):
    # (B, C, H, W) -> (B, N, C*p*p)  with N = (H/p)*(W/p); pure layout op.
    B, C, H, W = x.shape
    x = x.reshape(B, C, H // p, p, W // p, p)
    x = jnp.transpose(x, (0, 2, 4, 1, 3, 5))
    return x.reshape(B, (H // p) * (W // p), C * p * p)


def prepare_kernel_params(p):
    """One-time repacking of model params into kernel-friendly buffers:
    fold ImageNet normalization into the conv stem, transpose / lane-pad, fuse the
    bon+cor heads, and cast MXU operands to bf16 (halves weight DMA)."""
    mean = jnp.asarray(_MEAN, jnp.float32)
    std = jnp.asarray(_STD, jnp.float32)
    enc_ch = p["w_enc"].shape[1]

    # conv(normalize(x)) == conv_folded(mean_padded(x)) with
    #   w' = w / std[c]   and   b' = b - sum_{c,tap} w * mean[c]/std[c]
    inv_std = jnp.repeat(1.0 / std, 9)                     # (27,) ordered (c, tap)
    mean_over_std = jnp.repeat(mean / std, 9)              # (27,)
    w_fold = p["w_enc"] * inv_std[:, None]                 # (27, enc_ch)
    b_fold = p["b_enc"] - jnp.sum(p["w_enc"] * mean_over_std[:, None], axis=0)
    w_enc_t = jnp.zeros((enc_ch, _K_PAD), jnp.float32).at[:, :_K_RAW].set(w_fold.T)

    def row(v):
        return v.reshape(1, -1).astype(jnp.float32)

    return {
        "w_enc_t": w_enc_t.astype(_MXU_DTYPE),
        "b_enc": b_fold.reshape(enc_ch, 1).astype(jnp.float32),
        "w_patch": p["w_patch"].astype(_MXU_DTYPE),
        "b_patch": row(p["b_patch"]),
        "pos_emb": p["pos_emb"].astype(jnp.float32),
        "ln1_g": row(p["ln1_g"]), "ln1_b": row(p["ln1_b"]),
        "w_qkv": p["w_qkv"].astype(_MXU_DTYPE), "b_qkv": row(p["b_qkv"]),
        "w_proj": p["w_proj"].astype(_MXU_DTYPE), "b_proj": row(p["b_proj"]),
        "ln2_g": row(p["ln2_g"]), "ln2_b": row(p["ln2_b"]),
        "w_mlp1": p["w_mlp1"].astype(_MXU_DTYPE), "b_mlp1": row(p["b_mlp1"]),
        "w_mlp2": p["w_mlp2"].astype(_MXU_DTYPE), "b_mlp2": row(p["b_mlp2"]),
        "lnf_g": row(p["lnf_g"]), "lnf_b": row(p["lnf_b"]),
        # fused heads: column order [bon0, bon1, cor] matches torch.cat((bon, cor), dim=1)
        "w_head_t": jnp.concatenate([p["w_bon"], p["w_cor"]], axis=1).T.astype(_MXU_DTYPE),
        "b_head": jnp.concatenate([p["b_bon"], p["b_cor"]]).reshape(3, 1).astype(jnp.float32),
    }


# ------------------------------- parameters ---------------------------------

def init_params(key, *, c_in=4, emb=32, mlp=64, enc_ch=16, patch=4, n_tokens=16):
    keys = jax.random.split(key, 9)

    def w(k, shape, scale=0.02):
        return scale * jax.random.normal(k, shape, dtype=jnp.float32)

    p = {}
    # encoder stand-in (3x3 conv stem)
    p["w_enc"] = w(keys[0], (3 * 9, enc_ch))
    p["b_enc"] = jnp.zeros((enc_ch,), jnp.float32)
    # ViT patch embedding + positional embedding
    p["w_patch"] = w(keys[1], (c_in * patch * patch, emb))
    p["b_patch"] = jnp.zeros((emb,), jnp.float32)
    p["pos_emb"] = w(keys[2], (n_tokens, emb))
    # transformer block
    p["ln1_g"] = jnp.ones((emb,), jnp.float32)
    p["ln1_b"] = jnp.zeros((emb,), jnp.float32)
    p["w_qkv"] = w(keys[3], (emb, 3 * emb))
    p["b_qkv"] = jnp.zeros((3 * emb,), jnp.float32)
    p["w_proj"] = w(keys[4], (emb, emb))
    p["b_proj"] = jnp.zeros((emb,), jnp.float32)
    p["ln2_g"] = jnp.ones((emb,), jnp.float32)
    p["ln2_b"] = jnp.zeros((emb,), jnp.float32)
    p["w_mlp1"] = w(keys[5], (emb, mlp))
    p["b_mlp1"] = jnp.zeros((mlp,), jnp.float32)
    p["w_mlp2"] = w(keys[6], (mlp, emb))
    p["b_mlp2"] = jnp.zeros((emb,), jnp.float32)
    p["lnf_g"] = jnp.ones((emb,), jnp.float32)
    p["lnf_b"] = jnp.zeros((emb,), jnp.float32)
    # modality heads: boundary (2 ch) + corner (1 ch)
    p["w_bon"] = w(keys[7], (emb, 2))
    p["b_bon"] = jnp.zeros((2,), jnp.float32)
    p["w_cor"] = w(keys[8], (emb, 1))
    p["b_cor"] = jnp.zeros((1,), jnp.float32)
    return p


# -------------------------------- forward -----------------------------------

def panovit_forward(params, x, *, emb=32, heads=2, patch=4, stem_tile_h=8):
    """PanoVIT.forward: returns (cat((pred_bon, pred_cor), dim=1), encoder feature).

    res_f is returned in kernel-native (B, H, enc_ch, W) layout (per-row (enc_ch, W)
    tiles, lane axis = W); it is computed but unused by the heads, as in the reference.
    """
    B, C, H, W = x.shape
    enc_ch = params["w_enc"].shape[1]
    kp = prepare_kernel_params(params)

    # --- encoder path: ImageNet normalization folded into the conv weights.
    # Padding the RAW image with the per-channel mean makes the folded conv equal
    # zero-padding of the normalized image exactly (no full-size affine pass).
    img = x[:, 0:3]
    xpad = jnp.stack(
        [jnp.pad(img[:, c], ((0, 0), (1, 1), (1, 1)), constant_values=_MEAN[c])
         for c in range(3)], axis=1)                                   # (B, 3, H+2, W+2)
    tile_h = math.gcd(H, stem_tile_h)
    res_f = conv_stem(xpad, kp["w_enc_t"], kp["b_enc"], enc_ch=enc_ch, tile_h=tile_h)

    # --- transformer ('ViT' branch) consumes the raw 4-channel x, as in the reference.
    tok = _patchify(x, patch)                                          # (B, N, C*p*p)
    out = vit_forward(tok, kp, emb=emb, heads=heads)                   # (B, 3, N)
    return out, res_f


# --------------------------------- main --------------------------------------

if __name__ == "__main__":
    key = jax.random.PRNGKey(0)
    k_param, k_x = jax.random.split(key)

    B, C, H, W = 2, 4, 16, 16
    patch, emb, heads, enc_ch = 4, 32, 2, 16
    n_tokens = (H // patch) * (W // patch)

    params = init_params(k_param, c_in=C, emb=emb, mlp=64, enc_ch=enc_ch,
                         patch=patch, n_tokens=n_tokens)
    x = jax.random.normal(k_x, (B, C, H, W), dtype=jnp.float32)

    fwd = jax.jit(functools.partial(panovit_forward, emb=emb, heads=heads, patch=patch))
    out, res_f = fwd(params, x)
    jax.block_until_ready((out, res_f))

    assert out.shape == (B, 3, n_tokens), out.shape
    assert out.dtype == jnp.float32
    assert res_f.shape == (B, H, enc_ch, W), res_f.shape
    assert bool(jnp.all(jnp.isfinite(out))) and bool(jnp.all(jnp.isfinite(res_f)))
    print("KERNEL_OK")
</pallas_src>

<mosaic_0001>
module attributes {stable_mosaic.version = 11 : i64} {
  func.func @_vit_kernel(%arg0: i32, %arg1: memref<1x16x64xf32, #tpu.memory_space<vmem>>, %arg2: memref<64x32xbf16, #tpu.memory_space<vmem>>, %arg3: memref<1x32xf32, #tpu.memory_space<vmem>>, %arg4: memref<16x32xf32, #tpu.memory_space<vmem>>, %arg5: memref<1x32xf32, #tpu.memory_space<vmem>>, %arg6: memref<1x32xf32, #tpu.memory_space<vmem>>, %arg7: memref<32x96xbf16, #tpu.memory_space<vmem>>, %arg8: memref<1x96xf32, #tpu.memory_space<vmem>>, %arg9: memref<32x32xbf16, #tpu.memory_space<vmem>>, %arg10: memref<1x32xf32, #tpu.memory_space<vmem>>, %arg11: memref<1x32xf32, #tpu.memory_space<vmem>>, %arg12: memref<1x32xf32, #tpu.memory_space<vmem>>, %arg13: memref<32x64xbf16, #tpu.memory_space<vmem>>, %arg14: memref<1x64xf32, #tpu.memory_space<vmem>>, %arg15: memref<64x32xbf16, #tpu.memory_space<vmem>>, %arg16: memref<1x32xf32, #tpu.memory_space<vmem>>, %arg17: memref<1x32xf32, #tpu.memory_space<vmem>>, %arg18: memref<1x32xf32, #tpu.memory_space<vmem>>, %arg19: memref<3x32xbf16, #tpu.memory_space<vmem>>, %arg20: memref<3x1xf32, #tpu.memory_space<vmem>>, %arg21: memref<1x3x16xf32, #tpu.memory_space<vmem>>) attributes {dimension_semantics = [#tpu.dimension_semantics<parallel>], iteration_bounds = array<i64: 2>, scalar_prefetch = 0 : i64, scratch_operands = 0 : i64, tpu.core_type = #tpu.core_type<tc>, window_params = [{transform_indices = @transform_0, window_bounds = array<i64: 1, 16, 64>}, {pipeline_mode = #tpu.pipeline_mode<synchronous>, transform_indices = @transform_1, window_bounds = array<i64: 64, 32>}, {pipeline_mode = #tpu.pipeline_mode<synchronous>, transform_indices = @transform_2, window_bounds = array<i64: 1, 32>}, {pipeline_mode = #tpu.pipeline_mode<synchronous>, transform_indices = @transform_3, window_bounds = array<i64: 16, 32>}, {pipeline_mode = #tpu.pipeline_mode<synchronous>, transform_indices = @transform_4, window_bounds = array<i64: 1, 32>}, {pipeline_mode = #tpu.pipeline_mode<synchronous>, transform_indices = @transform_5, window_bounds = array<i64: 1, 32>}, {pipeline_mode = #tpu.pipeline_mode<synchronous>, transform_indices = @transform_6, window_bounds = array<i64: 32, 96>}, {pipeline_mode = #tpu.pipeline_mode<synchronous>, transform_indices = @transform_7, window_bounds = array<i64: 1, 96>}, {pipeline_mode = #tpu.pipeline_mode<synchronous>, transform_indices = @transform_8, window_bounds = array<i64: 32, 32>}, {pipeline_mode = #tpu.pipeline_mode<synchronous>, transform_indices = @transform_9, window_bounds = array<i64: 1, 32>}, {pipeline_mode = #tpu.pipeline_mode<synchronous>, transform_indices = @transform_10, window_bounds = array<i64: 1, 32>}, {pipeline_mode = #tpu.pipeline_mode<synchronous>, transform_indices = @transform_11, window_bounds = array<i64: 1, 32>}, {pipeline_mode = #tpu.pipeline_mode<synchronous>, transform_indices = @transform_12, window_bounds = array<i64: 32, 64>}, {pipeline_mode = #tpu.pipeline_mode<synchronous>, transform_indices = @transform_13, window_bounds = array<i64: 1, 64>}, {pipeline_mode = #tpu.pipeline_mode<synchronous>, transform_indices = @transform_14, window_bounds = array<i64: 64, 32>}, {pipeline_mode = #tpu.pipeline_mode<synchronous>, transform_indices = @transform_15, window_bounds = array<i64: 1, 32>}, {pipeline_mode = #tpu.pipeline_mode<synchronous>, transform_indices = @transform_16, window_bounds = array<i64: 1, 32>}, {pipeline_mode = #tpu.pipeline_mode<synchronous>, transform_indices = @transform_17, window_bounds = array<i64: 1, 32>}, {pipeline_mode = #tpu.pipeline_mode<synchronous>, transform_indices = @transform_18, window_bounds = array<i64: 3, 32>}, {pipeline_mode = #tpu.pipeline_mode<synchronous>, transform_indices = @transform_19, window_bounds = array<i64: 3, 1>}, {transform_indices = @transform_20, window_bounds = array<i64: 1, 3, 16>}]} {
    %c0 = arith.constant 0 : index
    %c0_0 = arith.constant 0 : index
    %c0_1 = arith.constant 0 : index
    %0 = vector.load %arg1[%c0, %c0_0, %c0_1] : memref<1x16x64xf32, #tpu.memory_space<vmem>>, vector<1x16x64xf32>
    %1 = vector.shape_cast %0 : vector<1x16x64xf32> to vector<16x64xf32>
    %2 = arith.truncf %1 : vector<16x64xf32> to vector<16x64xbf16>
    %c0_2 = arith.constant 0 : index
    %c0_3 = arith.constant 0 : index
    %3 = vector.load %arg2[%c0_2, %c0_3] : memref<64x32xbf16, #tpu.memory_space<vmem>>, vector<64x32xbf16>
    %cst = arith.constant dense<0.000000e+00> : vector<16x32xf32>
    %4 = tpu.matmul %2, %3, %cst {dimension_numbers = #tpu.dot_dimension_numbers<[1], [0], [0], [1], [0, 0, 1, 1], [], []>} : vector<16x64xbf16>, vector<64x32xbf16>, vector<16x32xf32> -> vector<16x32xf32>
    %c0_4 = arith.constant 0 : index
    %c0_5 = arith.constant 0 : index
    %5 = vector.load %arg3[%c0_4, %c0_5] : memref<1x32xf32, #tpu.memory_space<vmem>>, vector<1x32xf32>
    %6 = vector.broadcast %5 : vector<1x32xf32> to vector<16x32xf32>
    %7 = arith.addf %4, %6 : vector<16x32xf32>
    %c0_6 = arith.constant 0 : index
    %c0_7 = arith.constant 0 : index
    %8 = vector.load %arg4[%c0_6, %c0_7] : memref<16x32xf32, #tpu.memory_space<vmem>>, vector<16x32xf32>
    %9 = arith.addf %7, %8 : vector<16x32xf32>
    %cst_8 = arith.constant dense<0.000000e+00> : vector<16xf32>
    %10 = vector.multi_reduction <add>, %9, %cst_8 [1] : vector<16x32xf32> to vector<16xf32>
    %11 = vector.shape_cast %10 : vector<16xf32> to vector<16x1xf32>
    %cst_9 = arith.constant 3.200000e+01 : f32
    %12 = vector.broadcast %cst_9 : f32 to vector<16x1xf32>
    %13 = arith.divf %11, %12 : vector<16x1xf32>
    %14 = vector.broadcast %13 : vector<16x1xf32> to vector<16x32xf32>
    %15 = arith.subf %9, %14 : vector<16x32xf32>
    %16 = arith.mulf %15, %15 : vector<16x32xf32>
    %cst_10 = arith.constant dense<0.000000e+00> : vector<16xf32>
    %17 = vector.multi_reduction <add>, %16, %cst_10 [1] : vector<16x32xf32> to vector<16xf32>
    %18 = vector.shape_cast %17 : vector<16xf32> to vector<16x1xf32>
    %cst_11 = arith.constant 3.200000e+01 : f32
    %19 = vector.broadcast %cst_11 : f32 to vector<16x1xf32>
    %20 = arith.divf %18, %19 : vector<16x1xf32>
    %21 = vector.broadcast %13 : vector<16x1xf32> to vector<16x32xf32>
    %22 = arith.subf %9, %21 : vector<16x32xf32>
    %cst_12 = arith.constant 9.99999974E-6 : f32
    %23 = vector.broadcast %cst_12 : f32 to vector<16x1xf32>
    %24 = arith.addf %20, %23 : vector<16x1xf32>
    %25 = math.rsqrt %24 : vector<16x1xf32>
    %26 = vector.broadcast %25 : vector<16x1xf32> to vector<16x32xf32>
    %27 = arith.mulf %22, %26 : vector<16x32xf32>
    %c0_13 = arith.constant 0 : index
    %c0_14 = arith.constant 0 : index
    %28 = vector.load %arg5[%c0_13, %c0_14] : memref<1x32xf32, #tpu.memory_space<vmem>>, vector<1x32xf32>
    %29 = vector.broadcast %28 : vector<1x32xf32> to vector<16x32xf32>
    %30 = arith.mulf %27, %29 : vector<16x32xf32>
    %c0_15 = arith.constant 0 : index
    %c0_16 = arith.constant 0 : index
    %31 = vector.load %arg6[%c0_15, %c0_16] : memref<1x32xf32, #tpu.memory_space<vmem>>, vector<1x32xf32>
    %32 = vector.broadcast %31 : vector<1x32xf32> to vector<16x32xf32>
    %33 = arith.addf %30, %32 : vector<16x32xf32>
    %34 = arith.truncf %33 : vector<16x32xf32> to vector<16x32xbf16>
    %c0_17 = arith.constant 0 : index
    %c0_18 = arith.constant 0 : index
    %35 = vector.load %arg7[%c0_17, %c0_18] : memref<32x96xbf16, #tpu.memory_space<vmem>>, vector<32x96xbf16>
    %cst_19 = arith.constant dense<0.000000e+00> : vector<16x96xf32>
    %36 = tpu.matmul %34, %35, %cst_19 {dimension_numbers = #tpu.dot_dimension_numbers<[1], [0], [0], [1], [0, 0, 1, 1], [], []>} : vector<16x32xbf16>, vector<32x96xbf16>, vector<16x96xf32> -> vector<16x96xf32>
    %c0_20 = arith.constant 0 : index
    %c0_21 = arith.constant 0 : index
    %37 = vector.load %arg8[%c0_20, %c0_21] : memref<1x96xf32, #tpu.memory_space<vmem>>, vector<1x96xf32>
    %38 = vector.broadcast %37 : vector<1x96xf32> to vector<16x96xf32>
    %39 = arith.addf %36, %38 : vector<16x96xf32>
    %40 = vector.extract_strided_slice %39 {offsets = [0, 0], sizes = [16, 16], strides = [1, 1]} : vector<16x96xf32> to vector<16x16xf32>
    %41 = vector.extract_strided_slice %39 {offsets = [0, 32], sizes = [16, 16], strides = [1, 1]} : vector<16x96xf32> to vector<16x16xf32>
    %42 = vector.extract_strided_slice %39 {offsets = [0, 64], sizes = [16, 16], strides = [1, 1]} : vector<16x96xf32> to vector<16x16xf32>
    %43 = arith.truncf %40 : vector<16x16xf32> to vector<16x16xbf16>
    %44 = arith.truncf %41 : vector<16x16xf32> to vector<16x16xbf16>
    %cst_22 = arith.constant dense<0.000000e+00> : vector<16x16xf32>
    %45 = tpu.matmul %43, %44, %cst_22 {dimension_numbers = #tpu.dot_dimension_numbers<[1], [1], [0], [0], [0, 0, 1, 0], [], []>} : vector<16x16xbf16>, vector<16x16xbf16>, vector<16x16xf32> -> vector<16x16xf32>
    %cst_23 = arith.constant 2.500000e-01 : f32
    %46 = vector.broadcast %cst_23 : f32 to vector<16x16xf32>
    %47 = arith.mulf %45, %46 : vector<16x16xf32>
    %cst_24 = arith.constant dense<0xFF800000> : vector<16xf32>
    %48 = vector.multi_reduction <maximumf>, %47, %cst_24 [1] : vector<16x16xf32> to vector<16xf32>
    %49 = vector.shape_cast %48 : vector<16xf32> to vector<16x1xf32>
    %50 = vector.broadcast %49 : vector<16x1xf32> to vector<16x16xf32>
    %51 = arith.subf %47, %50 : vector<16x16xf32>
    %52 = math.exp %51 : vector<16x16xf32>
    %cst_25 = arith.constant dense<0.000000e+00> : vector<16xf32>
    %53 = vector.multi_reduction <add>, %52, %cst_25 [1] : vector<16x16xf32> to vector<16xf32>
    %54 = vector.shape_cast %53 : vector<16xf32> to vector<16x1xf32>
    %55 = tpu.reciprocal %54 {approx = true} : vector<16x1xf32> -> vector<16x1xf32>
    %56 = vector.broadcast %55 : vector<16x1xf32> to vector<16x16xf32>
    %57 = arith.mulf %52, %56 : vector<16x16xf32>
    %58 = arith.truncf %57 : vector<16x16xf32> to vector<16x16xbf16>
    %59 = arith.truncf %42 : vector<16x16xf32> to vector<16x16xbf16>
    %cst_26 = arith.constant dense<0.000000e+00> : vector<16x16xf32>
    %60 = tpu.matmul %58, %59, %cst_26 {dimension_numbers = #tpu.dot_dimension_numbers<[1], [0], [0], [1], [0, 0, 1, 1], [], []>} : vector<16x16xbf16>, vector<16x16xbf16>, vector<16x16xf32> -> vector<16x16xf32>
    %61 = vector.extract_strided_slice %39 {offsets = [0, 16], sizes = [16, 16], strides = [1, 1]} : vector<16x96xf32> to vector<16x16xf32>
    %62 = vector.extract_strided_slice %39 {offsets = [0, 48], sizes = [16, 16], strides = [1, 1]} : vector<16x96xf32> to vector<16x16xf32>
    %63 = vector.extract_strided_slice %39 {offsets = [0, 80], sizes = [16, 16], strides = [1, 1]} : vector<16x96xf32> to vector<16x16xf32>
    %64 = arith.truncf %61 : vector<16x16xf32> to vector<16x16xbf16>
    %65 = arith.truncf %62 : vector<16x16xf32> to vector<16x16xbf16>
    %cst_27 = arith.constant dense<0.000000e+00> : vector<16x16xf32>
    %66 = tpu.matmul %64, %65, %cst_27 {dimension_numbers = #tpu.dot_dimension_numbers<[1], [1], [0], [0], [0, 0, 1, 0], [], []>} : vector<16x16xbf16>, vector<16x16xbf16>, vector<16x16xf32> -> vector<16x16xf32>
    %cst_28 = arith.constant 2.500000e-01 : f32
    %67 = vector.broadcast %cst_28 : f32 to vector<16x16xf32>
    %68 = arith.mulf %66, %67 : vector<16x16xf32>
    %cst_29 = arith.constant dense<0xFF800000> : vector<16xf32>
    %69 = vector.multi_reduction <maximumf>, %68, %cst_29 [1] : vector<16x16xf32> to vector<16xf32>
    %70 = vector.shape_cast %69 : vector<16xf32> to vector<16x1xf32>
    %71 = vector.broadcast %70 : vector<16x1xf32> to vector<16x16xf32>
    %72 = arith.subf %68, %71 : vector<16x16xf32>
    %73 = math.exp %72 : vector<16x16xf32>
    %cst_30 = arith.constant dense<0.000000e+00> : vector<16xf32>
    %74 = vector.multi_reduction <add>, %73, %cst_30 [1] : vector<16x16xf32> to vector<16xf32>
    %75 = vector.shape_cast %74 : vector<16xf32> to vector<16x1xf32>
    %76 = tpu.reciprocal %75 {approx = true} : vector<16x1xf32> -> vector<16x1xf32>
    %77 = vector.broadcast %76 : vector<16x1xf32> to vector<16x16xf32>
    %78 = arith.mulf %73, %77 : vector<16x16xf32>
    %79 = arith.truncf %78 : vector<16x16xf32> to vector<16x16xbf16>
    %80 = arith.truncf %63 : vector<16x16xf32> to vector<16x16xbf16>
    %cst_31 = arith.constant dense<0.000000e+00> : vector<16x16xf32>
    %81 = tpu.matmul %79, %80, %cst_31 {dimension_numbers = #tpu.dot_dimension_numbers<[1], [0], [0], [1], [0, 0, 1, 1], [], []>} : vector<16x16xbf16>, vector<16x16xbf16>, vector<16x16xf32> -> vector<16x16xf32>
    %82 = tpu.concatenate %60, %81 in 1 : vector<16x16xf32>, vector<16x16xf32> -> vector<16x32xf32>
    %83 = arith.truncf %82 : vector<16x32xf32> to vector<16x32xbf16>
    %c0_32 = arith.constant 0 : index
    %c0_33 = arith.constant 0 : index
    %84 = vector.load %arg9[%c0_32, %c0_33] : memref<32x32xbf16, #tpu.memory_space<vmem>>, vector<32x32xbf16>
    %cst_34 = arith.constant dense<0.000000e+00> : vector<16x32xf32>
    %85 = tpu.matmul %83, %84, %cst_34 {dimension_numbers = #tpu.dot_dimension_numbers<[1], [0], [0], [1], [0, 0, 1, 1], [], []>} : vector<16x32xbf16>, vector<32x32xbf16>, vector<16x32xf32> -> vector<16x32xf32>
    %86 = arith.addf %9, %85 : vector<16x32xf32>
    %c0_35 = arith.constant 0 : index
    %c0_36 = arith.constant 0 : index
    %87 = vector.load %arg10[%c0_35, %c0_36] : memref<1x32xf32, #tpu.memory_space<vmem>>, vector<1x32xf32>
    %88 = vector.broadcast %87 : vector<1x32xf32> to vector<16x32xf32>
    %89 = arith.addf %86, %88 : vector<16x32xf32>
    %cst_37 = arith.constant dense<0.000000e+00> : vector<16xf32>
    %90 = vector.multi_reduction <add>, %89, %cst_37 [1] : vector<16x32xf32> to vector<16xf32>
    %91 = vector.shape_cast %90 : vector<16xf32> to vector<16x1xf32>
    %cst_38 = arith.constant 3.200000e+01 : f32
    %92 = vector.broadcast %cst_38 : f32 to vector<16x1xf32>
    %93 = arith.divf %91, %92 : vector<16x1xf32>
    %94 = vector.broadcast %93 : vector<16x1xf32> to vector<16x32xf32>
    %95 = arith.subf %89, %94 : vector<16x32xf32>
    %96 = arith.mulf %95, %95 : vector<16x32xf32>
    %cst_39 = arith.constant dense<0.000000e+00> : vector<16xf32>
    %97 = vector.multi_reduction <add>, %96, %cst_39 [1] : vector<16x32xf32> to vector<16xf32>
    %98 = vector.shape_cast %97 : vector<16xf32> to vector<16x1xf32>
    %cst_40 = arith.constant 3.200000e+01 : f32
    %99 = vector.broadcast %cst_40 : f32 to vector<16x1xf32>
    %100 = arith.divf %98, %99 : vector<16x1xf32>
    %101 = vector.broadcast %93 : vector<16x1xf32> to vector<16x32xf32>
    %102 = arith.subf %89, %101 : vector<16x32xf32>
    %cst_41 = arith.constant 9.99999974E-6 : f32
    %103 = vector.broadcast %cst_41 : f32 to vector<16x1xf32>
    %104 = arith.addf %100, %103 : vector<16x1xf32>
    %105 = math.rsqrt %104 : vector<16x1xf32>
    %106 = vector.broadcast %105 : vector<16x1xf32> to vector<16x32xf32>
    %107 = arith.mulf %102, %106 : vector<16x32xf32>
    %c0_42 = arith.constant 0 : index
    %c0_43 = arith.constant 0 : index
    %108 = vector.load %arg11[%c0_42, %c0_43] : memref<1x32xf32, #tpu.memory_space<vmem>>, vector<1x32xf32>
    %109 = vector.broadcast %108 : vector<1x32xf32> to vector<16x32xf32>
    %110 = arith.mulf %107, %109 : vector<16x32xf32>
    %c0_44 = arith.constant 0 : index
    %c0_45 = arith.constant 0 : index
    %111 = vector.load %arg12[%c0_44, %c0_45] : memref<1x32xf32, #tpu.memory_space<vmem>>, vector<1x32xf32>
    %112 = vector.broadcast %111 : vector<1x32xf32> to vector<16x32xf32>
    %113 = arith.addf %110, %112 : vector<16x32xf32>
    %114 = arith.truncf %113 : vector<16x32xf32> to vector<16x32xbf16>
    %c0_46 = arith.constant 0 : index
    %c0_47 = arith.constant 0 : index
    %115 = vector.load %arg13[%c0_46, %c0_47] : memref<32x64xbf16, #tpu.memory_space<vmem>>, vector<32x64xbf16>
    %cst_48 = arith.constant dense<0.000000e+00> : vector<16x64xf32>
    %116 = tpu.matmul %114, %115, %cst_48 {dimension_numbers = #tpu.dot_dimension_numbers<[1], [0], [0], [1], [0, 0, 1, 1], [], []>} : vector<16x32xbf16>, vector<32x64xbf16>, vector<16x64xf32> -> vector<16x64xf32>
    %c0_49 = arith.constant 0 : index
    %c0_50 = arith.constant 0 : index
    %117 = vector.load %arg14[%c0_49, %c0_50] : memref<1x64xf32, #tpu.memory_space<vmem>>, vector<1x64xf32>
    %118 = vector.broadcast %117 : vector<1x64xf32> to vector<16x64xf32>
    %119 = arith.addf %116, %118 : vector<16x64xf32>
    %120 = arith.mulf %119, %119 : vector<16x64xf32>
    %121 = arith.mulf %119, %120 : vector<16x64xf32>
    %cst_51 = arith.constant 4.471500e-02 : f32
    %122 = vector.broadcast %cst_51 : f32 to vector<16x64xf32>
    %123 = arith.mulf %122, %121 : vector<16x64xf32>
    %124 = arith.addf %119, %123 : vector<16x64xf32>
    %cst_52 = arith.constant 0.797884583 : f32
    %125 = vector.broadcast %cst_52 : f32 to vector<16x64xf32>
    %126 = arith.mulf %125, %124 : vector<16x64xf32>
    %127 = math.tanh %126 : vector<16x64xf32>
    %cst_53 = arith.constant 1.000000e+00 : f32
    %128 = vector.broadcast %cst_53 : f32 to vector<16x64xf32>
    %129 = arith.addf %128, %127 : vector<16x64xf32>
    %cst_54 = arith.constant 5.000000e-01 : f32
    %130 = vector.broadcast %cst_54 : f32 to vector<16x64xf32>
    %131 = arith.mulf %130, %129 : vector<16x64xf32>
    %132 = arith.mulf %119, %131 : vector<16x64xf32>
    %133 = arith.truncf %132 : vector<16x64xf32> to vector<16x64xbf16>
    %c0_55 = arith.constant 0 : index
    %c0_56 = arith.constant 0 : index
    %134 = vector.load %arg15[%c0_55, %c0_56] : memref<64x32xbf16, #tpu.memory_space<vmem>>, vector<64x32xbf16>
    %cst_57 = arith.constant dense<0.000000e+00> : vector<16x32xf32>
    %135 = tpu.matmul %133, %134, %cst_57 {dimension_numbers = #tpu.dot_dimension_numbers<[1], [0], [0], [1], [0, 0, 1, 1], [], []>} : vector<16x64xbf16>, vector<64x32xbf16>, vector<16x32xf32> -> vector<16x32xf32>
    %136 = arith.addf %89, %135 : vector<16x32xf32>
    %c0_58 = arith.constant 0 : index
    %c0_59 = arith.constant 0 : index
    %137 = vector.load %arg16[%c0_58, %c0_59] : memref<1x32xf32, #tpu.memory_space<vmem>>, vector<1x32xf32>
    %138 = vector.broadcast %137 : vector<1x32xf32> to vector<16x32xf32>
    %139 = arith.addf %136, %138 : vector<16x32xf32>
    %cst_60 = arith.constant dense<0.000000e+00> : vector<16xf32>
    %140 = vector.multi_reduction <add>, %139, %cst_60 [1] : vector<16x32xf32> to vector<16xf32>
    %141 = vector.shape_cast %140 : vector<16xf32> to vector<16x1xf32>
    %cst_61 = arith.constant 3.200000e+01 : f32
    %142 = vector.broadcast %cst_61 : f32 to vector<16x1xf32>
    %143 = arith.divf %141, %142 : vector<16x1xf32>
    %144 = vector.broadcast %143 : vector<16x1xf32> to vector<16x32xf32>
    %145 = arith.subf %139, %144 : vector<16x32xf32>
    %146 = arith.mulf %145, %145 : vector<16x32xf32>
    %cst_62 = arith.constant dense<0.000000e+00> : vector<16xf32>
    %147 = vector.multi_reduction <add>, %146, %cst_62 [1] : vector<16x32xf32> to vector<16xf32>
    %148 = vector.shape_cast %147 : vector<16xf32> to vector<16x1xf32>
    %cst_63 = arith.constant 3.200000e+01 : f32
    %149 = vector.broadcast %cst_63 : f32 to vector<16x1xf32>
    %150 = arith.divf %148, %149 : vector<16x1xf32>
    %151 = vector.broadcast %143 : vector<16x1xf32> to vector<16x32xf32>
    %152 = arith.subf %139, %151 : vector<16x32xf32>
    %cst_64 = arith.constant 9.99999974E-6 : f32
    %153 = vector.broadcast %cst_64 : f32 to vector<16x1xf32>
    %154 = arith.addf %150, %153 : vector<16x1xf32>
    %155 = math.rsqrt %154 : vector<16x1xf32>
    %156 = vector.broadcast %155 : vector<16x1xf32> to vector<16x32xf32>
    %157 = arith.mulf %152, %156 : vector<16x32xf32>
    %c0_65 = arith.constant 0 : index
    %c0_66 = arith.constant 0 : index
    %158 = vector.load %arg17[%c0_65, %c0_66] : memref<1x32xf32, #tpu.memory_space<vmem>>, vector<1x32xf32>
    %159 = vector.broadcast %158 : vector<1x32xf32> to vector<16x32xf32>
    %160 = arith.mulf %157, %159 : vector<16x32xf32>
    %c0_67 = arith.constant 0 : index
    %c0_68 = arith.constant 0 : index
    %161 = vector.load %arg18[%c0_67, %c0_68] : memref<1x32xf32, #tpu.memory_space<vmem>>, vector<1x32xf32>
    %162 = vector.broadcast %161 : vector<1x32xf32> to vector<16x32xf32>
    %163 = arith.addf %160, %162 : vector<16x32xf32>
    %c0_69 = arith.constant 0 : index
    %c0_70 = arith.constant 0 : index
    %164 = vector.load %arg19[%c0_69, %c0_70] : memref<3x32xbf16, #tpu.memory_space<vmem>>, vector<3x32xbf16>
    %165 = arith.truncf %163 : vector<16x32xf32> to vector<16x32xbf16>
    %cst_71 = arith.constant dense<0.000000e+00> : vector<3x16xf32>
    %166 = tpu.matmul %164, %165, %cst_71 {dimension_numbers = #tpu.dot_dimension_numbers<[1], [1], [0], [0], [0, 0, 1, 0], [], []>} : vector<3x32xbf16>, vector<16x32xbf16>, vector<3x16xf32> -> vector<3x16xf32>
    %c0_72 = arith.constant 0 : index
    %c0_73 = arith.constant 0 : index
    %167 = vector.load %arg20[%c0_72, %c0_73] : memref<3x1xf32, #tpu.memory_space<vmem>>, vector<3x1xf32>
    %168 = vector.broadcast %167 : vector<3x1xf32> to vector<3x16xf32>
    %169 = arith.addf %166, %168 : vector<3x16xf32>
    %c0_74 = arith.constant 0 : index
    %c0_75 = arith.constant 0 : index
    %c0_76 = arith.constant 0 : index
    %170 = vector.load %arg21[%c0_74, %c0_75, %c0_76] : memref<1x3x16xf32, #tpu.memory_space<vmem>>, vector<1x3x16xf32>
    %171 = vector.shape_cast %170 : vector<1x3x16xf32> to vector<3x16xf32>
    %172 = vector.shape_cast %169 : vector<3x16xf32> to vector<1x3x16xf32>
    tpu.vector_store %arg21[%c0_74, %c0_75, %c0_76], %172 {strides = array<i32>} : memref<1x3x16xf32, #tpu.memory_space<vmem>>, vector<1x3x16xf32>,
    return
  }
  func.func @transform_0(%arg0: i32) -> (i32, i32, i32) {
    %c0_i32 = arith.constant 0 : i32
    %c0_i32_0 = arith.constant 0 : i32
    %c0_i32_1 = arith.constant 0 : i32
    return %arg0, %c0_i32, %c0_i32_0 : i32, i32, i32
  }
  func.func @transform_1(%arg0: i32) -> (i32, i32) {
    %c0_i32 = arith.constant 0 : i32
    %c0_i32_0 = arith.constant 0 : i32
    %c0_i32_1 = arith.constant 0 : i32
    return %c0_i32, %c0_i32_0 : i32, i32
  }
  func.func @transform_2(%arg0: i32) -> (i32, i32) {
    %c0_i32 = arith.constant 0 : i32
    %c0_i32_0 = arith.constant 0 : i32
    %c0_i32_1 = arith.constant 0 : i32
    return %c0_i32, %c0_i32_0 : i32, i32
  }
  func.func @transform_3(%arg0: i32) -> (i32, i32) {
    %c0_i32 = arith.constant 0 : i32
    %c0_i32_0 = arith.constant 0 : i32
    %c0_i32_1 = arith.constant 0 : i32
    return %c0_i32, %c0_i32_0 : i32, i32
  }
  func.func @transform_4(%arg0: i32) -> (i32, i32) {
    %c0_i32 = arith.constant 0 : i32
    %c0_i32_0 = arith.constant 0 : i32
    %c0_i32_1 = arith.constant 0 : i32
    return %c0_i32, %c0_i32_0 : i32, i32
  }
  func.func @transform_5(%arg0: i32) -> (i32, i32) {
    %c0_i32 = arith.constant 0 : i32
    %c0_i32_0 = arith.constant 0 : i32
    %c0_i32_1 = arith.constant 0 : i32
    return %c0_i32, %c0_i32_0 : i32, i32
  }
  func.func @transform_6(%arg0: i32) -> (i32, i32) {
    %c0_i32 = arith.constant 0 : i32
    %c0_i32_0 = arith.constant 0 : i32
    %c0_i32_1 = arith.constant 0 : i32
    return %c0_i32, %c0_i32_0 : i32, i32
  }
  func.func @transform_7(%arg0: i32) -> (i32, i32) {
    %c0_i32 = arith.constant 0 : i32
    %c0_i32_0 = arith.constant 0 : i32
    %c0_i32_1 = arith.constant 0 : i32
    return %c0_i32, %c0_i32_0 : i32, i32
  }
  func.func @transform_8(%arg0: i32) -> (i32, i32) {
    %c0_i32 = arith.constant 0 : i32
    %c0_i32_0 = arith.constant 0 : i32
    %c0_i32_1 = arith.constant 0 : i32
    return %c0_i32, %c0_i32_0 : i32, i32
  }
  func.func @transform_9(%arg0: i32) -> (i32, i32) {
    %c0_i32 = arith.constant 0 : i32
    %c0_i32_0 = arith.constant 0 : i32
    %c0_i32_1 = arith.constant 0 : i32
    return %c0_i32, %c0_i32_0 : i32, i32
  }
  func.func @transform_10(%arg0: i32) -> (i32, i32) {
    %c0_i32 = arith.constant 0 : i32
    %c0_i32_0 = arith.constant 0 : i32
    %c0_i32_1 = arith.constant 0 : i32
    return %c0_i32, %c0_i32_0 : i32, i32
  }
  func.func @transform_11(%arg0: i32) -> (i32, i32) {
    %c0_i32 = arith.constant 0 : i32
    %c0_i32_0 = arith.constant 0 : i32
    %c0_i32_1 = arith.constant 0 : i32
    return %c0_i32, %c0_i32_0 : i32, i32
  }
  func.func @transform_12(%arg0: i32) -> (i32, i32) {
    %c0_i32 = arith.constant 0 : i32
    %c0_i32_0 = arith.constant 0 : i32
    %c0_i32_1 = arith.constant 0 : i32
    return %c0_i32, %c0_i32_0 : i32, i32
  }
  func.func @transform_13(%arg0: i32) -> (i32, i32) {
    %c0_i32 = arith.constant 0 : i32
    %c0_i32_0 = arith.constant 0 : i32
    %c0_i32_1 = arith.constant 0 : i32
    return %c0_i32, %c0_i32_0 : i32, i32
  }
  func.func @transform_14(%arg0: i32) -> (i32, i32) {
    %c0_i32 = arith.constant 0 : i32
    %c0_i32_0 = arith.constant 0 : i32
    %c0_i32_1 = arith.constant 0 : i32
    return %c0_i32, %c0_i32_0 : i32, i32
  }
  func.func @transform_15(%arg0: i32) -> (i32, i32) {
    %c0_i32 = arith.constant 0 : i32
    %c0_i32_0 = arith.constant 0 : i32
    %c0_i32_1 = arith.constant 0 : i32
    return %c0_i32, %c0_i32_0 : i32, i32
  }
  func.func @transform_16(%arg0: i32) -> (i32, i32) {
    %c0_i32 = arith.constant 0 : i32
    %c0_i32_0 = arith.constant 0 : i32
    %c0_i32_1 = arith.constant 0 : i32
    return %c0_i32, %c0_i32_0 : i32, i32
  }
  func.func @transform_17(%arg0: i32) -> (i32, i32) {
    %c0_i32 = arith.constant 0 : i32
    %c0_i32_0 = arith.constant 0 : i32
    %c0_i32_1 = arith.constant 0 : i32
    return %c0_i32, %c0_i32_0 : i32, i32
  }
  func.func @transform_18(%arg0: i32) -> (i32, i32) {
    %c0_i32 = arith.constant 0 : i32
    %c0_i32_0 = arith.constant 0 : i32
    %c0_i32_1 = arith.constant 0 : i32
    return %c0_i32, %c0_i32_0 : i32, i32
  }
  func.func @transform_19(%arg0: i32) -> (i32, i32) {
    %c0_i32 = arith.constant 0 : i32
    %c0_i32_0 = arith.constant 0 : i32
    %c0_i32_1 = arith.constant 0 : i32
    return %c0_i32, %c0_i32_0 : i32, i32
  }
  func.func @transform_20(%arg0: i32) -> (i32, i32, i32) {
    %c0_i32 = arith.constant 0 : i32
    %c0_i32_0 = arith.constant 0 : i32
    %c0_i32_1 = arith.constant 0 : i32
    return %arg0, %c0_i32, %c0_i32_0 : i32, i32, i32
  }
}

module attributes {stable_mosaic.version = 11 : i64} {
  func.func @_stem_kernel(%arg0: i32, %arg1: i32, %arg2: memref<1x3x18x18xf32, #tpu.memory_space<vmem>>, %arg3: memref<16x32xbf16, #tpu.memory_space<vmem>>, %arg4: memref<16x1xf32, #tpu.memory_space<vmem>>, %arg5: memref<1x8x16x16xf32, #tpu.memory_space<vmem>>) attributes {dimension_semantics = [#tpu.dimension_semantics<parallel>, #tpu.dimension_semantics<parallel>], iteration_bounds = array<i64: 2, 2>, scalar_prefetch = 0 : i64, scratch_operands = 0 : i64, tpu.core_type = #tpu.core_type<tc>, window_params = [{transform_indices = @transform_0, window_bounds = array<i64: 1, 3, 18, 18>}, {pipeline_mode = #tpu.pipeline_mode<synchronous>, transform_indices = @transform_1, window_bounds = array<i64: 16, 32>}, {pipeline_mode = #tpu.pipeline_mode<synchronous>, transform_indices = @transform_2, window_bounds = array<i64: 16, 1>}, {transform_indices = @transform_3, window_bounds = array<i64: 1, 8, 16, 16>}]} {
    %c8_i32 = arith.constant 8 : i32
    %0 = arith.muli %arg1, %c8_i32 : i32
    %1 = tpu.assume_multiple %0, 8 : i32
    %c0 = arith.constant 0 : index
    %c0_0 = arith.constant 0 : index
    %2 = vector.load %arg3[%c0, %c0_0] : memref<16x32xbf16, #tpu.memory_space<vmem>>, vector<16x32xbf16>
    %c0_1 = arith.constant 0 : index
    %c0_2 = arith.constant 0 : index
    %3 = vector.load %arg4[%c0_1, %c0_2] : memref<16x1xf32, #tpu.memory_space<vmem>>, vector<16x1xf32>
    %cst = arith.constant 0.000000e+00 : f32
    %4 = vector.broadcast %cst : f32 to vector<5x16xf32>
    %c0_i32 = arith.constant 0 : i32
    %5 = arith.addi %1, %c0_i32 : i32
    %c0_i32_3 = arith.constant 0 : i32
    %6 = arith.addi %5, %c0_i32_3 : i32
    %c0_4 = arith.constant 0 : index
    %c0_5 = arith.constant 0 : index
    %7 = arith.index_cast %6 : i32 to index
    %c0_6 = arith.constant 0 : index
    %8 = vector.load %arg2[%c0_4, %c0_5, %7, %c0_6] : memref<1x3x18x18xf32, #tpu.memory_space<vmem>>, vector<1x1x1x18xf32>
    %9 = vector.shape_cast %8 : vector<1x1x1x18xf32> to vector<1x18xf32>
    %10 = vector.extract_strided_slice %9 {offsets = [0, 0], sizes = [1, 16], strides = [1, 1]} : vector<1x18xf32> to vector<1x16xf32>
    %11 = vector.extract_strided_slice %9 {offsets = [0, 1], sizes = [1, 16], strides = [1, 1]} : vector<1x18xf32> to vector<1x16xf32>
    %12 = vector.extract_strided_slice %9 {offsets = [0, 2], sizes = [1, 16], strides = [1, 1]} : vector<1x18xf32> to vector<1x16xf32>
    %c0_i32_7 = arith.constant 0 : i32
    %13 = arith.addi %1, %c0_i32_7 : i32
    %c1_i32 = arith.constant 1 : i32
    %14 = arith.addi %13, %c1_i32 : i32
    %c0_8 = arith.constant 0 : index
    %c0_9 = arith.constant 0 : index
    %15 = arith.index_cast %14 : i32 to index
    %c0_10 = arith.constant 0 : index
    %16 = vector.load %arg2[%c0_8, %c0_9, %15, %c0_10] : memref<1x3x18x18xf32, #tpu.memory_space<vmem>>, vector<1x1x1x18xf32>
    %17 = vector.shape_cast %16 : vector<1x1x1x18xf32> to vector<1x18xf32>
    %18 = vector.extract_strided_slice %17 {offsets = [0, 0], sizes = [1, 16], strides = [1, 1]} : vector<1x18xf32> to vector<1x16xf32>
    %19 = vector.extract_strided_slice %17 {offsets = [0, 1], sizes = [1, 16], strides = [1, 1]} : vector<1x18xf32> to vector<1x16xf32>
    %20 = vector.extract_strided_slice %17 {offsets = [0, 2], sizes = [1, 16], strides = [1, 1]} : vector<1x18xf32> to vector<1x16xf32>
    %c0_i32_11 = arith.constant 0 : i32
    %21 = arith.addi %1, %c0_i32_11 : i32
    %c2_i32 = arith.constant 2 : i32
    %22 = arith.addi %21, %c2_i32 : i32
    %c0_12 = arith.constant 0 : index
    %c0_13 = arith.constant 0 : index
    %23 = arith.index_cast %22 : i32 to index
    %c0_14 = arith.constant 0 : index
    %24 = vector.load %arg2[%c0_12, %c0_13, %23, %c0_14] : memref<1x3x18x18xf32, #tpu.memory_space<vmem>>, vector<1x1x1x18xf32>
    %25 = vector.shape_cast %24 : vector<1x1x1x18xf32> to vector<1x18xf32>
    %26 = vector.extract_strided_slice %25 {offsets = [0, 0], sizes = [1, 16], strides = [1, 1]} : vector<1x18xf32> to vector<1x16xf32>
    %27 = vector.extract_strided_slice %25 {offsets = [0, 1], sizes = [1, 16], strides = [1, 1]} : vector<1x18xf32> to vector<1x16xf32>
    %28 = vector.extract_strided_slice %25 {offsets = [0, 2], sizes = [1, 16], strides = [1, 1]} : vector<1x18xf32> to vector<1x16xf32>
    %c0_i32_15 = arith.constant 0 : i32
    %29 = arith.addi %1, %c0_i32_15 : i32
    %c0_i32_16 = arith.constant 0 : i32
    %30 = arith.addi %29, %c0_i32_16 : i32
    %c0_17 = arith.constant 0 : index
    %c1 = arith.constant 1 : index
    %31 = arith.index_cast %30 : i32 to index
    %c0_18 = arith.constant 0 : index
    %32 = vector.load %arg2[%c0_17, %c1, %31, %c0_18] : memref<1x3x18x18xf32, #tpu.memory_space<vmem>>, vector<1x1x1x18xf32>
    %33 = vector.shape_cast %32 : vector<1x1x1x18xf32> to vector<1x18xf32>
    %34 = vector.extract_strided_slice %33 {offsets = [0, 0], sizes = [1, 16], strides = [1, 1]} : vector<1x18xf32> to vector<1x16xf32>
    %35 = vector.extract_strided_slice %33 {offsets = [0, 1], sizes = [1, 16], strides = [1, 1]} : vector<1x18xf32> to vector<1x16xf32>
    %36 = vector.extract_strided_slice %33 {offsets = [0, 2], sizes = [1, 16], strides = [1, 1]} : vector<1x18xf32> to vector<1x16xf32>
    %c0_i32_19 = arith.constant 0 : i32
    %37 = arith.addi %1, %c0_i32_19 : i32
    %c1_i32_20 = arith.constant 1 : i32
    %38 = arith.addi %37, %c1_i32_20 : i32
    %c0_21 = arith.constant 0 : index
    %c1_22 = arith.constant 1 : index
    %39 = arith.index_cast %38 : i32 to index
    %c0_23 = arith.constant 0 : index
    %40 = vector.load %arg2[%c0_21, %c1_22, %39, %c0_23] : memref<1x3x18x18xf32, #tpu.memory_space<vmem>>, vector<1x1x1x18xf32>
    %41 = vector.shape_cast %40 : vector<1x1x1x18xf32> to vector<1x18xf32>
    %42 = vector.extract_strided_slice %41 {offsets = [0, 0], sizes = [1, 16], strides = [1, 1]} : vector<1x18xf32> to vector<1x16xf32>
    %43 = vector.extract_strided_slice %41 {offsets = [0, 1], sizes = [1, 16], strides = [1, 1]} : vector<1x18xf32> to vector<1x16xf32>
    %44 = vector.extract_strided_slice %41 {offsets = [0, 2], sizes = [1, 16], strides = [1, 1]} : vector<1x18xf32> to vector<1x16xf32>
    %c0_i32_24 = arith.constant 0 : i32
    %45 = arith.addi %1, %c0_i32_24 : i32
    %c2_i32_25 = arith.constant 2 : i32
    %46 = arith.addi %45, %c2_i32_25 : i32
    %c0_26 = arith.constant 0 : index
    %c1_27 = arith.constant 1 : index
    %47 = arith.index_cast %46 : i32 to index
    %c0_28 = arith.constant 0 : index
    %48 = vector.load %arg2[%c0_26, %c1_27, %47, %c0_28] : memref<1x3x18x18xf32, #tpu.memory_space<vmem>>, vector<1x1x1x18xf32>
    %49 = vector.shape_cast %48 : vector<1x1x1x18xf32> to vector<1x18xf32>
    %50 = vector.extract_strided_slice %49 {offsets = [0, 0], sizes = [1, 16], strides = [1, 1]} : vector<1x18xf32> to vector<1x16xf32>
    %51 = vector.extract_strided_slice %49 {offsets = [0, 1], sizes = [1, 16], strides = [1, 1]} : vector<1x18xf32> to vector<1x16xf32>
    %52 = vector.extract_strided_slice %49 {offsets = [0, 2], sizes = [1, 16], strides = [1, 1]} : vector<1x18xf32> to vector<1x16xf32>
    %c0_i32_29 = arith.constant 0 : i32
    %53 = arith.addi %1, %c0_i32_29 : i32
    %c0_i32_30 = arith.constant 0 : i32
    %54 = arith.addi %53, %c0_i32_30 : i32
    %c0_31 = arith.constant 0 : index
    %c2 = arith.constant 2 : index
    %55 = arith.index_cast %54 : i32 to index
    %c0_32 = arith.constant 0 : index
    %56 = vector.load %arg2[%c0_31, %c2, %55, %c0_32] : memref<1x3x18x18xf32, #tpu.memory_space<vmem>>, vector<1x1x1x18xf32>
    %57 = vector.shape_cast %56 : vector<1x1x1x18xf32> to vector<1x18xf32>
    %58 = vector.extract_strided_slice %57 {offsets = [0, 0], sizes = [1, 16], strides = [1, 1]} : vector<1x18xf32> to vector<1x16xf32>
    %59 = vector.extract_strided_slice %57 {offsets = [0, 1], sizes = [1, 16], strides = [1, 1]} : vector<1x18xf32> to vector<1x16xf32>
    %60 = vector.extract_strided_slice %57 {offsets = [0, 2], sizes = [1, 16], strides = [1, 1]} : vector<1x18xf32> to vector<1x16xf32>
    %c0_i32_33 = arith.constant 0 : i32
    %61 = arith.addi %1, %c0_i32_33 : i32
    %c1_i32_34 = arith.constant 1 : i32
    %62 = arith.addi %61, %c1_i32_34 : i32
    %c0_35 = arith.constant 0 : index
    %c2_36 = arith.constant 2 : index
    %63 = arith.index_cast %62 : i32 to index
    %c0_37 = arith.constant 0 : index
    %64 = vector.load %arg2[%c0_35, %c2_36, %63, %c0_37] : memref<1x3x18x18xf32, #tpu.memory_space<vmem>>, vector<1x1x1x18xf32>
    %65 = vector.shape_cast %64 : vector<1x1x1x18xf32> to vector<1x18xf32>
    %66 = vector.extract_strided_slice %65 {offsets = [0, 0], sizes = [1, 16], strides = [1, 1]} : vector<1x18xf32> to vector<1x16xf32>
    %67 = vector.extract_strided_slice %65 {offsets = [0, 1], sizes = [1, 16], strides = [1, 1]} : vector<1x18xf32> to vector<1x16xf32>
    %68 = vector.extract_strided_slice %65 {offsets = [0, 2], sizes = [1, 16], strides = [1, 1]} : vector<1x18xf32> to vector<1x16xf32>
    %c0_i32_38 = arith.constant 0 : i32
    %69 = arith.addi %1, %c0_i32_38 : i32
    %c2_i32_39 = arith.constant 2 : i32
    %70 = arith.addi %69, %c2_i32_39 : i32
    %c0_40 = arith.constant 0 : index
    %c2_41 = arith.constant 2 : index
    %71 = arith.index_cast %70 : i32 to index
    %c0_42 = arith.constant 0 : index
    %72 = vector.load %arg2[%c0_40, %c2_41, %71, %c0_42] : memref<1x3x18x18xf32, #tpu.memory_space<vmem>>, vector<1x1x1x18xf32>
    %73 = vector.shape_cast %72 : vector<1x1x1x18xf32> to vector<1x18xf32>
    %74 = vector.extract_strided_slice %73 {offsets = [0, 0], sizes = [1, 16], strides = [1, 1]} : vector<1x18xf32> to vector<1x16xf32>
    %75 = vector.extract_strided_slice %73 {offsets = [0, 1], sizes = [1, 16], strides = [1, 1]} : vector<1x18xf32> to vector<1x16xf32>
    %76 = vector.extract_strided_slice %73 {offsets = [0, 2], sizes = [1, 16], strides = [1, 1]} : vector<1x18xf32> to vector<1x16xf32>
    %77 = tpu.concatenate %10, %11, %12, %18, %19, %20, %26, %27, %28, %34, %35, %36, %42, %43, %44, %50 in 0 : vector<1x16xf32>, vector<1x16xf32>, vector<1x16xf32>, vector<1x16xf32>, vector<1x16xf32>, vector<1x16xf32>, vector<1x16xf32>, vector<1x16xf32>, vector<1x16xf32>, vector<1x16xf32>, vector<1x16xf32>, vector<1x16xf32>, vector<1x16xf32>, vector<1x16xf32>, vector<1x16xf32>, vector<1x16xf32> -> vector<16x16xf32>
    %78 = tpu.concatenate %51, %52, %58, %59, %60, %66, %67, %68, %74, %75, %76, %4 in 0 : vector<1x16xf32>, vector<1x16xf32>, vector<1x16xf32>, vector<1x16xf32>, vector<1x16xf32>, vector<1x16xf32>, vector<1x16xf32>, vector<1x16xf32>, vector<1x16xf32>, vector<1x16xf32>, vector<1x16xf32>, vector<5x16xf32> -> vector<16x16xf32>
    %79 = tpu.concatenate %77, %78 in 0 : vector<16x16xf32>, vector<16x16xf32> -> vector<32x16xf32>
    %80 = arith.truncf %79 : vector<32x16xf32> to vector<32x16xbf16>
    %cst_43 = arith.constant dense<0.000000e+00> : vector<16x16xf32>
    %81 = tpu.matmul %2, %80, %cst_43 {dimension_numbers = #tpu.dot_dimension_numbers<[1], [0], [0], [1], [0, 0, 1, 1], [], []>} : vector<16x32xbf16>, vector<32x16xbf16>, vector<16x16xf32> -> vector<16x16xf32>
    %82 = vector.broadcast %3 : vector<16x1xf32> to vector<16x16xf32>
    %83 = arith.addf %81, %82 : vector<16x16xf32>
    %cst_44 = arith.constant 0.000000e+00 : f32
    %84 = vector.broadcast %cst_44 : f32 to vector<16x16xf32>
    %85 = arith.maximumf %83, %84 : vector<16x16xf32>
    %c0_45 = arith.constant 0 : index
    %c0_46 = arith.constant 0 : index
    %c0_47 = arith.constant 0 : index
    %c0_48 = arith.constant 0 : index
    %86 = vector.load %arg5[%c0_45, %c0_46, %c0_47, %c0_48] : memref<1x8x16x16xf32, #tpu.memory_space<vmem>>, vector<1x1x16x16xf32>
    %87 = vector.shape_cast %86 : vector<1x1x16x16xf32> to vector<16x16xf32>
    %88 = vector.shape_cast %85 : vector<16x16xf32> to vector<1x1x16x16xf32>
    tpu.vector_store %arg5[%c0_45, %c0_46, %c0_47, %c0_48], %88 {strides = array<i32>} : memref<1x8x16x16xf32, #tpu.memory_space<vmem>>, vector<1x1x16x16xf32>,
    %c1_i32_49 = arith.constant 1 : i32
    %89 = arith.addi %1, %c1_i32_49 : i32
    %c0_i32_50 = arith.constant 0 : i32
    %90 = arith.addi %89, %c0_i32_50 : i32
    %c0_51 = arith.constant 0 : index
    %c0_52 = arith.constant 0 : index
    %91 = arith.index_cast %90 : i32 to index
    %c0_53 = arith.constant 0 : index
    %92 = vector.load %arg2[%c0_51, %c0_52, %91, %c0_53] : memref<1x3x18x18xf32, #tpu.memory_space<vmem>>, vector<1x1x1x18xf32>
    %93 = vector.shape_cast %92 : vector<1x1x1x18xf32> to vector<1x18xf32>
    %94 = vector.extract_strided_slice %93 {offsets = [0, 0], sizes = [1, 16], strides = [1, 1]} : vector<1x18xf32> to vector<1x16xf32>
    %95 = vector.extract_strided_slice %93 {offsets = [0, 1], sizes = [1, 16], strides = [1, 1]} : vector<1x18xf32> to vector<1x16xf32>
    %96 = vector.extract_strided_slice %93 {offsets = [0, 2], sizes = [1, 16], strides = [1, 1]} : vector<1x18xf32> to vector<1x16xf32>
    %c1_i32_54 = arith.constant 1 : i32
    %97 = arith.addi %1, %c1_i32_54 : i32
    %c1_i32_55 = arith.constant 1 : i32
    %98 = arith.addi %97, %c1_i32_55 : i32
    %c0_56 = arith.constant 0 : index
    %c0_57 = arith.constant 0 : index
    %99 = arith.index_cast %98 : i32 to index
    %c0_58 = arith.constant 0 : index
    %100 = vector.load %arg2[%c0_56, %c0_57, %99, %c0_58] : memref<1x3x18x18xf32, #tpu.memory_space<vmem>>, vector<1x1x1x18xf32>
    %101 = vector.shape_cast %100 : vector<1x1x1x18xf32> to vector<1x18xf32>
    %102 = vector.extract_strided_slice %101 {offsets = [0, 0], sizes = [1, 16], strides = [1, 1]} : vector<1x18xf32> to vector<1x16xf32>
    %103 = vector.extract_strided_slice %101 {offsets = [0, 1], sizes = [1, 16], strides = [1, 1]} : vector<1x18xf32> to vector<1x16xf32>
    %104 = vector.extract_strided_slice %101 {offsets = [0, 2], sizes = [1, 16], strides = [1, 1]} : vector<1x18xf32> to vector<1x16xf32>
    %c1_i32_59 = arith.constant 1 : i32
    %105 = arith.addi %1, %c1_i32_59 : i32
    %c2_i32_60 = arith.constant 2 : i32
    %106 = arith.addi %105, %c2_i32_60 : i32
    %c0_61 = arith.constant 0 : index
    %c0_62 = arith.constant 0 : index
    %107 = arith.index_cast %106 : i32 to index
    %c0_63 = arith.constant 0 : index
    %108 = vector.load %arg2[%c0_61, %c0_62, %107, %c0_63] : memref<1x3x18x18xf32, #tpu.memory_space<vmem>>, vector<1x1x1x18xf32>
    %109 = vector.shape_cast %108 : vector<1x1x1x18xf32> to vector<1x18xf32>
    %110 = vector.extract_strided_slice %109 {offsets = [0, 0], sizes = [1, 16], strides = [1, 1]} : vector<1x18xf32> to vector<1x16xf32>
    %111 = vector.extract_strided_slice %109 {offsets = [0, 1], sizes = [1, 16], strides = [1, 1]} : vector<1x18xf32> to vector<1x16xf32>
    %112 = vector.extract_strided_slice %109 {offsets = [0, 2], sizes = [1, 16], strides = [1, 1]} : vector<1x18xf32> to vector<1x16xf32>
    %c1_i32_64 = arith.constant 1 : i32
    %113 = arith.addi %1, %c1_i32_64 : i32
    %c0_i32_65 = arith.constant 0 : i32
    %114 = arith.addi %113, %c0_i32_65 : i32
    %c0_66 = arith.constant 0 : index
    %c1_67 = arith.constant 1 : index
    %115 = arith.index_cast %114 : i32 to index
    %c0_68 = arith.constant 0 : index
    %116 = vector.load %arg2[%c0_66, %c1_67, %115, %c0_68] : memref<1x3x18x18xf32, #tpu.memory_space<vmem>>, vector<1x1x1x18xf32>
    %117 = vector.shape_cast %116 : vector<1x1x1x18xf32> to vector<1x18xf32>
    %118 = vector.extract_strided_slice %117 {offsets = [0, 0], sizes = [1, 16], strides = [1, 1]} : vector<1x18xf32> to vector<1x16xf32>
    %119 = vector.extract_strided_slice %117 {offsets = [0, 1], sizes = [1, 16], strides = [1, 1]} : vector<1x18xf32> to vector<1x16xf32>
    %120 = vector.extract_strided_slice %117 {offsets = [0, 2], sizes = [1, 16], strides = [1, 1]} : vector<1x18xf32> to vector<1x16xf32>
    %c1_i32_69 = arith.constant 1 : i32
    %121 = arith.addi %1, %c1_i32_69 : i32
    %c1_i32_70 = arith.constant 1 : i32
    %122 = arith.addi %121, %c1_i32_70 : i32
    %c0_71 = arith.constant 0 : index
    %c1_72 = arith.constant 1 : index
    %123 = arith.index_cast %122 : i32 to index
    %c0_73 = arith.constant 0 : index
    %124 = vector.load %arg2[%c0_71, %c1_72, %123, %c0_73] : memref<1x3x18x18xf32, #tpu.memory_space<vmem>>, vector<1x1x1x18xf32>
    %125 = vector.shape_cast %124 : vector<1x1x1x18xf32> to vector<1x18xf32>
    %126 = vector.extract_strided_slice %125 {offsets = [0, 0], sizes = [1, 16], strides = [1, 1]} : vector<1x18xf32> to vector<1x16xf32>
    %127 = vector.extract_strided_slice %125 {offsets = [0, 1], sizes = [1, 16], strides = [1, 1]} : vector<1x18xf32> to vector<1x16xf32>
    %128 = vector.extract_strided_slice %125 {offsets = [0, 2], sizes = [1, 16], strides = [1, 1]} : vector<1x18xf32> to vector<1x16xf32>
    %c1_i32_74 = arith.constant 1 : i32
    %129 = arith.addi %1, %c1_i32_74 : i32
    %c2_i32_75 = arith.constant 2 : i32
    %130 = arith.addi %129, %c2_i32_75 : i32
    %c0_76 = arith.constant 0 : index
    %c1_77 = arith.constant 1 : index
    %131 = arith.index_cast %130 : i32 to index
    %c0_78 = arith.constant 0 : index
    %132 = vector.load %arg2[%c0_76, %c1_77, %131, %c0_78] : memref<1x3x18x18xf32, #tpu.memory_space<vmem>>, vector<1x1x1x18xf32>
    %133 = vector.shape_cast %132 : vector<1x1x1x18xf32> to vector<1x18xf32>
    %134 = vector.extract_strided_slice %133 {offsets = [0, 0], sizes = [1, 16], strides = [1, 1]} : vector<1x18xf32> to vector<1x16xf32>
    %135 = vector.extract_strided_slice %133 {offsets = [0, 1], sizes = [1, 16], strides = [1, 1]} : vector<1x18xf32> to vector<1x16xf32>
    %136 = vector.extract_strided_slice %133 {offsets = [0, 2], sizes = [1, 16], strides = [1, 1]} : vector<1x18xf32> to vector<1x16xf32>
    %c1_i32_79 = arith.constant 1 : i32
    %137 = arith.addi %1, %c1_i32_79 : i32
    %c0_i32_80 = arith.constant 0 : i32
    %138 = arith.addi %137, %c0_i32_80 : i32
    %c0_81 = arith.constant 0 : index
    %c2_82 = arith.constant 2 : index
    %139 = arith.index_cast %138 : i32 to index
    %c0_83 = arith.constant 0 : index
    %140 = vector.load %arg2[%c0_81, %c2_82, %139, %c0_83] : memref<1x3x18x18xf32, #tpu.memory_space<vmem>>, vector<1x1x1x18xf32>
    %141 = vector.shape_cast %140 : vector<1x1x1x18xf32> to vector<1x18xf32>
    %142 = vector.extract_strided_slice %141 {offsets = [0, 0], sizes = [1, 16], strides = [1, 1]} : vector<1x18xf32> to vector<1x16xf32>
    %143 = vector.extract_strided_slice %141 {offsets = [0, 1], sizes = [1, 16], strides = [1, 1]} : vector<1x18xf32> to vector<1x16xf32>
    %144 = vector.extract_strided_slice %141 {offsets = [0, 2], sizes = [1, 16], strides = [1, 1]} : vector<1x18xf32> to vector<1x16xf32>
    %c1_i32_84 = arith.constant 1 : i32
    %145 = arith.addi %1, %c1_i32_84 : i32
    %c1_i32_85 = arith.constant 1 : i32
    %146 = arith.addi %145, %c1_i32_85 : i32
    %c0_86 = arith.constant 0 : index
    %c2_87 = arith.constant 2 : index
    %147 = arith.index_cast %146 : i32 to index
    %c0_88 = arith.constant 0 : index
    %148 = vector.load %arg2[%c0_86, %c2_87, %147, %c0_88] : memref<1x3x18x18xf32, #tpu.memory_space<vmem>>, vector<1x1x1x18xf32>
    %149 = vector.shape_cast %148 : vector<1x1x1x18xf32> to vector<1x18xf32>
    %150 = vector.extract_strided_slice %149 {offsets = [0, 0], sizes = [1, 16], strides = [1, 1]} : vector<1x18xf32> to vector<1x16xf32>
    %151 = vector.extract_strided_slice %149 {offsets = [0, 1], sizes = [1, 16], strides = [1, 1]} : vector<1x18xf32> to vector<1x16xf32>
    %152 = vector.extract_strided_slice %149 {offsets = [0, 2], sizes = [1, 16], strides = [1, 1]} : vector<1x18xf32> to vector<1x16xf32>
    %c1_i32_89 = arith.constant 1 : i32
    %153 = arith.addi %1, %c1_i32_89 : i32
    %c2_i32_90 = arith.constant 2 : i32
    %154 = arith.addi %153, %c2_i32_90 : i32
    %c0_91 = arith.constant 0 : index
    %c2_92 = arith.constant 2 : index
    %155 = arith.index_cast %154 : i32 to index
    %c0_93 = arith.constant 0 : index
    %156 = vector.load %arg2[%c0_91, %c2_92, %155, %c0_93] : memref<1x3x18x18xf32, #tpu.memory_space<vmem>>, vector<1x1x1x18xf32>
    %157 = vector.shape_cast %156 : vector<1x1x1x18xf32> to vector<1x18xf32>
    %158 = vector.extract_strided_slice %157 {offsets = [0, 0], sizes = [1, 16], strides = [1, 1]} : vector<1x18xf32> to vector<1x16xf32>
    %159 = vector.extract_strided_slice %157 {offsets = [0, 1], sizes = [1, 16], strides = [1, 1]} : vector<1x18xf32> to vector<1x16xf32>
    %160 = vector.extract_strided_slice %157 {offsets = [0, 2], sizes = [1, 16], strides = [1, 1]} : vector<1x18xf32> to vector<1x16xf32>
    %161 = tpu.concatenate %94, %95, %96, %102, %103, %104, %110, %111, %112, %118, %119, %120, %126, %127, %128, %134 in 0 : vector<1x16xf32>, vector<1x16xf32>, vector<1x16xf32>, vector<1x16xf32>, vector<1x16xf32>, vector<1x16xf32>, vector<1x16xf32>, vector<1x16xf32>, vector<1x16xf32>, vector<1x16xf32>, vector<1x16xf32>, vector<1x16xf32>, vector<1x16xf32>, vector<1x16xf32>, vector<1x16xf32>, vector<1x16xf32> -> vector<16x16xf32>
    %162 = tpu.concatenate %135, %136, %142, %143, %144, %150, %151, %152, %158, %159, %160, %4 in 0 : vector<1x16xf32>, vector<1x16xf32>, vector<1x16xf32>, vector<1x16xf32>, vector<1x16xf32>, vector<1x16xf32>, vector<1x16xf32>, vector<1x16xf32>, vector<1x16xf32>, vector<1x16xf32>, vector<1x16xf32>, vector<5x16xf32> -> vector<16x16xf32>
    %163 = tpu.concatenate %161, %162 in 0 : vector<16x16xf32>, vector<16x16xf32> -> vector<32x16xf32>
    %164 = arith.truncf %163 : vector<32x16xf32> to vector<32x16xbf16>
    %cst_94 = arith.constant dense<0.000000e+00> : vector<16x16xf32>
    %165 = tpu.matmul %2, %164, %cst_94 {dimension_numbers = #tpu.dot_dimension_numbers<[1], [0], [0], [1], [0, 0, 1, 1], [], []>} : vector<16x32xbf16>, vector<32x16xbf16>, vector<16x16xf32> -> vector<16x16xf32>
    %166 = vector.broadcast %3 : vector<16x1xf32> to vector<16x16xf32>
    %167 = arith.addf %165, %166 : vector<16x16xf32>
    %cst_95 = arith.constant 0.000000e+00 : f32
    %168 = vector.broadcast %cst_95 : f32 to vector<16x16xf32>
    %169 = arith.maximumf %167, %168 : vector<16x16xf32>
    %c0_96 = arith.constant 0 : index
    %c1_97 = arith.constant 1 : index
    %c0_98 = arith.constant 0 : index
    %c0_99 = arith.constant 0 : index
    %170 = vector.load %arg5[%c0_96, %c1_97, %c0_98, %c0_99] : memref<1x8x16x16xf32, #tpu.memory_space<vmem>>, vector<1x1x16x16xf32>
    %171 = vector.shape_cast %170 : vector<1x1x16x16xf32> to vector<16x16xf32>
    %172 = vector.shape_cast %169 : vector<16x16xf32> to vector<1x1x16x16xf32>
    tpu.vector_store %arg5[%c0_96, %c1_97, %c0_98, %c0_99], %172 {strides = array<i32>} : memref<1x8x16x16xf32, #tpu.memory_space<vmem>>, vector<1x1x16x16xf32>,
    %c2_i32_100 = arith.constant 2 : i32
    %173 = arith.addi %1, %c2_i32_100 : i32
    %c0_i32_101 = arith.constant 0 : i32
    %174 = arith.addi %173, %c0_i32_101 : i32
    %c0_102 = arith.constant 0 : index
    %c0_103 = arith.constant 0 : index
    %175 = arith.index_cast %174 : i32 to index
    %c0_104 = arith.constant 0 : index
    %176 = vector.load %arg2[%c0_102, %c0_103, %175, %c0_104] : memref<1x3x18x18xf32, #tpu.memory_space<vmem>>, vector<1x1x1x18xf32>
    %177 = vector.shape_cast %176 : vector<1x1x1x18xf32> to vector<1x18xf32>
    %178 = vector.extract_strided_slice %177 {offsets = [0, 0], sizes = [1, 16], strides = [1, 1]} : vector<1x18xf32> to vector<1x16xf32>
    %179 = vector.extract_strided_slice %177 {offsets = [0, 1], sizes = [1, 16], strides = [1, 1]} : vector<1x18xf32> to vector<1x16xf32>
    %180 = vector.extract_strided_slice %177 {offsets = [0, 2], sizes = [1, 16], strides = [1, 1]} : vector<1x18xf32> to vector<1x16xf32>
    %c2_i32_105 = arith.constant 2 : i32
    %181 = arith.addi %1, %c2_i32_105 : i32
    %c1_i32_106 = arith.constant 1 : i32
    %182 = arith.addi %181, %c1_i32_106 : i32
    %c0_107 = arith.constant 0 : index
    %c0_108 = arith.constant 0 : index
    %183 = arith.index_cast %182 : i32 to index
    %c0_109 = arith.constant 0 : index
    %184 = vector.load %arg2[%c0_107, %c0_108, %183, %c0_109] : memref<1x3x18x18xf32, #tpu.memory_space<vmem>>, vector<1x1x1x18xf32>
    %185 = vector.shape_cast %184 : vector<1x1x1x18xf32> to vector<1x18xf32>
    %186 = vector.extract_strided_slice %185 {offsets = [0, 0], sizes = [1, 16], strides = [1, 1]} : vector<1x18xf32> to vector<1x16xf32>
    %187 = vector.extract_strided_slice %185 {offsets = [0, 1], sizes = [1, 16], strides = [1, 1]} : vector<1x18xf32> to vector<1x16xf32>
    %188 = vector.extract_strided_slice %185 {offsets = [0, 2], sizes = [1, 16], strides = [1, 1]} : vector<1x18xf32> to vector<1x16xf32>
    %c2_i32_110 = arith.constant 2 : i32
    %189 = arith.addi %1, %c2_i32_110 : i32
    %c2_i32_111 = arith.constant 2 : i32
    %190 = arith.addi %189, %c2_i32_111 : i32
    %c0_112 = arith.constant 0 : index
    %c0_113 = arith.constant 0 : index
    %191 = arith.index_cast %190 : i32 to index
    %c0_114 = arith.constant 0 : index
    %192 = vector.load %arg2[%c0_112, %c0_113, %191, %c0_114] : memref<1x3x18x18xf32, #tpu.memory_space<vmem>>, vector<1x1x1x18xf32>
    %193 = vector.shape_cast %192 : vector<1x1x1x18xf32> to vector<1x18xf32>
    %194 = vector.extract_strided_slice %193 {offsets = [0, 0], sizes = [1, 16], strides = [1, 1]} : vector<1x18xf32> to vector<1x16xf32>
    %195 = vector.extract_strided_slice %193 {offsets = [0, 1], sizes = [1, 16], strides = [1, 1]} : vector<1x18xf32> to vector<1x16xf32>
    %196 = vector.extract_strided_slice %193 {offsets = [0, 2], sizes = [1, 16], strides = [1, 1]} : vector<1x18xf32> to vector<1x16xf32>
    %c2_i32_115 = arith.constant 2 : i32
    %197 = arith.addi %1, %c2_i32_115 : i32
    %c0_i32_116 = arith.constant 0 : i32
    %198 = arith.addi %197, %c0_i32_116 : i32
    %c0_117 = arith.constant 0 : index
    %c1_118 = arith.constant 1 : index
    %199 = arith.index_cast %198 : i32 to index
    %c0_119 = arith.constant 0 : index
    %200 = vector.load %arg2[%c0_117, %c1_118, %199, %c0_119] : memref<1x3x18x18xf32, #tpu.memory_space<vmem>>, vector<1x1x1x18xf32>
    %201 = vector.shape_cast %200 : vector<1x1x1x18xf32> to vector<1x18xf32>
    %202 = vector.extract_strided_slice %201 {offsets = [0, 0], sizes = [1, 16], strides = [1, 1]} : vector<1x18xf32> to vector<1x16xf32>
    %203 = vector.extract_strided_slice %201 {offsets = [0, 1], sizes = [1, 16], strides = [1, 1]} : vector<1x18xf32> to vector<1x16xf32>
    %204 = vector.extract_strided_slice %201 {offsets = [0, 2], sizes = [1, 16], strides = [1, 1]} : vector<1x18xf32> to vector<1x16xf32>
    %c2_i32_120 = arith.constant 2 : i32
    %205 = arith.addi %1, %c2_i32_120 : i32
    %c1_i32_121 = arith.constant 1 : i32
    %206 = arith.addi %205, %c1_i32_121 : i32
    %c0_122 = arith.constant 0 : index
    %c1_123 = arith.constant 1 : index
    %207 = arith.index_cast %206 : i32 to index
    %c0_124 = arith.constant 0 : index
    %208 = vector.load %arg2[%c0_122, %c1_123, %207, %c0_124] : memref<1x3x18x18xf32, #tpu.memory_space<vmem>>, vector<1x1x1x18xf32>
    %209 = vector.shape_cast %208 : vector<1x1x1x18xf32> to vector<1x18xf32>
    %210 = vector.extract_strided_slice %209 {offsets = [0, 0], sizes = [1, 16], strides = [1, 1]} : vector<1x18xf32> to vector<1x16xf32>
    %211 = vector.extract_strided_slice %209 {offsets = [0, 1], sizes = [1, 16], strides = [1, 1]} : vector<1x18xf32> to vector<1x16xf32>
    %212 = vector.extract_strided_slice %209 {offsets = [0, 2], sizes = [1, 16], strides = [1, 1]} : vector<1x18xf32> to vector<1x16xf32>
    %c2_i32_125 = arith.constant 2 : i32
    %213 = arith.addi %1, %c2_i32_125 : i32
    %c2_i32_126 = arith.constant 2 : i32
    %214 = arith.addi %213, %c2_i32_126 : i32
    %c0_127 = arith.constant 0 : index
    %c1_128 = arith.constant 1 : index
    %215 = arith.index_cast %214 : i32 to index
    %c0_129 = arith.constant 0 : index
    %216 = vector.load %arg2[%c0_127, %c1_128, %215, %c0_129] : memref<1x3x18x18xf32, #tpu.memory_space<vmem>>, vector<1x1x1x18xf32>
    %217 = vector.shape_cast %216 : vector<1x1x1x18xf32> to vector<1x18xf32>
    %218 = vector.extract_strided_slice %217 {offsets = [0, 0], sizes = [1, 16], strides = [1, 1]} : vector<1x18xf32> to vector<1x16xf32>
    %219 = vector.extract_strided_slice %217 {offsets = [0, 1], sizes = [1, 16], strides = [1, 1]} : vector<1x18xf32> to vector<1x16xf32>
    %220 = vector.extract_strided_slice %217 {offsets = [0, 2], sizes = [1, 16], strides = [1, 1]} : vector<1x18xf32> to vector<1x16xf32>
    %c2_i32_130 = arith.constant 2 : i32
    %221 = arith.addi %1, %c2_i32_130 : i32
    %c0_i32_131 = arith.constant 0 : i32
    %222 = arith.addi %221, %c0_i32_131 : i32
    %c0_132 = arith.constant 0 : index
    %c2_133 = arith.constant 2 : index
    %223 = arith.index_cast %222 : i32 to index
    %c0_134 = arith.constant 0 : index
    %224 = vector.load %arg2[%c0_132, %c2_133, %223, %c0_134] : memref<1x3x18x18xf32, #tpu.memory_space<vmem>>, vector<1x1x1x18xf32>
    %225 = vector.shape_cast %224 : vector<1x1x1x18xf32> to vector<1x18xf32>
    %226 = vector.extract_strided_slice %225 {offsets = [0, 0], sizes = [1, 16], strides = [1, 1]} : vector<1x18xf32> to vector<1x16xf32>
    %227 = vector.extract_strided_slice %225 {offsets = [0, 1], sizes = [1, 16], strides = [1, 1]} : vector<1x18xf32> to vector<1x16xf32>
    %228 = vector.extract_strided_slice %225 {offsets = [0, 2], sizes = [1, 16], strides = [1, 1]} : vector<1x18xf32> to vector<1x16xf32>
    %c2_i32_135 = arith.constant 2 : i32
    %229 = arith.addi %1, %c2_i32_135 : i32
    %c1_i32_136 = arith.constant 1 : i32
    %230 = arith.addi %229, %c1_i32_136 : i32
    %c0_137 = arith.constant 0 : index
    %c2_138 = arith.constant 2 : index
    %231 = arith.index_cast %230 : i32 to index
    %c0_139 = arith.constant 0 : index
    %232 = vector.load %arg2[%c0_137, %c2_138, %231, %c0_139] : memref<1x3x18x18xf32, #tpu.memory_space<vmem>>, vector<1x1x1x18xf32>
    %233 = vector.shape_cast %232 : vector<1x1x1x18xf32> to vector<1x18xf32>
    %234 = vector.extract_strided_slice %233 {offsets = [0, 0], sizes = [1, 16], strides = [1, 1]} : vector<1x18xf32> to vector<1x16xf32>
    %235 = vector.extract_strided_slice %233 {offsets = [0, 1], sizes = [1, 16], strides = [1, 1]} : vector<1x18xf32> to vector<1x16xf32>
    %236 = vector.extract_strided_slice %233 {offsets = [0, 2], sizes = [1, 16], strides = [1, 1]} : vector<1x18xf32> to vector<1x16xf32>
    %c2_i32_140 = arith.constant 2 : i32
    %237 = arith.addi %1, %c2_i32_140 : i32
    %c2_i32_141 = arith.constant 2 : i32
    %238 = arith.addi %237, %c2_i32_141 : i32
    %c0_142 = arith.constant 0 : index
    %c2_143 = arith.constant 2 : index
    %239 = arith.index_cast %238 : i32 to index
    %c0_144 = arith.constant 0 : index
    %240 = vector.load %arg2[%c0_142, %c2_143, %239, %c0_144] : memref<1x3x18x18xf32, #tpu.memory_space<vmem>>, vector<1x1x1x18xf32>
    %241 = vector.shape_cast %240 : vector<1x1x1x18xf32> to vector<1x18xf32>
    %242 = vector.extract_strided_slice %241 {offsets = [0, 0], sizes = [1, 16], strides = [1, 1]} : vector<1x18xf32> to vector<1x16xf32>
    %243 = vector.extract_strided_slice %241 {offsets = [0, 1], sizes = [1, 16], strides = [1, 1]} : vector<1x18xf32> to vector<1x16xf32>
    %244 = vector.extract_strided_slice %241 {offsets = [0, 2], sizes = [1, 16], strides = [1, 1]} : vector<1x18xf32> to vector<1x16xf32>
    %245 = tpu.concatenate %178, %179, %180, %186, %187, %188, %194, %195, %196, %202, %203, %204, %210, %211, %212, %218 in 0 : vector<1x16xf32>, vector<1x16xf32>, vector<1x16xf32>, vector<1x16xf32>, vector<1x16xf32>, vector<1x16xf32>, vector<1x16xf32>, vector<1x16xf32>, vector<1x16xf32>, vector<1x16xf32>, vector<1x16xf32>, vector<1x16xf32>, vector<1x16xf32>, vector<1x16xf32>, vector<1x16xf32>, vector<1x16xf32> -> vector<16x16xf32>
    %246 = tpu.concatenate %219, %220, %226, %227, %228, %234, %235, %236, %242, %243, %244, %4 in 0 : vector<1x16xf32>, vector<1x16xf32>, vector<1x16xf32>, vector<1x16xf32>, vector<1x16xf32>, vector<1x16xf32>, vector<1x16xf32>, vector<1x16xf32>, vector<1x16xf32>, vector<1x16xf32>, vector<1x16xf32>, vector<5x16xf32> -> vector<16x16xf32>
    %247 = tpu.concatenate %245, %246 in 0 : vector<16x16xf32>, vector<16x16xf32> -> vector<32x16xf32>
    %248 = arith.truncf %247 : vector<32x16xf32> to vector<32x16xbf16>
    %cst_145 = arith.constant dense<0.000000e+00> : vector<16x16xf32>
    %249 = tpu.matmul %2, %248, %cst_145 {dimension_numbers = #tpu.dot_dimension_numbers<[1], [0], [0], [1], [0, 0, 1, 1], [], []>} : vector<16x32xbf16>, vector<32x16xbf16>, vector<16x16xf32> -> vector<16x16xf32>
    %250 = vector.broadcast %3 : vector<16x1xf32> to vector<16x16xf32>
    %251 = arith.addf %249, %250 : vector<16x16xf32>
    %cst_146 = arith.constant 0.000000e+00 : f32
    %252 = vector.broadcast %cst_146 : f32 to vector<16x16xf32>
    %253 = arith.maximumf %251, %252 : vector<16x16xf32>
    %c0_147 = arith.constant 0 : index
    %c2_148 = arith.constant 2 : index
    %c0_149 = arith.constant 0 : index
    %c0_150 = arith.constant 0 : index
    %254 = vector.load %arg5[%c0_147, %c2_148, %c0_149, %c0_150] : memref<1x8x16x16xf32, #tpu.memory_space<vmem>>, vector<1x1x16x16xf32>
    %255 = vector.shape_cast %254 : vector<1x1x16x16xf32> to vector<16x16xf32>
    %256 = vector.shape_cast %253 : vector<16x16xf32> to vector<1x1x16x16xf32>
    tpu.vector_store %arg5[%c0_147, %c2_148, %c0_149, %c0_150], %256 {strides = array<i32>} : memref<1x8x16x16xf32, #tpu.memory_space<vmem>>, vector<1x1x16x16xf32>,
    %c3_i32 = arith.constant 3 : i32
    %257 = arith.addi %1, %c3_i32 : i32
    %c0_i32_151 = arith.constant 0 : i32
    %258 = arith.addi %257, %c0_i32_151 : i32
    %c0_152 = arith.constant 0 : index
    %c0_153 = arith.constant 0 : index
    %259 = arith.index_cast %258 : i32 to index
    %c0_154 = arith.constant 0 : index
    %260 = vector.load %arg2[%c0_152, %c0_153, %259, %c0_154] : memref<1x3x18x18xf32, #tpu.memory_space<vmem>>, vector<1x1x1x18xf32>
    %261 = vector.shape_cast %260 : vector<1x1x1x18xf32> to vector<1x18xf32>
    %262 = vector.extract_strided_slice %261 {offsets = [0, 0], sizes = [1, 16], strides = [1, 1]} : vector<1x18xf32> to vector<1x16xf32>
    %263 = vector.extract_strided_slice %261 {offsets = [0, 1], sizes = [1, 16], strides = [1, 1]} : vector<1x18xf32> to vector<1x16xf32>
    %264 = vector.extract_strided_slice %261 {offsets = [0, 2], sizes = [1, 16], strides = [1, 1]} : vector<1x18xf32> to vector<1x16xf32>
    %c3_i32_155 = arith.constant 3 : i32
    %265 = arith.addi %1, %c3_i32_155 : i32
    %c1_i32_156 = arith.constant 1 : i32
    %266 = arith.addi %265, %c1_i32_156 : i32
    %c0_157 = arith.constant 0 : index
    %c0_158 = arith.constant 0 : index
    %267 = arith.index_cast %266 : i32 to index
    %c0_159 = arith.constant 0 : index
    %268 = vector.load %arg2[%c0_157, %c0_158, %267, %c0_159] : memref<1x3x18x18xf32, #tpu.memory_space<vmem>>, vector<1x1x1x18xf32>
    %269 = vector.shape_cast %268 : vector<1x1x1x18xf32> to vector<1x18xf32>
    %270 = vector.extract_strided_slice %269 {offsets = [0, 0], sizes = [1, 16], strides = [1, 1]} : vector<1x18xf32> to vector<1x16xf32>
    %271 = vector.extract_strided_slice %269 {offsets = [0, 1], sizes = [1, 16], strides = [1, 1]} : vector<1x18xf32> to vector<1x16xf32>
    %272 = vector.extract_strided_slice %269 {offsets = [0, 2], sizes = [1, 16], strides = [1, 1]} : vector<1x18xf32> to vector<1x16xf32>
    %c3_i32_160 = arith.constant 3 : i32
    %273 = arith.addi %1, %c3_i32_160 : i32
    %c2_i32_161 = arith.constant 2 : i32
    %274 = arith.addi %273, %c2_i32_161 : i32
    %c0_162 = arith.constant 0 : index
    %c0_163 = arith.constant 0 : index
    %275 = arith.index_cast %274 : i32 to index
    %c0_164 = arith.constant 0 : index
    %276 = vector.load %arg2[%c0_162, %c0_163, %275, %c0_164] : memref<1x3x18x18xf32, #tpu.memory_space<vmem>>, vector<1x1x1x18xf32>
    %277 = vector.shape_cast %276 : vector<1x1x1x18xf32> to vector<1x18xf32>
    %278 = vector.extract_strided_slice %277 {offsets = [0, 0], sizes = [1, 16], strides = [1, 1]} : vector<1x18xf32> to vector<1x16xf32>
    %279 = vector.extract_strided_slice %277 {offsets = [0, 1], sizes = [1, 16], strides = [1, 1]} : vector<1x18xf32> to vector<1x16xf32>
    %280 = vector.extract_strided_slice %277 {offsets = [0, 2], sizes = [1, 16], strides = [1, 1]} : vector<1x18xf32> to vector<1x16xf32>
    %c3_i32_165 = arith.constant 3 : i32
    %281 = arith.addi %1, %c3_i32_165 : i32
    %c0_i32_166 = arith.constant 0 : i32
    %282 = arith.addi %281, %c0_i32_166 : i32
    %c0_167 = arith.constant 0 : index
    %c1_168 = arith.constant 1 : index
    %283 = arith.index_cast %282 : i32 to index
    %c0_169 = arith.constant 0 : index
    %284 = vector.load %arg2[%c0_167, %c1_168, %283, %c0_169] : memref<1x3x18x18xf32, #tpu.memory_space<vmem>>, vector<1x1x1x18xf32>
    %285 = vector.shape_cast %284 : vector<1x1x1x18xf32> to vector<1x18xf32>
    %286 = vector.extract_strided_slice %285 {offsets = [0, 0], sizes = [1, 16], strides = [1, 1]} : vector<1x18xf32> to vector<1x16xf32>
    %287 = vector.extract_strided_slice %285 {offsets = [0, 1], sizes = [1, 16], strides = [1, 1]} : vector<1x18xf32> to vector<1x16xf32>
    %288 = vector.extract_strided_slice %285 {offsets = [0, 2], sizes = [1, 16], strides = [1, 1]} : vector<1x18xf32> to vector<1x16xf32>
    %c3_i32_170 = arith.constant 3 : i32
    %289 = arith.addi %1, %c3_i32_170 : i32
    %c1_i32_171 = arith.constant 1 : i32
    %290 = arith.addi %289, %c1_i32_171 : i32
    %c0_172 = arith.constant 0 : index
    %c1_173 = arith.constant 1 : index
    %291 = arith.index_cast %290 : i32 to index
    %c0_174 = arith.constant 0 : index
    %292 = vector.load %arg2[%c0_172, %c1_173, %291, %c0_174] : memref<1x3x18x18xf32, #tpu.memory_space<vmem>>, vector<1x1x1x18xf32>
    %293 = vector.shape_cast %292 : vector<1x1x1x18xf32> to vector<1x18xf32>
    %294 = vector.extract_strided_slice %293 {offsets = [0, 0], sizes = [1, 16], strides = [1, 1]} : vector<1x18xf32> to vector<1x16xf32>
    %295 = vector.extract_strided_slice %293 {offsets = [0, 1], sizes = [1, 16], strides = [1, 1]} : vector<1x18xf32> to vector<1x16xf32>
    %296 = vector.extract_strided_slice %293 {offsets = [0, 2], sizes = [1, 16], strides = [1, 1]} : vector<1x18xf32> to vector<1x16xf32>
    %c3_i32_175 = arith.constant 3 : i32
    %297 = arith.addi %1, %c3_i32_175 : i32
    %c2_i32_176 = arith.constant 2 : i32
    %298 = arith.addi %297, %c2_i32_176 : i32
    %c0_177 = arith.constant 0 : index
    %c1_178 = arith.constant 1 : index
    %299 = arith.index_cast %298 : i32 to index
    %c0_179 = arith.constant 0 : index
    %300 = vector.load %arg2[%c0_177, %c1_178, %299, %c0_179] : memref<1x3x18x18xf32, #tpu.memory_space<vmem>>, vector<1x1x1x18xf32>
    %301 = vector.shape_cast %300 : vector<1x1x1x18xf32> to vector<1x18xf32>
    %302 = vector.extract_strided_slice %301 {offsets = [0, 0], sizes = [1, 16], strides = [1, 1]} : vector<1x18xf32> to vector<1x16xf32>
    %303 = vector.extract_strided_slice %301 {offsets = [0, 1], sizes = [1, 16], strides = [1, 1]} : vector<1x18xf32> to vector<1x16xf32>
    %304 = vector.extract_strided_slice %301 {offsets = [0, 2], sizes = [1, 16], strides = [1, 1]} : vector<1x18xf32> to vector<1x16xf32>
    %c3_i32_180 = arith.constant 3 : i32
    %305 = arith.addi %1, %c3_i32_180 : i32
    %c0_i32_181 = arith.constant 0 : i32
    %306 = arith.addi %305, %c0_i32_181 : i32
    %c0_182 = arith.constant 0 : index
    %c2_183 = arith.constant 2 : index
    %307 = arith.index_cast %306 : i32 to index
    %c0_184 = arith.constant 0 : index
    %308 = vector.load %arg2[%c0_182, %c2_183, %307, %c0_184] : memref<1x3x18x18xf32, #tpu.memory_space<vmem>>, vector<1x1x1x18xf32>
    %309 = vector.shape_cast %308 : vector<1x1x1x18xf32> to vector<1x18xf32>
    %310 = vector.extract_strided_slice %309 {offsets = [0, 0], sizes = [1, 16], strides = [1, 1]} : vector<1x18xf32> to vector<1x16xf32>
    %311 = vector.extract_strided_slice %309 {offsets = [0, 1], sizes = [1, 16], strides = [1, 1]} : vector<1x18xf32> to vector<1x16xf32>
    %312 = vector.extract_strided_slice %309 {offsets = [0, 2], sizes = [1, 16], strides = [1, 1]} : vector<1x18xf32> to vector<1x16xf32>
    %c3_i32_185 = arith.constant 3 : i32
    %313 = arith.addi %1, %c3_i32_185 : i32
    %c1_i32_186 = arith.constant 1 : i32
    %314 = arith.addi %313, %c1_i32_186 : i32
    %c0_187 = arith.constant 0 : index
    %c2_188 = arith.constant 2 : index
    %315 = arith.index_cast %314 : i32 to index
    %c0_189 = arith.constant 0 : index
    %316 = vector.load %arg2[%c0_187, %c2_188, %315, %c0_189] : memref<1x3x18x18xf32, #tpu.memory_space<vmem>>, vector<1x1x1x18xf32>
    %317 = vector.shape_cast %316 : vector<1x1x1x18xf32> to vector<1x18xf32>
    %318 = vector.extract_strided_slice %317 {offsets = [0, 0], sizes = [1, 16], strides = [1, 1]} : vector<1x18xf32> to vector<1x16xf32>
    %319 = vector.extract_strided_slice %317 {offsets = [0, 1], sizes = [1, 16], strides = [1, 1]} : vector<1x18xf32> to vector<1x16xf32>
    %320 = vector.extract_strided_slice %317 {offsets = [0, 2], sizes = [1, 16], strides = [1, 1]} : vector<1x18xf32> to vector<1x16xf32>
    %c3_i32_190 = arith.constant 3 : i32
    %321 = arith.addi %1, %c3_i32_190 : i32
    %c2_i32_191 = arith.constant 2 : i32
    %322 = arith.addi %321, %c2_i32_191 : i32
    %c0_192 = arith.constant 0 : index
    %c2_193 = arith.constant 2 : index
    %323 = arith.index_cast %322 : i32 to index
    %c0_194 = arith.constant 0 : index
    %324 = vector.load %arg2[%c0_192, %c2_193, %323, %c0_194] : memref<1x3x18x18xf32, #tpu.memory_space<vmem>>, vector<1x1x1x18xf32>
    %325 = vector.shape_cast %324 : vector<1x1x1x18xf32> to vector<1x18xf32>
    %326 = vector.extract_strided_slice %325 {offsets = [0, 0], sizes = [1, 16], strides = [1, 1]} : vector<1x18xf32> to vector<1x16xf32>
    %327 = vector.extract_strided_slice %325 {offsets = [0, 1], sizes = [1, 16], strides = [1, 1]} : vector<1x18xf32> to vector<1x16xf32>
    %328 = vector.extract_strided_slice %325 {offsets = [0, 2], sizes = [1, 16], strides = [1, 1]} : vector<1x18xf32> to vector<1x16xf32>
    %329 = tpu.concatenate %262, %263, %264, %270, %271, %272, %278, %279, %280, %286, %287, %288, %294, %295, %296, %302 in 0 : vector<1x16xf32>, vector<1x16xf32>, vector<1x16xf32>, vector<1x16xf32>, vector<1x16xf32>, vector<1x16xf32>, vector<1x16xf32>, vector<1x16xf32>, vector<1x16xf32>, vector<1x16xf32>, vector<1x16xf32>, vector<1x16xf32>, vector<1x16xf32>, vector<1x16xf32>, vector<1x16xf32>, vector<1x16xf32> -> vector<16x16xf32>
    %330 = tpu.concatenate %303, %304, %310, %311, %312, %318, %319, %320, %326, %327, %328, %4 in 0 : vector<1x16xf32>, vector<1x16xf32>, vector<1x16xf32>, vector<1x16xf32>, vector<1x16xf32>, vector<1x16xf32>, vector<1x16xf32>, vector<1x16xf32>, vector<1x16xf32>, vector<1x16xf32>, vector<1x16xf32>, vector<5x16xf32> -> vector<16x16xf32>
    %331 = tpu.concatenate %329, %330 in 0 : vector<16x16xf32>, vector<16x16xf32> -> vector<32x16xf32>
    %332 = arith.truncf %331 : vector<32x16xf32> to vector<32x16xbf16>
    %cst_195 = arith.constant dense<0.000000e+00> : vector<16x16xf32>
    %333 = tpu.matmul %2, %332, %cst_195 {dimension_numbers = #tpu.dot_dimension_numbers<[1], [0], [0], [1], [0, 0, 1, 1], [], []>} : vector<16x32xbf16>, vector<32x16xbf16>, vector<16x16xf32> -> vector<16x16xf32>
    %334 = vector.broadcast %3 : vector<16x1xf32> to vector<16x16xf32>
    %335 = arith.addf %333, %334 : vector<16x16xf32>
    %cst_196 = arith.constant 0.000000e+00 : f32
    %336 = vector.broadcast %cst_196 : f32 to vector<16x16xf32>
    %337 = arith.maximumf %335, %336 : vector<16x16xf32>
    %c0_197 = arith.constant 0 : index
    %c3 = arith.constant 3 : index
    %c0_198 = arith.constant 0 : index
    %c0_199 = arith.constant 0 : index
    %338 = vector.load %arg5[%c0_197, %c3, %c0_198, %c0_199] : memref<1x8x16x16xf32, #tpu.memory_space<vmem>>, vector<1x1x16x16xf32>
    %339 = vector.shape_cast %338 : vector<1x1x16x16xf32> to vector<16x16xf32>
    %340 = vector.shape_cast %337 : vector<16x16xf32> to vector<1x1x16x16xf32>
    tpu.vector_store %arg5[%c0_197, %c3, %c0_198, %c0_199], %340 {strides = array<i32>} : memref<1x8x16x16xf32, #tpu.memory_space<vmem>>, vector<1x1x16x16xf32>,
    %c4_i32 = arith.constant 4 : i32
    %341 = arith.addi %1, %c4_i32 : i32
    %c0_i32_200 = arith.constant 0 : i32
    %342 = arith.addi %341, %c0_i32_200 : i32
    %c0_201 = arith.constant 0 : index
    %c0_202 = arith.constant 0 : index
    %343 = arith.index_cast %342 : i32 to index
    %c0_203 = arith.constant 0 : index
    %344 = vector.load %arg2[%c0_201, %c0_202, %343, %c0_203] : memref<1x3x18x18xf32, #tpu.memory_space<vmem>>, vector<1x1x1x18xf32>
    %345 = vector.shape_cast %344 : vector<1x1x1x18xf32> to vector<1x18xf32>
    %346 = vector.extract_strided_slice %345 {offsets = [0, 0], sizes = [1, 16], strides = [1, 1]} : vector<1x18xf32> to vector<1x16xf32>
    %347 = vector.extract_strided_slice %345 {offsets = [0, 1], sizes = [1, 16], strides = [1, 1]} : vector<1x18xf32> to vector<1x16xf32>
    %348 = vector.extract_strided_slice %345 {offsets = [0, 2], sizes = [1, 16], strides = [1, 1]} : vector<1x18xf32> to vector<1x16xf32>
    %c4_i32_204 = arith.constant 4 : i32
    %349 = arith.addi %1, %c4_i32_204 : i32
    %c1_i32_205 = arith.constant 1 : i32
    %350 = arith.addi %349, %c1_i32_205 : i32
    %c0_206 = arith.constant 0 : index
    %c0_207 = arith.constant 0 : index
    %351 = arith.index_cast %350 : i32 to index
    %c0_208 = arith.constant 0 : index
    %352 = vector.load %arg2[%c0_206, %c0_207, %351, %c0_208] : memref<1x3x18x18xf32, #tpu.memory_space<vmem>>, vector<1x1x1x18xf32>
    %353 = vector.shape_cast %352 : vector<1x1x1x18xf32> to vector<1x18xf32>
    %354 = vector.extract_strided_slice %353 {offsets = [0, 0], sizes = [1, 16], strides = [1, 1]} : vector<1x18xf32> to vector<1x16xf32>
    %355 = vector.extract_strided_slice %353 {offsets = [0, 1], sizes = [1, 16], strides = [1, 1]} : vector<1x18xf32> to vector<1x16xf32>
    %356 = vector.extract_strided_slice %353 {offsets = [0, 2], sizes = [1, 16], strides = [1, 1]} : vector<1x18xf32> to vector<1x16xf32>
    %c4_i32_209 = arith.constant 4 : i32
    %357 = arith.addi %1, %c4_i32_209 : i32
    %c2_i32_210 = arith.constant 2 : i32
    %358 = arith.addi %357, %c2_i32_210 : i32
    %c0_211 = arith.constant 0 : index
    %c0_212 = arith.constant 0 : index
    %359 = arith.index_cast %358 : i32 to index
    %c0_213 = arith.constant 0 : index
    %360 = vector.load %arg2[%c0_211, %c0_212, %359, %c0_213] : memref<1x3x18x18xf32, #tpu.memory_space<vmem>>, vector<1x1x1x18xf32>
    %361 = vector.shape_cast %360 : vector<1x1x1x18xf32> to vector<1x18xf32>
    %362 = vector.extract_strided_slice %361 {offsets = [0, 0], sizes = [1, 16], strides = [1, 1]} : vector<1x18xf32> to vector<1x16xf32>
    %363 = vector.extract_strided_slice %361 {offsets = [0, 1], sizes = [1, 16], strides = [1, 1]} : vector<1x18xf32> to vector<1x16xf32>
    %364 = vector.extract_strided_slice %361 {offsets = [0, 2], sizes = [1, 16], strides = [1, 1]} : vector<1x18xf32> to vector<1x16xf32>
    %c4_i32_214 = arith.constant 4 : i32
    %365 = arith.addi %1, %c4_i32_214 : i32
    %c0_i32_215 = arith.constant 0 : i32
    %366 = arith.addi %365, %c0_i32_215 : i32
    %c0_216 = arith.constant 0 : index
    %c1_217 = arith.constant 1 : index
    %367 = arith.index_cast %366 : i32 to index
    %c0_218 = arith.constant 0 : index
    %368 = vector.load %arg2[%c0_216, %c1_217, %367, %c0_218] : memref<1x3x18x18xf32, #tpu.memory_space<vmem>>, vector<1x1x1x18xf32>
    %369 = vector.shape_cast %368 : vector<1x1x1x18xf32> to vector<1x18xf32>
    %370 = vector.extract_strided_slice %369 {offsets = [0, 0], sizes = [1, 16], strides = [1, 1]} : vector<1x18xf32> to vector<1x16xf32>
    %371 = vector.extract_strided_slice %369 {offsets = [0, 1], sizes = [1, 16], strides = [1, 1]} : vector<1x18xf32> to vector<1x16xf32>
    %372 = vector.extract_strided_slice %369 {offsets = [0, 2], sizes = [1, 16], strides = [1, 1]} : vector<1x18xf32> to vector<1x16xf32>
    %c4_i32_219 = arith.constant 4 : i32
    %373 = arith.addi %1, %c4_i32_219 : i32
    %c1_i32_220 = arith.constant 1 : i32
    %374 = arith.addi %373, %c1_i32_220 : i32
    %c0_221 = arith.constant 0 : index
    %c1_222 = arith.constant 1 : index
    %375 = arith.index_cast %374 : i32 to index
    %c0_223 = arith.constant 0 : index
    %376 = vector.load %arg2[%c0_221, %c1_222, %375, %c0_223] : memref<1x3x18x18xf32, #tpu.memory_space<vmem>>, vector<1x1x1x18xf32>
    %377 = vector.shape_cast %376 : vector<1x1x1x18xf32> to vector<1x18xf32>
    %378 = vector.extract_strided_slice %377 {offsets = [0, 0], sizes = [1, 16], strides = [1, 1]} : vector<1x18xf32> to vector<1x16xf32>
    %379 = vector.extract_strided_slice %377 {offsets = [0, 1], sizes = [1, 16], strides = [1, 1]} : vector<1x18xf32> to vector<1x16xf32>
    %380 = vector.extract_strided_slice %377 {offsets = [0, 2], sizes = [1, 16], strides = [1, 1]} : vector<1x18xf32> to vector<1x16xf32>
    %c4_i32_224 = arith.constant 4 : i32
    %381 = arith.addi %1, %c4_i32_224 : i32
    %c2_i32_225 = arith.constant 2 : i32
    %382 = arith.addi %381, %c2_i32_225 : i32
    %c0_226 = arith.constant 0 : index
    %c1_227 = arith.constant 1 : index
    %383 = arith.index_cast %382 : i32 to index
    %c0_228 = arith.constant 0 : index
    %384 = vector.load %arg2[%c0_226, %c1_227, %383, %c0_228] : memref<1x3x18x18xf32, #tpu.memory_space<vmem>>, vector<1x1x1x18xf32>
    %385 = vector.shape_cast %384 : vector<1x1x1x18xf32> to vector<1x18xf32>
    %386 = vector.extract_strided_slice %385 {offsets = [0, 0], sizes = [1, 16], strides = [1, 1]} : vector<1x18xf32> to vector<1x16xf32>
    %387 = vector.extract_strided_slice %385 {offsets = [0, 1], sizes = [1, 16], strides = [1, 1]} : vector<1x18xf32> to vector<1x16xf32>
    %388 = vector.extract_strided_slice %385 {offsets = [0, 2], sizes = [1, 16], strides = [1, 1]} : vector<1x18xf32> to vector<1x16xf32>
    %c4_i32_229 = arith.constant 4 : i32
    %389 = arith.addi %1, %c4_i32_229 : i32
    %c0_i32_230 = arith.constant 0 : i32
    %390 = arith.addi %389, %c0_i32_230 : i32
    %c0_231 = arith.constant 0 : index
    %c2_232 = arith.constant 2 : index
    %391 = arith.index_cast %390 : i32 to index
    %c0_233 = arith.constant 0 : index
    %392 = vector.load %arg2[%c0_231, %c2_232, %391, %c0_233] : memref<1x3x18x18xf32, #tpu.memory_space<vmem>>, vector<1x1x1x18xf32>
    %393 = vector.shape_cast %392 : vector<1x1x1x18xf32> to vector<1x18xf32>
    %394 = vector.extract_strided_slice %393 {offsets = [0, 0], sizes = [1, 16], strides = [1, 1]} : vector<1x18xf32> to vector<1x16xf32>
    %395 = vector.extract_strided_slice %393 {offsets = [0, 1], sizes = [1, 16], strides = [1, 1]} : vector<1x18xf32> to vector<1x16xf32>
    %396 = vector.extract_strided_slice %393 {offsets = [0, 2], sizes = [1, 16], strides = [1, 1]} : vector<1x18xf32> to vector<1x16xf32>
    %c4_i32_234 = arith.constant 4 : i32
    %397 = arith.addi %1, %c4_i32_234 : i32
    %c1_i32_235 = arith.constant 1 : i32
    %398 = arith.addi %397, %c1_i32_235 : i32
    %c0_236 = arith.constant 0 : index
    %c2_237 = arith.constant 2 : index
    %399 = arith.index_cast %398 : i32 to index
    %c0_238 = arith.constant 0 : index
    %400 = vector.load %arg2[%c0_236, %c2_237, %399, %c0_238] : memref<1x3x18x18xf32, #tpu.memory_space<vmem>>, vector<1x1x1x18xf32>
    %401 = vector.shape_cast %400 : vector<1x1x1x18xf32> to vector<1x18xf32>
    %402 = vector.extract_strided_slice %401 {offsets = [0, 0], sizes = [1, 16], strides = [1, 1]} : vector<1x18xf32> to vector<1x16xf32>
    %403 = vector.extract_strided_slice %401 {offsets = [0, 1], sizes = [1, 16], strides = [1, 1]} : vector<1x18xf32> to vector<1x16xf32>
    %404 = vector.extract_strided_slice %401 {offsets = [0, 2], sizes = [1, 16], strides = [1, 1]} : vector<1x18xf32> to vector<1x16xf32>
    %c4_i32_239 = arith.constant 4 : i32
    %405 = arith.addi %1, %c4_i32_239 : i32
    %c2_i32_240 = arith.constant 2 : i32
    %406 = arith.addi %405, %c2_i32_240 : i32
    %c0_241 = arith.constant 0 : index
    %c2_242 = arith.constant 2 : index
    %407 = arith.index_cast %406 : i32 to index
    %c0_243 = arith.constant 0 : index
    %408 = vector.load %arg2[%c0_241, %c2_242, %407, %c0_243] : memref<1x3x18x18xf32, #tpu.memory_space<vmem>>, vector<1x1x1x18xf32>
    %409 = vector.shape_cast %408 : vector<1x1x1x18xf32> to vector<1x18xf32>
    %410 = vector.extract_strided_slice %409 {offsets = [0, 0], sizes = [1, 16], strides = [1, 1]} : vector<1x18xf32> to vector<1x16xf32>
    %411 = vector.extract_strided_slice %409 {offsets = [0, 1], sizes = [1, 16], strides = [1, 1]} : vector<1x18xf32> to vector<1x16xf32>
    %412 = vector.extract_strided_slice %409 {offsets = [0, 2], sizes = [1, 16], strides = [1, 1]} : vector<1x18xf32> to vector<1x16xf32>
    %413 = tpu.concatenate %346, %347, %348, %354, %355, %356, %362, %363, %364, %370, %371, %372, %378, %379, %380, %386 in 0 : vector<1x16xf32>, vector<1x16xf32>, vector<1x16xf32>, vector<1x16xf32>, vector<1x16xf32>, vector<1x16xf32>, vector<1x16xf32>, vector<1x16xf32>, vector<1x16xf32>, vector<1x16xf32>, vector<1x16xf32>, vector<1x16xf32>, vector<1x16xf32>, vector<1x16xf32>, vector<1x16xf32>, vector<1x16xf32> -> vector<16x16xf32>
    %414 = tpu.concatenate %387, %388, %394, %395, %396, %402, %403, %404, %410, %411, %412, %4 in 0 : vector<1x16xf32>, vector<1x16xf32>, vector<1x16xf32>, vector<1x16xf32>, vector<1x16xf32>, vector<1x16xf32>, vector<1x16xf32>, vector<1x16xf32>, vector<1x16xf32>, vector<1x16xf32>, vector<1x16xf32>, vector<5x16xf32> -> vector<16x16xf32>
    %415 = tpu.concatenate %413, %414 in 0 : vector<16x16xf32>, vector<16x16xf32> -> vector<32x16xf32>
    %416 = arith.truncf %415 : vector<32x16xf32> to vector<32x16xbf16>
    %cst_244 = arith.constant dense<0.000000e+00> : vector<16x16xf32>
    %417 = tpu.matmul %2, %416, %cst_244 {dimension_numbers = #tpu.dot_dimension_numbers<[1], [0], [0], [1], [0, 0, 1, 1], [], []>} : vector<16x32xbf16>, vector<32x16xbf16>, vector<16x16xf32> -> vector<16x16xf32>
    %418 = vector.broadcast %3 : vector<16x1xf32> to vector<16x16xf32>
    %419 = arith.addf %417, %418 : vector<16x16xf32>
    %cst_245 = arith.constant 0.000000e+00 : f32
    %420 = vector.broadcast %cst_245 : f32 to vector<16x16xf32>
    %421 = arith.maximumf %419, %420 : vector<16x16xf32>
    %c0_246 = arith.constant 0 : index
    %c4 = arith.constant 4 : index
    %c0_247 = arith.constant 0 : index
    %c0_248 = arith.constant 0 : index
    %422 = vector.load %arg5[%c0_246, %c4, %c0_247, %c0_248] : memref<1x8x16x16xf32, #tpu.memory_space<vmem>>, vector<1x1x16x16xf32>
    %423 = vector.shape_cast %422 : vector<1x1x16x16xf32> to vector<16x16xf32>
    %424 = vector.shape_cast %421 : vector<16x16xf32> to vector<1x1x16x16xf32>
    tpu.vector_store %arg5[%c0_246, %c4, %c0_247, %c0_248], %424 {strides = array<i32>} : memref<1x8x16x16xf32, #tpu.memory_space<vmem>>, vector<1x1x16x16xf32>,
    %c5_i32 = arith.constant 5 : i32
    %425 = arith.addi %1, %c5_i32 : i32
    %c0_i32_249 = arith.constant 0 : i32
    %426 = arith.addi %425, %c0_i32_249 : i32
    %c0_250 = arith.constant 0 : index
    %c0_251 = arith.constant 0 : index
    %427 = arith.index_cast %426 : i32 to index
    %c0_252 = arith.constant 0 : index
    %428 = vector.load %arg2[%c0_250, %c0_251, %427, %c0_252] : memref<1x3x18x18xf32, #tpu.memory_space<vmem>>, vector<1x1x1x18xf32>
    %429 = vector.shape_cast %428 : vector<1x1x1x18xf32> to vector<1x18xf32>
    %430 = vector.extract_strided_slice %429 {offsets = [0, 0], sizes = [1, 16], strides = [1, 1]} : vector<1x18xf32> to vector<1x16xf32>
    %431 = vector.extract_strided_slice %429 {offsets = [0, 1], sizes = [1, 16], strides = [1, 1]} : vector<1x18xf32> to vector<1x16xf32>
    %432 = vector.extract_strided_slice %429 {offsets = [0, 2], sizes = [1, 16], strides = [1, 1]} : vector<1x18xf32> to vector<1x16xf32>
    %c5_i32_253 = arith.constant 5 : i32
    %433 = arith.addi %1, %c5_i32_253 : i32
    %c1_i32_254 = arith.constant 1 : i32
    %434 = arith.addi %433, %c1_i32_254 : i32
    %c0_255 = arith.constant 0 : index
    %c0_256 = arith.constant 0 : index
    %435 = arith.index_cast %434 : i32 to index
    %c0_257 = arith.constant 0 : index
    %436 = vector.load %arg2[%c0_255, %c0_256, %435, %c0_257] : memref<1x3x18x18xf32, #tpu.memory_space<vmem>>, vector<1x1x1x18xf32>
    %437 = vector.shape_cast %436 : vector<1x1x1x18xf32> to vector<1x18xf32>
    %438 = vector.extract_strided_slice %437 {offsets = [0, 0], sizes = [1, 16], strides = [1, 1]} : vector<1x18xf32> to vector<1x16xf32>
    %439 = vector.extract_strided_slice %437 {offsets = [0, 1], sizes = [1, 16], strides = [1, 1]} : vector<1x18xf32> to vector<1x16xf32>
    %440 = vector.extract_strided_slice %437 {offsets = [0, 2], sizes = [1, 16], strides = [1, 1]} : vector<1x18xf32> to vector<1x16xf32>
    %c5_i32_258 = arith.constant 5 : i32
    %441 = arith.addi %1, %c5_i32_258 : i32
    %c2_i32_259 = arith.constant 2 : i32
    %442 = arith.addi %441, %c2_i32_259 : i32
    %c0_260 = arith.constant 0 : index
    %c0_261 = arith.constant 0 : index
    %443 = arith.index_cast %442 : i32 to index
    %c0_262 = arith.constant 0 : index
    %444 = vector.load %arg2[%c0_260, %c0_261, %443, %c0_262] : memref<1x3x18x18xf32, #tpu.memory_space<vmem>>, vector<1x1x1x18xf32>
    %445 = vector.shape_cast %444 : vector<1x1x1x18xf32> to vector<1x18xf32>
    %446 = vector.extract_strided_slice %445 {offsets = [0, 0], sizes = [1, 16], strides = [1, 1]} : vector<1x18xf32> to vector<1x16xf32>
    %447 = vector.extract_strided_slice %445 {offsets = [0, 1], sizes = [1, 16], strides = [1, 1]} : vector<1x18xf32> to vector<1x16xf32>
    %448 = vector.extract_strided_slice %445 {offsets = [0, 2], sizes = [1, 16], strides = [1, 1]} : vector<1x18xf32> to vector<1x16xf32>
    %c5_i32_263 = arith.constant 5 : i32
    %449 = arith.addi %1, %c5_i32_263 : i32
    %c0_i32_264 = arith.constant 0 : i32
    %450 = arith.addi %449, %c0_i32_264 : i32
    %c0_265 = arith.constant 0 : index
    %c1_266 = arith.constant 1 : index
    %451 = arith.index_cast %450 : i32 to index
    %c0_267 = arith.constant 0 : index
    %452 = vector.load %arg2[%c0_265, %c1_266, %451, %c0_267] : memref<1x3x18x18xf32, #tpu.memory_space<vmem>>, vector<1x1x1x18xf32>
    %453 = vector.shape_cast %452 : vector<1x1x1x18xf32> to vector<1x18xf32>
    %454 = vector.extract_strided_slice %453 {offsets = [0, 0], sizes = [1, 16], strides = [1, 1]} : vector<1x18xf32> to vector<1x16xf32>
    %455 = vector.extract_strided_slice %453 {offsets = [0, 1], sizes = [1, 16], strides = [1, 1]} : vector<1x18xf32> to vector<1x16xf32>
    %456 = vector.extract_strided_slice %453 {offsets = [0, 2], sizes = [1, 16], strides = [1, 1]} : vector<1x18xf32> to vector<1x16xf32>
    %c5_i32_268 = arith.constant 5 : i32
    %457 = arith.addi %1, %c5_i32_268 : i32
    %c1_i32_269 = arith.constant 1 : i32
    %458 = arith.addi %457, %c1_i32_269 : i32
    %c0_270 = arith.constant 0 : index
    %c1_271 = arith.constant 1 : index
    %459 = arith.index_cast %458 : i32 to index
    %c0_272 = arith.constant 0 : index
    %460 = vector.load %arg2[%c0_270, %c1_271, %459, %c0_272] : memref<1x3x18x18xf32, #tpu.memory_space<vmem>>, vector<1x1x1x18xf32>
    %461 = vector.shape_cast %460 : vector<1x1x1x18xf32> to vector<1x18xf32>
    %462 = vector.extract_strided_slice %461 {offsets = [0, 0], sizes = [1, 16], strides = [1, 1]} : vector<1x18xf32> to vector<1x16xf32>
    %463 = vector.extract_strided_slice %461 {offsets = [0, 1], sizes = [1, 16], strides = [1, 1]} : vector<1x18xf32> to vector<1x16xf32>
    %464 = vector.extract_strided_slice %461 {offsets = [0, 2], sizes = [1, 16], strides = [1, 1]} : vector<1x18xf32> to vector<1x16xf32>
    %c5_i32_273 = arith.constant 5 : i32
    %465 = arith.addi %1, %c5_i32_273 : i32
    %c2_i32_274 = arith.constant 2 : i32
    %466 = arith.addi %465, %c2_i32_274 : i32
    %c0_275 = arith.constant 0 : index
    %c1_276 = arith.constant 1 : index
    %467 = arith.index_cast %466 : i32 to index
    %c0_277 = arith.constant 0 : index
    %468 = vector.load %arg2[%c0_275, %c1_276, %467, %c0_277] : memref<1x3x18x18xf32, #tpu.memory_space<vmem>>, vector<1x1x1x18xf32>
    %469 = vector.shape_cast %468 : vector<1x1x1x18xf32> to vector<1x18xf32>
    %470 = vector.extract_strided_slice %469 {offsets = [0, 0], sizes = [1, 16], strides = [1, 1]} : vector<1x18xf32> to vector<1x16xf32>
    %471 = vector.extract_strided_slice %469 {offsets = [0, 1], sizes = [1, 16], strides = [1, 1]} : vector<1x18xf32> to vector<1x16xf32>
    %472 = vector.extract_strided_slice %469 {offsets = [0, 2], sizes = [1, 16], strides = [1, 1]} : vector<1x18xf32> to vector<1x16xf32>
    %c5_i32_278 = arith.constant 5 : i32
    %473 = arith.addi %1, %c5_i32_278 : i32
    %c0_i32_279 = arith.constant 0 : i32
    %474 = arith.addi %473, %c0_i32_279 : i32
    %c0_280 = arith.constant 0 : index
    %c2_281 = arith.constant 2 : index
    %475 = arith.index_cast %474 : i32 to index
    %c0_282 = arith.constant 0 : index
    %476 = vector.load %arg2[%c0_280, %c2_281, %475, %c0_282] : memref<1x3x18x18xf32, #tpu.memory_space<vmem>>, vector<1x1x1x18xf32>
    %477 = vector.shape_cast %476 : vector<1x1x1x18xf32> to vector<1x18xf32>
    %478 = vector.extract_strided_slice %477 {offsets = [0, 0], sizes = [1, 16], strides = [1, 1]} : vector<1x18xf32> to vector<1x16xf32>
    %479 = vector.extract_strided_slice %477 {offsets = [0, 1], sizes = [1, 16], strides = [1, 1]} : vector<1x18xf32> to vector<1x16xf32>
    %480 = vector.extract_strided_slice %477 {offsets = [0, 2], sizes = [1, 16], strides = [1, 1]} : vector<1x18xf32> to vector<1x16xf32>
    %c5_i32_283 = arith.constant 5 : i32
    %481 = arith.addi %1, %c5_i32_283 : i32
    %c1_i32_284 = arith.constant 1 : i32
    %482 = arith.addi %481, %c1_i32_284 : i32
    %c0_285 = arith.constant 0 : index
    %c2_286 = arith.constant 2 : index
    %483 = arith.index_cast %482 : i32 to index
    %c0_287 = arith.constant 0 : index
    %484 = vector.load %arg2[%c0_285, %c2_286, %483, %c0_287] : memref<1x3x18x18xf32, #tpu.memory_space<vmem>>, vector<1x1x1x18xf32>
    %485 = vector.shape_cast %484 : vector<1x1x1x18xf32> to vector<1x18xf32>
    %486 = vector.extract_strided_slice %485 {offsets = [0, 0], sizes = [1, 16], strides = [1, 1]} : vector<1x18xf32> to vector<1x16xf32>
    %487 = vector.extract_strided_slice %485 {offsets = [0, 1], sizes = [1, 16], strides = [1, 1]} : vector<1x18xf32> to vector<1x16xf32>
    %488 = vector.extract_strided_slice %485 {offsets = [0, 2], sizes = [1, 16], strides = [1, 1]} : vector<1x18xf32> to vector<1x16xf32>
    %c5_i32_288 = arith.constant 5 : i32
    %489 = arith.addi %1, %c5_i32_288 : i32
    %c2_i32_289 = arith.constant 2 : i32
    %490 = arith.addi %489, %c2_i32_289 : i32
    %c0_290 = arith.constant 0 : index
    %c2_291 = arith.constant 2 : index
    %491 = arith.index_cast %490 : i32 to index
    %c0_292 = arith.constant 0 : index
    %492 = vector.load %arg2[%c0_290, %c2_291, %491, %c0_292] : memref<1x3x18x18xf32, #tpu.memory_space<vmem>>, vector<1x1x1x18xf32>
    %493 = vector.shape_cast %492 : vector<1x1x1x18xf32> to vector<1x18xf32>
    %494 = vector.extract_strided_slice %493 {offsets = [0, 0], sizes = [1, 16], strides = [1, 1]} : vector<1x18xf32> to vector<1x16xf32>
    %495 = vector.extract_strided_slice %493 {offsets = [0, 1], sizes = [1, 16], strides = [1, 1]} : vector<1x18xf32> to vector<1x16xf32>
    %496 = vector.extract_strided_slice %493 {offsets = [0, 2], sizes = [1, 16], strides = [1, 1]} : vector<1x18xf32> to vector<1x16xf32>
    %497 = tpu.concatenate %430, %431, %432, %438, %439, %440, %446, %447, %448, %454, %455, %456, %462, %463, %464, %470 in 0 : vector<1x16xf32>, vector<1x16xf32>, vector<1x16xf32>, vector<1x16xf32>, vector<1x16xf32>, vector<1x16xf32>, vector<1x16xf32>, vector<1x16xf32>, vector<1x16xf32>, vector<1x16xf32>, vector<1x16xf32>, vector<1x16xf32>, vector<1x16xf32>, vector<1x16xf32>, vector<1x16xf32>, vector<1x16xf32> -> vector<16x16xf32>
    %498 = tpu.concatenate %471, %472, %478, %479, %480, %486, %487, %488, %494, %495, %496, %4 in 0 : vector<1x16xf32>, vector<1x16xf32>, vector<1x16xf32>, vector<1x16xf32>, vector<1x16xf32>, vector<1x16xf32>, vector<1x16xf32>, vector<1x16xf32>, vector<1x16xf32>, vector<1x16xf32>, vector<1x16xf32>, vector<5x16xf32> -> vector<16x16xf32>
    %499 = tpu.concatenate %497, %498 in 0 : vector<16x16xf32>, vector<16x16xf32> -> vector<32x16xf32>
    %500 = arith.truncf %499 : vector<32x16xf32> to vector<32x16xbf16>
    %cst_293 = arith.constant dense<0.000000e+00> : vector<16x16xf32>
    %501 = tpu.matmul %2, %500, %cst_293 {dimension_numbers = #tpu.dot_dimension_numbers<[1], [0], [0], [1], [0, 0, 1, 1], [], []>} : vector<16x32xbf16>, vector<32x16xbf16>, vector<16x16xf32> -> vector<16x16xf32>
    %502 = vector.broadcast %3 : vector<16x1xf32> to vector<16x16xf32>
    %503 = arith.addf %501, %502 : vector<16x16xf32>
    %cst_294 = arith.constant 0.000000e+00 : f32
    %504 = vector.broadcast %cst_294 : f32 to vector<16x16xf32>
    %505 = arith.maximumf %503, %504 : vector<16x16xf32>
    %c0_295 = arith.constant 0 : index
    %c5 = arith.constant 5 : index
    %c0_296 = arith.constant 0 : index
    %c0_297 = arith.constant 0 : index
    %506 = vector.load %arg5[%c0_295, %c5, %c0_296, %c0_297] : memref<1x8x16x16xf32, #tpu.memory_space<vmem>>, vector<1x1x16x16xf32>
    %507 = vector.shape_cast %506 : vector<1x1x16x16xf32> to vector<16x16xf32>
    %508 = vector.shape_cast %505 : vector<16x16xf32> to vector<1x1x16x16xf32>
    tpu.vector_store %arg5[%c0_295, %c5, %c0_296, %c0_297], %508 {strides = array<i32>} : memref<1x8x16x16xf32, #tpu.memory_space<vmem>>, vector<1x1x16x16xf32>,
    %c6_i32 = arith.constant 6 : i32
    %509 = arith.addi %1, %c6_i32 : i32
    %c0_i32_298 = arith.constant 0 : i32
    %510 = arith.addi %509, %c0_i32_298 : i32
    %c0_299 = arith.constant 0 : index
    %c0_300 = arith.constant 0 : index
    %511 = arith.index_cast %510 : i32 to index
    %c0_301 = arith.constant 0 : index
    %512 = vector.load %arg2[%c0_299, %c0_300, %511, %c0_301] : memref<1x3x18x18xf32, #tpu.memory_space<vmem>>, vector<1x1x1x18xf32>
    %513 = vector.shape_cast %512 : vector<1x1x1x18xf32> to vector<1x18xf32>
    %514 = vector.extract_strided_slice %513 {offsets = [0, 0], sizes = [1, 16], strides = [1, 1]} : vector<1x18xf32> to vector<1x16xf32>
    %515 = vector.extract_strided_slice %513 {offsets = [0, 1], sizes = [1, 16], strides = [1, 1]} : vector<1x18xf32> to vector<1x16xf32>
    %516 = vector.extract_strided_slice %513 {offsets = [0, 2], sizes = [1, 16], strides = [1, 1]} : vector<1x18xf32> to vector<1x16xf32>
    %c6_i32_302 = arith.constant 6 : i32
    %517 = arith.addi %1, %c6_i32_302 : i32
    %c1_i32_303 = arith.constant 1 : i32
    %518 = arith.addi %517, %c1_i32_303 : i32
    %c0_304 = arith.constant 0 : index
    %c0_305 = arith.constant 0 : index
    %519 = arith.index_cast %518 : i32 to index
    %c0_306 = arith.constant 0 : index
    %520 = vector.load %arg2[%c0_304, %c0_305, %519, %c0_306] : memref<1x3x18x18xf32, #tpu.memory_space<vmem>>, vector<1x1x1x18xf32>
    %521 = vector.shape_cast %520 : vector<1x1x1x18xf32> to vector<1x18xf32>
    %522 = vector.extract_strided_slice %521 {offsets = [0, 0], sizes = [1, 16], strides = [1, 1]} : vector<1x18xf32> to vector<1x16xf32>
    %523 = vector.extract_strided_slice %521 {offsets = [0, 1], sizes = [1, 16], strides = [1, 1]} : vector<1x18xf32> to vector<1x16xf32>
    %524 = vector.extract_strided_slice %521 {offsets = [0, 2], sizes = [1, 16], strides = [1, 1]} : vector<1x18xf32> to vector<1x16xf32>
    %c6_i32_307 = arith.constant 6 : i32
    %525 = arith.addi %1, %c6_i32_307 : i32
    %c2_i32_308 = arith.constant 2 : i32
    %526 = arith.addi %525, %c2_i32_308 : i32
    %c0_309 = arith.constant 0 : index
    %c0_310 = arith.constant 0 : index
    %527 = arith.index_cast %526 : i32 to index
    %c0_311 = arith.constant 0 : index
    %528 = vector.load %arg2[%c0_309, %c0_310, %527, %c0_311] : memref<1x3x18x18xf32, #tpu.memory_space<vmem>>, vector<1x1x1x18xf32>
    %529 = vector.shape_cast %528 : vector<1x1x1x18xf32> to vector<1x18xf32>
    %530 = vector.extract_strided_slice %529 {offsets = [0, 0], sizes = [1, 16], strides = [1, 1]} : vector<1x18xf32> to vector<1x16xf32>
    %531 = vector.extract_strided_slice %529 {offsets = [0, 1], sizes = [1, 16], strides = [1, 1]} : vector<1x18xf32> to vector<1x16xf32>
    %532 = vector.extract_strided_slice %529 {offsets = [0, 2], sizes = [1, 16], strides = [1, 1]} : vector<1x18xf32> to vector<1x16xf32>
    %c6_i32_312 = arith.constant 6 : i32
    %533 = arith.addi %1, %c6_i32_312 : i32
    %c0_i32_313 = arith.constant 0 : i32
    %534 = arith.addi %533, %c0_i32_313 : i32
    %c0_314 = arith.constant 0 : index
    %c1_315 = arith.constant 1 : index
    %535 = arith.index_cast %534 : i32 to index
    %c0_316 = arith.constant 0 : index
    %536 = vector.load %arg2[%c0_314, %c1_315, %535, %c0_316] : memref<1x3x18x18xf32, #tpu.memory_space<vmem>>, vector<1x1x1x18xf32>
    %537 = vector.shape_cast %536 : vector<1x1x1x18xf32> to vector<1x18xf32>
    %538 = vector.extract_strided_slice %537 {offsets = [0, 0], sizes = [1, 16], strides = [1, 1]} : vector<1x18xf32> to vector<1x16xf32>
    %539 = vector.extract_strided_slice %537 {offsets = [0, 1], sizes = [1, 16], strides = [1, 1]} : vector<1x18xf32> to vector<1x16xf32>
    %540 = vector.extract_strided_slice %537 {offsets = [0, 2], sizes = [1, 16], strides = [1, 1]} : vector<1x18xf32> to vector<1x16xf32>
    %c6_i32_317 = arith.constant 6 : i32
    %541 = arith.addi %1, %c6_i32_317 : i32
    %c1_i32_318 = arith.constant 1 : i32
    %542 = arith.addi %541, %c1_i32_318 : i32
    %c0_319 = arith.constant 0 : index
    %c1_320 = arith.constant 1 : index
    %543 = arith.index_cast %542 : i32 to index
    %c0_321 = arith.constant 0 : index
    %544 = vector.load %arg2[%c0_319, %c1_320, %543, %c0_321] : memref<1x3x18x18xf32, #tpu.memory_space<vmem>>, vector<1x1x1x18xf32>
    %545 = vector.shape_cast %544 : vector<1x1x1x18xf32> to vector<1x18xf32>
    %546 = vector.extract_strided_slice %545 {offsets = [0, 0], sizes = [1, 16], strides = [1, 1]} : vector<1x18xf32> to vector<1x16xf32>
    %547 = vector.extract_strided_slice %545 {offsets = [0, 1], sizes = [1, 16], strides = [1, 1]} : vector<1x18xf32> to vector<1x16xf32>
    %548 = vector.extract_strided_slice %545 {offsets = [0, 2], sizes = [1, 16], strides = [1, 1]} : vector<1x18xf32> to vector<1x16xf32>
    %c6_i32_322 = arith.constant 6 : i32
    %549 = arith.addi %1, %c6_i32_322 : i32
    %c2_i32_323 = arith.constant 2 : i32
    %550 = arith.addi %549, %c2_i32_323 : i32
    %c0_324 = arith.constant 0 : index
    %c1_325 = arith.constant 1 : index
    %551 = arith.index_cast %550 : i32 to index
    %c0_326 = arith.constant 0 : index
    %552 = vector.load %arg2[%c0_324, %c1_325, %551, %c0_326] : memref<1x3x18x18xf32, #tpu.memory_space<vmem>>, vector<1x1x1x18xf32>
    %553 = vector.shape_cast %552 : vector<1x1x1x18xf32> to vector<1x18xf32>
    %554 = vector.extract_strided_slice %553 {offsets = [0, 0], sizes = [1, 16], strides = [1, 1]} : vector<1x18xf32> to vector<1x16xf32>
    %555 = vector.extract_strided_slice %553 {offsets = [0, 1], sizes = [1, 16], strides = [1, 1]} : vector<1x18xf32> to vector<1x16xf32>
    %556 = vector.extract_strided_slice %553 {offsets = [0, 2], sizes = [1, 16], strides = [1, 1]} : vector<1x18xf32> to vector<1x16xf32>
    %c6_i32_327 = arith.constant 6 : i32
    %557 = arith.addi %1, %c6_i32_327 : i32
    %c0_i32_328 = arith.constant 0 : i32
    %558 = arith.addi %557, %c0_i32_328 : i32
    %c0_329 = arith.constant 0 : index
    %c2_330 = arith.constant 2 : index
    %559 = arith.index_cast %558 : i32 to index
    %c0_331 = arith.constant 0 : index
    %560 = vector.load %arg2[%c0_329, %c2_330, %559, %c0_331] : memref<1x3x18x18xf32, #tpu.memory_space<vmem>>, vector<1x1x1x18xf32>
    %561 = vector.shape_cast %560 : vector<1x1x1x18xf32> to vector<1x18xf32>
    %562 = vector.extract_strided_slice %561 {offsets = [0, 0], sizes = [1, 16], strides = [1, 1]} : vector<1x18xf32> to vector<1x16xf32>
    %563 = vector.extract_strided_slice %561 {offsets = [0, 1], sizes = [1, 16], strides = [1, 1]} : vector<1x18xf32> to vector<1x16xf32>
    %564 = vector.extract_strided_slice %561 {offsets = [0, 2], sizes = [1, 16], strides = [1, 1]} : vector<1x18xf32> to vector<1x16xf32>
    %c6_i32_332 = arith.constant 6 : i32
    %565 = arith.addi %1, %c6_i32_332 : i32
    %c1_i32_333 = arith.constant 1 : i32
    %566 = arith.addi %565, %c1_i32_333 : i32
    %c0_334 = arith.constant 0 : index
    %c2_335 = arith.constant 2 : index
    %567 = arith.index_cast %566 : i32 to index
    %c0_336 = arith.constant 0 : index
    %568 = vector.load %arg2[%c0_334, %c2_335, %567, %c0_336] : memref<1x3x18x18xf32, #tpu.memory_space<vmem>>, vector<1x1x1x18xf32>
    %569 = vector.shape_cast %568 : vector<1x1x1x18xf32> to vector<1x18xf32>
    %570 = vector.extract_strided_slice %569 {offsets = [0, 0], sizes = [1, 16], strides = [1, 1]} : vector<1x18xf32> to vector<1x16xf32>
    %571 = vector.extract_strided_slice %569 {offsets = [0, 1], sizes = [1, 16], strides = [1, 1]} : vector<1x18xf32> to vector<1x16xf32>
    %572 = vector.extract_strided_slice %569 {offsets = [0, 2], sizes = [1, 16], strides = [1, 1]} : vector<1x18xf32> to vector<1x16xf32>
    %c6_i32_337 = arith.constant 6 : i32
    %573 = arith.addi %1, %c6_i32_337 : i32
    %c2_i32_338 = arith.constant 2 : i32
    %574 = arith.addi %573, %c2_i32_338 : i32
    %c0_339 = arith.constant 0 : index
    %c2_340 = arith.constant 2 : index
    %575 = arith.index_cast %574 : i32 to index
    %c0_341 = arith.constant 0 : index
    %576 = vector.load %arg2[%c0_339, %c2_340, %575, %c0_341] : memref<1x3x18x18xf32, #tpu.memory_space<vmem>>, vector<1x1x1x18xf32>
    %577 = vector.shape_cast %576 : vector<1x1x1x18xf32> to vector<1x18xf32>
    %578 = vector.extract_strided_slice %577 {offsets = [0, 0], sizes = [1, 16], strides = [1, 1]} : vector<1x18xf32> to vector<1x16xf32>
    %579 = vector.extract_strided_slice %577 {offsets = [0, 1], sizes = [1, 16], strides = [1, 1]} : vector<1x18xf32> to vector<1x16xf32>
    %580 = vector.extract_strided_slice %577 {offsets = [0, 2], sizes = [1, 16], strides = [1, 1]} : vector<1x18xf32> to vector<1x16xf32>
    %581 = tpu.concatenate %514, %515, %516, %522, %523, %524, %530, %531, %532, %538, %539, %540, %546, %547, %548, %554 in 0 : vector<1x16xf32>, vector<1x16xf32>, vector<1x16xf32>, vector<1x16xf32>, vector<1x16xf32>, vector<1x16xf32>, vector<1x16xf32>, vector<1x16xf32>, vector<1x16xf32>, vector<1x16xf32>, vector<1x16xf32>, vector<1x16xf32>, vector<1x16xf32>, vector<1x16xf32>, vector<1x16xf32>, vector<1x16xf32> -> vector<16x16xf32>
    %582 = tpu.concatenate %555, %556, %562, %563, %564, %570, %571, %572, %578, %579, %580, %4 in 0 : vector<1x16xf32>, vector<1x16xf32>, vector<1x16xf32>, vector<1x16xf32>, vector<1x16xf32>, vector<1x16xf32>, vector<1x16xf32>, vector<1x16xf32>, vector<1x16xf32>, vector<1x16xf32>, vector<1x16xf32>, vector<5x16xf32> -> vector<16x16xf32>
    %583 = tpu.concatenate %581, %582 in 0 : vector<16x16xf32>, vector<16x16xf32> -> vector<32x16xf32>
    %584 = arith.truncf %583 : vector<32x16xf32> to vector<32x16xbf16>
    %cst_342 = arith.constant dense<0.000000e+00> : vector<16x16xf32>
    %585 = tpu.matmul %2, %584, %cst_342 {dimension_numbers = #tpu.dot_dimension_numbers<[1], [0], [0], [1], [0, 0, 1, 1], [], []>} : vector<16x32xbf16>, vector<32x16xbf16>, vector<16x16xf32> -> vector<16x16xf32>
    %586 = vector.broadcast %3 : vector<16x1xf32> to vector<16x16xf32>
    %587 = arith.addf %585, %586 : vector<16x16xf32>
    %cst_343 = arith.constant 0.000000e+00 : f32
    %588 = vector.broadcast %cst_343 : f32 to vector<16x16xf32>
    %589 = arith.maximumf %587, %588 : vector<16x16xf32>
    %c0_344 = arith.constant 0 : index
    %c6 = arith.constant 6 : index
    %c0_345 = arith.constant 0 : index
    %c0_346 = arith.constant 0 : index
    %590 = vector.load %arg5[%c0_344, %c6, %c0_345, %c0_346] : memref<1x8x16x16xf32, #tpu.memory_space<vmem>>, vector<1x1x16x16xf32>
    %591 = vector.shape_cast %590 : vector<1x1x16x16xf32> to vector<16x16xf32>
    %592 = vector.shape_cast %589 : vector<16x16xf32> to vector<1x1x16x16xf32>
    tpu.vector_store %arg5[%c0_344, %c6, %c0_345, %c0_346], %592 {strides = array<i32>} : memref<1x8x16x16xf32, #tpu.memory_space<vmem>>, vector<1x1x16x16xf32>,
    %c7_i32 = arith.constant 7 : i32
    %593 = arith.addi %1, %c7_i32 : i32
    %c0_i32_347 = arith.constant 0 : i32
    %594 = arith.addi %593, %c0_i32_347 : i32
    %c0_348 = arith.constant 0 : index
    %c0_349 = arith.constant 0 : index
    %595 = arith.index_cast %594 : i32 to index
    %c0_350 = arith.constant 0 : index
    %596 = vector.load %arg2[%c0_348, %c0_349, %595, %c0_350] : memref<1x3x18x18xf32, #tpu.memory_space<vmem>>, vector<1x1x1x18xf32>
    %597 = vector.shape_cast %596 : vector<1x1x1x18xf32> to vector<1x18xf32>
    %598 = vector.extract_strided_slice %597 {offsets = [0, 0], sizes = [1, 16], strides = [1, 1]} : vector<1x18xf32> to vector<1x16xf32>
    %599 = vector.extract_strided_slice %597 {offsets = [0, 1], sizes = [1, 16], strides = [1, 1]} : vector<1x18xf32> to vector<1x16xf32>
    %600 = vector.extract_strided_slice %597 {offsets = [0, 2], sizes = [1, 16], strides = [1, 1]} : vector<1x18xf32> to vector<1x16xf32>
    %c7_i32_351 = arith.constant 7 : i32
    %601 = arith.addi %1, %c7_i32_351 : i32
    %c1_i32_352 = arith.constant 1 : i32
    %602 = arith.addi %601, %c1_i32_352 : i32
    %c0_353 = arith.constant 0 : index
    %c0_354 = arith.constant 0 : index
    %603 = arith.index_cast %602 : i32 to index
    %c0_355 = arith.constant 0 : index
    %604 = vector.load %arg2[%c0_353, %c0_354, %603, %c0_355] : memref<1x3x18x18xf32, #tpu.memory_space<vmem>>, vector<1x1x1x18xf32>
    %605 = vector.shape_cast %604 : vector<1x1x1x18xf32> to vector<1x18xf32>
    %606 = vector.extract_strided_slice %605 {offsets = [0, 0], sizes = [1, 16], strides = [1, 1]} : vector<1x18xf32> to vector<1x16xf32>
    %607 = vector.extract_strided_slice %605 {offsets = [0, 1], sizes = [1, 16], strides = [1, 1]} : vector<1x18xf32> to vector<1x16xf32>
    %608 = vector.extract_strided_slice %605 {offsets = [0, 2], sizes = [1, 16], strides = [1, 1]} : vector<1x18xf32> to vector<1x16xf32>
    %c7_i32_356 = arith.constant 7 : i32
    %609 = arith.addi %1, %c7_i32_356 : i32
    %c2_i32_357 = arith.constant 2 : i32
    %610 = arith.addi %609, %c2_i32_357 : i32
    %c0_358 = arith.constant 0 : index
    %c0_359 = arith.constant 0 : index
    %611 = arith.index_cast %610 : i32 to index
    %c0_360 = arith.constant 0 : index
    %612 = vector.load %arg2[%c0_358, %c0_359, %611, %c0_360] : memref<1x3x18x18xf32, #tpu.memory_space<vmem>>, vector<1x1x1x18xf32>
    %613 = vector.shape_cast %612 : vector<1x1x1x18xf32> to vector<1x18xf32>
    %614 = vector.extract_strided_slice %613 {offsets = [0, 0], sizes = [1, 16], strides = [1, 1]} : vector<1x18xf32> to vector<1x16xf32>
    %615 = vector.extract_strided_slice %613 {offsets = [0, 1], sizes = [1, 16], strides = [1, 1]} : vector<1x18xf32> to vector<1x16xf32>
    %616 = vector.extract_strided_slice %613 {offsets = [0, 2], sizes = [1, 16], strides = [1, 1]} : vector<1x18xf32> to vector<1x16xf32>
    %c7_i32_361 = arith.constant 7 : i32
    %617 = arith.addi %1, %c7_i32_361 : i32
    %c0_i32_362 = arith.constant 0 : i32
    %618 = arith.addi %617, %c0_i32_362 : i32
    %c0_363 = arith.constant 0 : index
    %c1_364 = arith.constant 1 : index
    %619 = arith.index_cast %618 : i32 to index
    %c0_365 = arith.constant 0 : index
    %620 = vector.load %arg2[%c0_363, %c1_364, %619, %c0_365] : memref<1x3x18x18xf32, #tpu.memory_space<vmem>>, vector<1x1x1x18xf32>
    %621 = vector.shape_cast %620 : vector<1x1x1x18xf32> to vector<1x18xf32>
    %622 = vector.extract_strided_slice %621 {offsets = [0, 0], sizes = [1, 16], strides = [1, 1]} : vector<1x18xf32> to vector<1x16xf32>
    %623 = vector.extract_strided_slice %621 {offsets = [0, 1], sizes = [1, 16], strides = [1, 1]} : vector<1x18xf32> to vector<1x16xf32>
    %624 = vector.extract_strided_slice %621 {offsets = [0, 2], sizes = [1, 16], strides = [1, 1]} : vector<1x18xf32> to vector<1x16xf32>
    %c7_i32_366 = arith.constant 7 : i32
    %625 = arith.addi %1, %c7_i32_366 : i32
    %c1_i32_367 = arith.constant 1 : i32
    %626 = arith.addi %625, %c1_i32_367 : i32
    %c0_368 = arith.constant 0 : index
    %c1_369 = arith.constant 1 : index
    %627 = arith.index_cast %626 : i32 to index
    %c0_370 = arith.constant 0 : index
    %628 = vector.load %arg2[%c0_368, %c1_369, %627, %c0_370] : memref<1x3x18x18xf32, #tpu.memory_space<vmem>>, vector<1x1x1x18xf32>
    %629 = vector.shape_cast %628 : vector<1x1x1x18xf32> to vector<1x18xf32>
    %630 = vector.extract_strided_slice %629 {offsets = [0, 0], sizes = [1, 16], strides = [1, 1]} : vector<1x18xf32> to vector<1x16xf32>
    %631 = vector.extract_strided_slice %629 {offsets = [0, 1], sizes = [1, 16], strides = [1, 1]} : vector<1x18xf32> to vector<1x16xf32>
    %632 = vector.extract_strided_slice %629 {offsets = [0, 2], sizes = [1, 16], strides = [1, 1]} : vector<1x18xf32> to vector<1x16xf32>
    %c7_i32_371 = arith.constant 7 : i32
    %633 = arith.addi %1, %c7_i32_371 : i32
    %c2_i32_372 = arith.constant 2 : i32
    %634 = arith.addi %633, %c2_i32_372 : i32
    %c0_373 = arith.constant 0 : index
    %c1_374 = arith.constant 1 : index
    %635 = arith.index_cast %634 : i32 to index
    %c0_375 = arith.constant 0 : index
    %636 = vector.load %arg2[%c0_373, %c1_374, %635, %c0_375] : memref<1x3x18x18xf32, #tpu.memory_space<vmem>>, vector<1x1x1x18xf32>
    %637 = vector.shape_cast %636 : vector<1x1x1x18xf32> to vector<1x18xf32>
    %638 = vector.extract_strided_slice %637 {offsets = [0, 0], sizes = [1, 16], strides = [1, 1]} : vector<1x18xf32> to vector<1x16xf32>
    %639 = vector.extract_strided_slice %637 {offsets = [0, 1], sizes = [1, 16], strides = [1, 1]} : vector<1x18xf32> to vector<1x16xf32>
    %640 = vector.extract_strided_slice %637 {offsets = [0, 2], sizes = [1, 16], strides = [1, 1]} : vector<1x18xf32> to vector<1x16xf32>
    %c7_i32_376 = arith.constant 7 : i32
    %641 = arith.addi %1, %c7_i32_376 : i32
    %c0_i32_377 = arith.constant 0 : i32
    %642 = arith.addi %641, %c0_i32_377 : i32
    %c0_378 = arith.constant 0 : index
    %c2_379 = arith.constant 2 : index
    %643 = arith.index_cast %642 : i32 to index
    %c0_380 = arith.constant 0 : index
    %644 = vector.load %arg2[%c0_378, %c2_379, %643, %c0_380] : memref<1x3x18x18xf32, #tpu.memory_space<vmem>>, vector<1x1x1x18xf32>
    %645 = vector.shape_cast %644 : vector<1x1x1x18xf32> to vector<1x18xf32>
    %646 = vector.extract_strided_slice %645 {offsets = [0, 0], sizes = [1, 16], strides = [1, 1]} : vector<1x18xf32> to vector<1x16xf32>
    %647 = vector.extract_strided_slice %645 {offsets = [0, 1], sizes = [1, 16], strides = [1, 1]} : vector<1x18xf32> to vector<1x16xf32>
    %648 = vector.extract_strided_slice %645 {offsets = [0, 2], sizes = [1, 16], strides = [1, 1]} : vector<1x18xf32> to vector<1x16xf32>
    %c7_i32_381 = arith.constant 7 : i32
    %649 = arith.addi %1, %c7_i32_381 : i32
    %c1_i32_382 = arith.constant 1 : i32
    %650 = arith.addi %649, %c1_i32_382 : i32
    %c0_383 = arith.constant 0 : index
    %c2_384 = arith.constant 2 : index
    %651 = arith.index_cast %650 : i32 to index
    %c0_385 = arith.constant 0 : index
    %652 = vector.load %arg2[%c0_383, %c2_384, %651, %c0_385] : memref<1x3x18x18xf32, #tpu.memory_space<vmem>>, vector<1x1x1x18xf32>
    %653 = vector.shape_cast %652 : vector<1x1x1x18xf32> to vector<1x18xf32>
    %654 = vector.extract_strided_slice %653 {offsets = [0, 0], sizes = [1, 16], strides = [1, 1]} : vector<1x18xf32> to vector<1x16xf32>
    %655 = vector.extract_strided_slice %653 {offsets = [0, 1], sizes = [1, 16], strides = [1, 1]} : vector<1x18xf32> to vector<1x16xf32>
    %656 = vector.extract_strided_slice %653 {offsets = [0, 2], sizes = [1, 16], strides = [1, 1]} : vector<1x18xf32> to vector<1x16xf32>
    %c7_i32_386 = arith.constant 7 : i32
    %657 = arith.addi %1, %c7_i32_386 : i32
    %c2_i32_387 = arith.constant 2 : i32
    %658 = arith.addi %657, %c2_i32_387 : i32
    %c0_388 = arith.constant 0 : index
    %c2_389 = arith.constant 2 : index
    %659 = arith.index_cast %658 : i32 to index
    %c0_390 = arith.constant 0 : index
    %660 = vector.load %arg2[%c0_388, %c2_389, %659, %c0_390] : memref<1x3x18x18xf32, #tpu.memory_space<vmem>>, vector<1x1x1x18xf32>
    %661 = vector.shape_cast %660 : vector<1x1x1x18xf32> to vector<1x18xf32>
    %662 = vector.extract_strided_slice %661 {offsets = [0, 0], sizes = [1, 16], strides = [1, 1]} : vector<1x18xf32> to vector<1x16xf32>
    %663 = vector.extract_strided_slice %661 {offsets = [0, 1], sizes = [1, 16], strides = [1, 1]} : vector<1x18xf32> to vector<1x16xf32>
    %664 = vector.extract_strided_slice %661 {offsets = [0, 2], sizes = [1, 16], strides = [1, 1]} : vector<1x18xf32> to vector<1x16xf32>
    %665 = tpu.concatenate %598, %599, %600, %606, %607, %608, %614, %615, %616, %622, %623, %624, %630, %631, %632, %638 in 0 : vector<1x16xf32>, vector<1x16xf32>, vector<1x16xf32>, vector<1x16xf32>, vector<1x16xf32>, vector<1x16xf32>, vector<1x16xf32>, vector<1x16xf32>, vector<1x16xf32>, vector<1x16xf32>, vector<1x16xf32>, vector<1x16xf32>, vector<1x16xf32>, vector<1x16xf32>, vector<1x16xf32>, vector<1x16xf32> -> vector<16x16xf32>
    %666 = tpu.concatenate %639, %640, %646, %647, %648, %654, %655, %656, %662, %663, %664, %4 in 0 : vector<1x16xf32>, vector<1x16xf32>, vector<1x16xf32>, vector<1x16xf32>, vector<1x16xf32>, vector<1x16xf32>, vector<1x16xf32>, vector<1x16xf32>, vector<1x16xf32>, vector<1x16xf32>, vector<1x16xf32>, vector<5x16xf32> -> vector<16x16xf32>
    %667 = tpu.concatenate %665, %666 in 0 : vector<16x16xf32>, vector<16x16xf32> -> vector<32x16xf32>
    %668 = arith.truncf %667 : vector<32x16xf32> to vector<32x16xbf16>
    %cst_391 = arith.constant dense<0.000000e+00> : vector<16x16xf32>
    %669 = tpu.matmul %2, %668, %cst_391 {dimension_numbers = #tpu.dot_dimension_numbers<[1], [0], [0], [1], [0, 0, 1, 1], [], []>} : vector<16x32xbf16>, vector<32x16xbf16>, vector<16x16xf32> -> vector<16x16xf32>
    %670 = vector.broadcast %3 : vector<16x1xf32> to vector<16x16xf32>
    %671 = arith.addf %669, %670 : vector<16x16xf32>
    %cst_392 = arith.constant 0.000000e+00 : f32
    %672 = vector.broadcast %cst_392 : f32 to vector<16x16xf32>
    %673 = arith.maximumf %671, %672 : vector<16x16xf32>
    %c0_393 = arith.constant 0 : index
    %c7 = arith.constant 7 : index
    %c0_394 = arith.constant 0 : index
    %c0_395 = arith.constant 0 : index
    %674 = vector.load %arg5[%c0_393, %c7, %c0_394, %c0_395] : memref<1x8x16x16xf32, #tpu.memory_space<vmem>>, vector<1x1x16x16xf32>
    %675 = vector.shape_cast %674 : vector<1x1x16x16xf32> to vector<16x16xf32>
    %676 = vector.shape_cast %673 : vector<16x16xf32> to vector<1x1x16x16xf32>
    tpu.vector_store %arg5[%c0_393, %c7, %c0_394, %c0_395], %676 {strides = array<i32>} : memref<1x8x16x16xf32, #tpu.memory_space<vmem>>, vector<1x1x16x16xf32>,
    return
  }
  func.func @transform_0(%arg0: i32, %arg1: i32) -> (i32, i32, i32, i32) {
    %c0_i32 = arith.constant 0 : i32
    %c0_i32_0 = arith.constant 0 : i32
    %c0_i32_1 = arith.constant 0 : i32
    %c0_i32_2 = arith.constant 0 : i32
    return %arg0, %c0_i32, %c0_i32_0, %c0_i32_1 : i32, i32, i32, i32
  }
  func.func @transform_1(%arg0: i32, %arg1: i32) -> (i32, i32) {
    %c0_i32 = arith.constant 0 : i32
    %c0_i32_0 = arith.constant 0 : i32
    %c0_i32_1 = arith.constant 0 : i32
    return %c0_i32, %c0_i32_0 : i32, i32
  }
  func.func @transform_2(%arg0: i32, %arg1: i32) -> (i32, i32) {
    %c0_i32 = arith.constant 0 : i32
    %c0_i32_0 = arith.constant 0 : i32
    %c0_i32_1 = arith.constant 0 : i32
    return %c0_i32, %c0_i32_0 : i32, i32
  }
  func.func @transform_3(%arg0: i32, %arg1: i32) -> (i32, i32, i32, i32) {
    %c0_i32 = arith.constant 0 : i32
    %c0_i32_0 = arith.constant 0 : i32
    %c0_i32_1 = arith.constant 0 : i32
    return %arg0, %arg1, %c0_i32, %c0_i32_0 : i32, i32, i32, i32
  }
}

</mosaic_0001>

<llo_original>
// kernel: mul.13
$region0: #{mul.13}
  %s0 = inlined_call_operand.vmem [shape: f32[3,9], index: 0, kind: input, shape index: {}]
  %s1 = inlined_call_operand.vmem [shape: f32[27], index: 1, kind: output, shape index: {}]
  $region1: #{mul.13} parent=0
    #allocation0 [shape = 'u8[4096]{0}', space=vmem, size = 0x1000, scoped, tag = 'scoped mem for output reshape']
    #allocation1 [shape = 'u8[4096]{0}', space=vmem, size = 0x1000, scoped, tag = 'scoped mem for input reshape']
    %s3 = ssub.s32 16, 1
    %v4 = vld [vmem:[%s0] sm:%s3]
    %5 = vst [vmem:[#allocation1] sm:%s3] %v4
    %v6 = vld [vmem:[#allocation1] sm:$0x1]
    %vm7 = vcmask 72704
    %8 = vst.msk [vmem:[#allocation0] sm:$0x1] %vm7, %v6
    %s9 = scalar_lea.vmem [#allocation1], 2
    %v10 = vld [vmem:[%s9] sm:$0x1]
    %11 = vrot.lane.b32.xlu0 %v10, 18
    %v12 = vpop.permute.xlu0 %11
    %vm13 = vcmask 220304
    %14 = vst.msk [vmem:[#allocation0] sm:$0x1] %vm13, %v12
    %s15 = scalar_lea.vmem [#allocation1], 1
    %v16 = vld [vmem:[%s15] sm:$0x1]
    %17 = vrot.lane.b32.xlu0 %v16, 9
    %v18 = vpop.permute.xlu0 %17
    %vm19 = vcmask 146504
    %20 = vst.msk [vmem:[#allocation0] sm:$0x1] %vm19, %v18
    %s22 = ssub.s32 2, 1
    %v23 = vld [vmem:[#allocation0] sm:%s22]
    %s25 = ssub.s32 2, 1
    %26 = vst [vmem:[%s1] sm:%s25] %v23

// kernel: panovit_forward.3
$region0: #{panovit_forward.3}
  #allocation0 [shape = 'u32[]', space=smem, size = 0x4, offset = 0x4, fixed_abs, tag = 'smem constant byte address 0x4 - core index']
  #allocation1 [shape = 'u32[72,128]{1,0:T(1,128)}', space=vmem, size = 0x9000, scoped, tag = 'internal scratch']
  %s0 = inlined_call_operand.vmem [shape: f32[2,16,64], index: 0, kind: input, shape index: {}]
  %s1 = inlined_call_operand.vmem [shape: bf16[64,32], index: 1, kind: input, shape index: {}]
  %s2 = inlined_call_operand.vmem [shape: f32[1,32], index: 2, kind: input, shape index: {}]
  %s3 = inlined_call_operand.vmem [shape: f32[16,32], index: 3, kind: input, shape index: {}]
  %s4 = inlined_call_operand.vmem [shape: f32[1,32], index: 4, kind: input, shape index: {}]
  %s5 = inlined_call_operand.vmem [shape: f32[1,32], index: 5, kind: input, shape index: {}]
  %s6 = inlined_call_operand.vmem [shape: bf16[32,96], index: 6, kind: input, shape index: {}]
  %s7 = inlined_call_operand.vmem [shape: f32[1,96], index: 7, kind: input, shape index: {}]
  %s8 = inlined_call_operand.vmem [shape: bf16[32,32], index: 8, kind: input, shape index: {}]
  %s9 = inlined_call_operand.vmem [shape: f32[1,32], index: 9, kind: input, shape index: {}]
  %s10 = inlined_call_operand.vmem [shape: f32[1,32], index: 10, kind: input, shape index: {}]
  %s11 = inlined_call_operand.vmem [shape: f32[1,32], index: 11, kind: input, shape index: {}]
  %s12 = inlined_call_operand.vmem [shape: bf16[32,64], index: 12, kind: input, shape index: {}]
  %s13 = inlined_call_operand.vmem [shape: f32[1,64], index: 13, kind: input, shape index: {}]
  %s14 = inlined_call_operand.vmem [shape: bf16[64,32], index: 14, kind: input, shape index: {}]
  %s15 = inlined_call_operand.vmem [shape: f32[1,32], index: 15, kind: input, shape index: {}]
  %s16 = inlined_call_operand.vmem [shape: f32[1,32], index: 16, kind: input, shape index: {}]
  %s17 = inlined_call_operand.vmem [shape: f32[1,32], index: 17, kind: input, shape index: {}]
  %s18 = inlined_call_operand.vmem [shape: bf16[3,32], index: 18, kind: input, shape index: {}]
  %s19 = inlined_call_operand.vmem [shape: f32[3,1], index: 19, kind: input, shape index: {}]
  %s20 = inlined_call_operand.vmem [shape: f32[2,3,16], index: 20, kind: output, shape index: {}]
  %s21 = sld [smem:[#allocation0]]
  $region113: #{panovit_forward.3} parent=0
    _
  %s23 = ssub.s32 1, %s21
  %s24 = scalar_select 0, %s23, %s21
  loop: start=0, step=1, limit=4
  $region2: #{panovit_forward.3} parent=0 // loop_pre_header
    _
  $region3: #{panovit_forward.3} parent=0 // loop_header
    %s26 = sphi 0, %s30
    %p27 = scmp.ge.s32.totalorder %s26, 4
    %s36 = sphi 0, %s38
    %s39 = sphi 0, %s36
    %s40 = sphi 0, %s39
    %s56 = sphi 0, %s40
    %s60 = sphi 0, %s60
    %s62 = sphi 0, %s60
    %s63 = sphi 0, %s62
    %s77 = sphi 0, %s63
    %s81 = sphi 0, %s81
    %s83 = sphi 0, %s81
    %s84 = sphi 0, %s83
    %s98 = sphi 0, %s84
    %s102 = sphi 0, %s102
    %s104 = sphi 0, %s102
    %s105 = sphi 0, %s104
    %s119 = sphi 0, %s105
    %s123 = sphi 0, %s123
    %s125 = sphi 0, %s123
    %s126 = sphi 0, %s125
    %s140 = sphi 0, %s126
    %s144 = sphi 0, %s144
    %s146 = sphi 0, %s144
    %s147 = sphi 0, %s146
    %s161 = sphi 0, %s147
    %s165 = sphi 0, %s165
    %s167 = sphi 0, %s165
    %s168 = sphi 0, %s167
    %s182 = sphi 0, %s168
    %s186 = sphi 0, %s186
    %s188 = sphi 0, %s186
    %s189 = sphi 0, %s188
    %s203 = sphi 0, %s189
    %s207 = sphi 0, %s207
    %s209 = sphi 0, %s207
    %s210 = sphi 0, %s209
    %s224 = sphi 0, %s210
    %s228 = sphi 0, %s228
    %s230 = sphi 0, %s228
    %s231 = sphi 0, %s230
    %s245 = sphi 0, %s231
    %s249 = sphi 0, %s249
    %s251 = sphi 0, %s249
    %s252 = sphi 0, %s251
    %s266 = sphi 0, %s252
    %s270 = sphi 0, %s270
    %s272 = sphi 0, %s270
    %s273 = sphi 0, %s272
    %s287 = sphi 0, %s273
    %s291 = sphi 0, %s291
    %s293 = sphi 0, %s291
    %s294 = sphi 0, %s293
    %s308 = sphi 0, %s294
    %s312 = sphi 0, %s312
    %s314 = sphi 0, %s312
    %s315 = sphi 0, %s314
    %s329 = sphi 0, %s315
    %s333 = sphi 0, %s333
    %s335 = sphi 0, %s333
    %s336 = sphi 0, %s335
    %s350 = sphi 0, %s336
    %s354 = sphi 0, %s354
    %s356 = sphi 0, %s354
    %s357 = sphi 0, %s356
    %s371 = sphi 0, %s357
    %s375 = sphi 0, %s375
    %s377 = sphi 0, %s375
    %s378 = sphi 0, %s377
    %s392 = sphi 0, %s378
    %s396 = sphi 0, %s396
    %s398 = sphi 0, %s396
    %s399 = sphi 0, %s398
    %s413 = sphi 0, %s399
    %s417 = sphi 0, %s417
    %s419 = sphi 0, %s417
    %s420 = sphi 0, %s419
    %s434 = sphi 0, %s420
    %s438 = sphi 0, %s438
    %s440 = sphi 0, %s438
    %s441 = sphi 0, %s440
    %s455 = sphi 0, %s441
    %s461 = sphi 0, %s463
    %s464 = sphi 0, %s461
    %s465 = sphi 0, %s464
    %s481 = sphi 0, %s465
  $region4: #{panovit_forward.3} parent=0 // loop_header_branch
    %29 = sbr.rel (%p27) target = $region8
  $region5: #{panovit_forward.3} parent=0 // loop_body
    %s31 = ssub.s32 %s26, 1
    %s32 = ssub.s32 %s26, 2
    %s33 = sadd.s32 %s26, 1
    %s34 = ssub.s32 %s26, %s33
    %p35 = scmp.eq.s32.totalorder %s34, 0
    %s37 = sadd.s32 %s36, 1
    %s38 = scalar_select %p35, %s36, %s37
    %p41 = pneg %p35
    %p42 = scmp.eq.s32.totalorder %s26, 1
    %p43 = por %p41, %p42
    %p44 = scmp.ne.s32.totalorder %s36, %s39
    %p45 = scmp.eq.s32.totalorder %s26, 0
    %p46 = por %p44, %p45
    %p47 = scmp.ne.s32.totalorder %s36, %s39
    %p48 = scmp.eq.s32.totalorder %s31, 1
    %p49 = por %p47, %p48
    %p50 = scmp.ne.s32.totalorder %s39, %s40
    %p51 = scmp.eq.s32.totalorder %s31, 0
    %p52 = por %p50, %p51
    %p53 = scmp.ne.s32.totalorder %s39, %s40
    %p54 = scmp.eq.s32.totalorder %s32, 1
    %p55 = por %p53, %p54
    %p57 = scmp.ne.s32.totalorder %s40, %s56
    %p58 = scmp.eq.s32.totalorder %s32, 0
    %p59 = por %p57, %p58
    %s61 = sadd.s32 %s60, 1
    %p64 = scmp.eq.s32.totalorder %s26, 1
    %p65 = scmp.ne.s32.totalorder %s60, %s62
    %p66 = scmp.eq.s32.totalorder %s26, 0
    %p67 = por %p65, %p66
    %p68 = scmp.ne.s32.totalorder %s60, %s62
    %p69 = scmp.eq.s32.totalorder %s31, 1
    %p70 = por %p68, %p69
    %p71 = scmp.ne.s32.totalorder %s62, %s63
    %p72 = scmp.eq.s32.totalorder %s31, 0
    %p73 = por %p71, %p72
    %p74 = scmp.ne.s32.totalorder %s62, %s63
    %p75 = scmp.eq.s32.totalorder %s32, 1
    %p76 = por %p74, %p75
    %p78 = scmp.ne.s32.totalorder %s63, %s77
    %p79 = scmp.eq.s32.totalorder %s32, 0
    %p80 = por %p78, %p79
    %s82 = sadd.s32 %s81, 1
    %p85 = scmp.eq.s32.totalorder %s26, 1
    %p86 = scmp.ne.s32.totalorder %s81, %s83
    %p87 = scmp.eq.s32.totalorder %s26, 0
    %p88 = por %p86, %p87
    %p89 = scmp.ne.s32.totalorder %s81, %s83
    %p90 = scmp.eq.s32.totalorder %s31, 1
    %p91 = por %p89, %p90
    %p92 = scmp.ne.s32.totalorder %s83, %s84
    %p93 = scmp.eq.s32.totalorder %s31, 0
    %p94 = por %p92, %p93
    %p95 = scmp.ne.s32.totalorder %s83, %s84
    %p96 = scmp.eq.s32.totalorder %s32, 1
    %p97 = por %p95, %p96
    %p99 = scmp.ne.s32.totalorder %s84, %s98
    %p100 = scmp.eq.s32.totalorder %s32, 0
    %p101 = por %p99, %p100
    %s103 = sadd.s32 %s102, 1
    %p106 = scmp.eq.s32.totalorder %s26, 1
    %p107 = scmp.ne.s32.totalorder %s102, %s104
    %p108 = scmp.eq.s32.totalorder %s26, 0
    %p109 = por %p107, %p108
    %p110 = scmp.ne.s32.totalorder %s102, %s104
    %p111 = scmp.eq.s32.totalorder %s31, 1
    %p112 = por %p110, %p111
    %p113 = scmp.ne.s32.totalorder %s104, %s105
    %p114 = scmp.eq.s32.totalorder %s31, 0
    %p115 = por %p113, %p114
    %p116 = scmp.ne.s32.totalorder %s104, %s105
    %p117 = scmp.eq.s32.totalorder %s32, 1
    %p118 = por %p116, %p117
    %p120 = scmp.ne.s32.totalorder %s105, %s119
    %p121 = scmp.eq.s32.totalorder %s32, 0
    %p122 = por %p120, %p121
    %s124 = sadd.s32 %s123, 1
    %p127 = scmp.eq.s32.totalorder %s26, 1
    %p128 = scmp.ne.s32.totalorder %s123, %s125
    %p129 = scmp.eq.s32.totalorder %s26, 0
    %p130 = por %p128, %p129
    %p131 = scmp.ne.s32.totalorder %s123, %s125
    %p132 = scmp.eq.s32.totalorder %s31, 1
    %p133 = por %p131, %p132
    %p134 = scmp.ne.s32.totalorder %s125, %s126
    %p135 = scmp.eq.s32.totalorder %s31, 0
    %p136 = por %p134, %p135
    %p137 = scmp.ne.s32.totalorder %s125, %s126
    %p138 = scmp.eq.s32.totalorder %s32, 1
    %p139 = por %p137, %p138
    %p141 = scmp.ne.s32.totalorder %s126, %s140
    %p142 = scmp.eq.s32.totalorder %s32, 0
    %p143 = por %p141, %p142
    %s145 = sadd.s32 %s144, 1
    %p148 = scmp.eq.s32.totalorder %s26, 1
    %p149 = scmp.ne.s32.totalorder %s144, %s146
    %p150 = scmp.eq.s32.totalorder %s26, 0
    %p151 = por %p149, %p150
    %p152 = scmp.ne.s32.totalorder %s144, %s146
    %p153 = scmp.eq.s32.totalorder %s31, 1
    %p154 = por %p152, %p153
    %p155 = scmp.ne.s32.totalorder %s146, %s147
    %p156 = scmp.eq.s32.totalorder %s31, 0
    %p157 = por %p155, %p156
    %p158 = scmp.ne.s32.totalorder %s146, %s147
    %p159 = scmp.eq.s32.totalorder %s32, 1
    %p160 = por %p158, %p159
    %p162 = scmp.ne.s32.totalorder %s147, %s161
    %p163 = scmp.eq.s32.totalorder %s32, 0
    %p164 = por %p162, %p163
    %s166 = sadd.s32 %s165, 1
    %p169 = scmp.eq.s32.totalorder %s26, 1
    %p170 = scmp.ne.s32.totalorder %s165, %s167
    %p171 = scmp.eq.s32.totalorder %s26, 0
    %p172 = por %p170, %p171
    %p173 = scmp.ne.s32.totalorder %s165, %s167
    %p174 = scmp.eq.s32.totalorder %s31, 1
    %p175 = por %p173, %p174
    %p176 = scmp.ne.s32.totalorder %s167, %s168
    %p177 = scmp.eq.s32.totalorder %s31, 0
    %p178 = por %p176, %p177
    %p179 = scmp.ne.s32.totalorder %s167, %s168
    %p180 = scmp.eq.s32.totalorder %s32, 1
    %p181 = por %p179, %p180
    %p183 = scmp.ne.s32.totalorder %s168, %s182
    %p184 = scmp.eq.s32.totalorder %s32, 0
    %p185 = por %p183, %p184
    %s187 = sadd.s32 %s186, 1
    %p190 = scmp.eq.s32.totalorder %s26, 1
    %p191 = scmp.ne.s32.totalorder %s186, %s188
    %p192 = scmp.eq.s32.totalorder %s26, 0
    %p193 = por %p191, %p192
    %p194 = scmp.ne.s32.totalorder %s186, %s188
    %p195 = scmp.eq.s32.totalorder %s31, 1
    %p196 = por %p194, %p195
    %p197 = scmp.ne.s32.totalorder %s188, %s189
    %p198 = scmp.eq.s32.totalorder %s31, 0
    %p199 = por %p197, %p198
    %p200 = scmp.ne.s32.totalorder %s188, %s189
    %p201 = scmp.eq.s32.totalorder %s32, 1
    %p202 = por %p200, %p201
    %p204 = scmp.ne.s32.totalorder %s189, %s203
    %p205 = scmp.eq.s32.totalorder %s32, 0
    %p206 = por %p204, %p205
    %s208 = sadd.s32 %s207, 1
    %p211 = scmp.eq.s32.totalorder %s26, 1
    %p212 = scmp.ne.s32.totalorder %s207, %s209
    %p213 = scmp.eq.s32.totalorder %s26, 0
    %p214 = por %p212, %p213
    %p215 = scmp.ne.s32.totalorder %s207, %s209
    %p216 = scmp.eq.s32.totalorder %s31, 1
    %p217 = por %p215, %p216
    %p218 = scmp.ne.s32.totalorder %s209, %s210
    %p219 = scmp.eq.s32.totalorder %s31, 0
    %p220 = por %p218, %p219
    %p221 = scmp.ne.s32.totalorder %s209, %s210
    %p222 = scmp.eq.s32.totalorder %s32, 1
    %p223 = por %p221, %p222
    %p225 = scmp.ne.s32.totalorder %s210, %s224
    %p226 = scmp.eq.s32.totalorder %s32, 0
    %p227 = por %p225, %p226
    %s229 = sadd.s32 %s228, 1
    %p232 = scmp.eq.s32.totalorder %s26, 1
    %p233 = scmp.ne.s32.totalorder %s228, %s230
    %p234 = scmp.eq.s32.totalorder %s26, 0
    %p235 = por %p233, %p234
    %p236 = scmp.ne.s32.totalorder %s228, %s230
    %p237 = scmp.eq.s32.totalorder %s31, 1
    %p238 = por %p236, %p237
    %p239 = scmp.ne.s32.totalorder %s230, %s231
    %p240 = scmp.eq.s32.totalorder %s31, 0
    %p241 = por %p239, %p240
    %p242 = scmp.ne.s32.totalorder %s230, %s231
    %p243 = scmp.eq.s32.totalorder %s32, 1
    %p244 = por %p242, %p243
    %p246 = scmp.ne.s32.totalorder %s231, %s245
    %p247 = scmp.eq.s32.totalorder %s32, 0
    %p248 = por %p246, %p247
    %s250 = sadd.s32 %s249, 1
    %p253 = scmp.eq.s32.totalorder %s26, 1
    %p254 = scmp.ne.s32.totalorder %s249, %s251
    %p255 = scmp.eq.s32.totalorder %s26, 0
    %p256 = por %p254, %p255
    %p257 = scmp.ne.s32.totalorder %s249, %s251
    %p258 = scmp.eq.s32.totalorder %s31, 1
    %p259 = por %p257, %p258
    %p260 = scmp.ne.s32.totalorder %s251, %s252
    %p261 = scmp.eq.s32.totalorder %s31, 0
    %p262 = por %p260, %p261
    %p263 = scmp.ne.s32.totalorder %s251, %s252
    %p264 = scmp.eq.s32.totalorder %s32, 1
    %p265 = por %p263, %p264
    %p267 = scmp.ne.s32.totalorder %s252, %s266
    %p268 = scmp.eq.s32.totalorder %s32, 0
    %p269 = por %p267, %p268
    %s271 = sadd.s32 %s270, 1
    %p274 = scmp.eq.s32.totalorder %s26, 1
    %p275 = scmp.ne.s32.totalorder %s270, %s272
    %p276 = scmp.eq.s32.totalorder %s26, 0
    %p277 = por %p275, %p276
    %p278 = scmp.ne.s32.totalorder %s270, %s272
    %p279 = scmp.eq.s32.totalorder %s31, 1
    %p280 = por %p278, %p279
    %p281 = scmp.ne.s32.totalorder %s272, %s273
    %p282 = scmp.eq.s32.totalorder %s31, 0
    %p283 = por %p281, %p282
    %p284 = scmp.ne.s32.totalorder %s272, %s273
    %p285 = scmp.eq.s32.totalorder %s32, 1
    %p286 = por %p284, %p285
    %p288 = scmp.ne.s32.totalorder %s273, %s287
    %p289 = scmp.eq.s32.totalorder %s32, 0
    %p290 = por %p288, %p289
    %s292 = sadd.s32 %s291, 1
    %p295 = scmp.eq.s32.totalorder %s26, 1
    %p296 = scmp.ne.s32.totalorder %s291, %s293
    %p297 = scmp.eq.s32.totalorder %s26, 0
    %p298 = por %p296, %p297
    %p299 = scmp.ne.s32.totalorder %s291, %s293
    %p300 = scmp.eq.s32.totalorder %s31, 1
    %p301 = por %p299, %p300
    %p302 = scmp.ne.s32.totalorder %s293, %s294
    %p303 = scmp.eq.s32.totalorder %s31, 0
    %p304 = por %p302, %p303
    %p305 = scmp.ne.s32.totalorder %s293, %s294
    %p306 = scmp.eq.s32.totalorder %s32, 1
    %p307 = por %p305, %p306
    %p309 = scmp.ne.s32.totalorder %s294, %s308
    %p310 = scmp.eq.s32.totalorder %s32, 0
    %p311 = por %p309, %p310
    %s313 = sadd.s32 %s312, 1
    %p316 = scmp.eq.s32.totalorder %s26, 1
    %p317 = scmp.ne.s32.totalorder %s312, %s314
    %p318 = scmp.eq.s32.totalorder %s26, 0
    %p319 = por %p317, %p318
    %p320 = scmp.ne.s32.totalorder %s312, %s314
    %p321 = scmp.eq.s32.totalorder %s31, 1
    %p322 = por %p320, %p321
    %p323 = scmp.ne.s32.totalorder %s314, %s315
    %p324 = scmp.eq.s32.totalorder %s31, 0
    %p325 = por %p323, %p324
    %p326 = scmp.ne.s32.totalorder %s314, %s315
    %p327 = scmp.eq.s32.totalorder %s32, 1
    %p328 = por %p326, %p327
    %p330 = scmp.ne.s32.totalorder %s315, %s329
    %p331 = scmp.eq.s32.totalorder %s32, 0
    %p332 = por %p330, %p331
    %s334 = sadd.s32 %s333, 1
    %p337 = scmp.eq.s32.totalorder %s26, 1
    %p338 = scmp.ne.s32.totalorder %s333, %s335
    %p339 = scmp.eq.s32.totalorder %s26, 0
    %p340 = por %p338, %p339
    %p341 = scmp.ne.s32.totalorder %s333, %s335
    %p342 = scmp.eq.s32.totalorder %s31, 1
    %p343 = por %p341, %p342
    %p344 = scmp.ne.s32.totalorder %s335, %s336
    %p345 = scmp.eq.s32.totalorder %s31, 0
    %p346 = por %p344, %p345
    %p347 = scmp.ne.s32.totalorder %s335, %s336
    %p348 = scmp.eq.s32.totalorder %s32, 1
    %p349 = por %p347, %p348
    %p351 = scmp.ne.s32.totalorder %s336, %s350
    %p352 = scmp.eq.s32.totalorder %s32, 0
    %p353 = por %p351, %p352
    %s355 = sadd.s32 %s354, 1
    %p358 = scmp.eq.s32.totalorder %s26, 1
    %p359 = scmp.ne.s32.totalorder %s354, %s356
    %p360 = scmp.eq.s32.totalorder %s26, 0
    %p361 = por %p359, %p360
    %p362 = scmp.ne.s32.totalorder %s354, %s356
    %p363 = scmp.eq.s32.totalorder %s31, 1
    %p364 = por %p362, %p363
    %p365 = scmp.ne.s32.totalorder %s356, %s357
    %p366 = scmp.eq.s32.totalorder %s31, 0
    %p367 = por %p365, %p366
    %p368 = scmp.ne.s32.totalorder %s356, %s357
    %p369 = scmp.eq.s32.totalorder %s32, 1
    %p370 = por %p368, %p369
    %p372 = scmp.ne.s32.totalorder %s357, %s371
    %p373 = scmp.eq.s32.totalorder %s32, 0
    %p374 = por %p372, %p373
    %s376 = sadd.s32 %s375, 1
    %p379 = scmp.eq.s32.totalorder %s26, 1
    %p380 = scmp.ne.s32.totalorder %s375, %s377
    %p381 = scmp.eq.s32.totalorder %s26, 0
    %p382 = por %p380, %p381
    %p383 = scmp.ne.s32.totalorder %s375, %s377
    %p384 = scmp.eq.s32.totalorder %s31, 1
    %p385 = por %p383, %p384
    %p386 = scmp.ne.s32.totalorder %s377, %s378
    %p387 = scmp.eq.s32.totalorder %s31, 0
    %p388 = por %p386, %p387
    %p389 = scmp.ne.s32.totalorder %s377, %s378
    %p390 = scmp.eq.s32.totalorder %s32, 1
    %p391 = por %p389, %p390
    %p393 = scmp.ne.s32.totalorder %s378, %s392
    %p394 = scmp.eq.s32.totalorder %s32, 0
    %p395 = por %p393, %p394
    %s397 = sadd.s32 %s396, 1
    %p400 = scmp.eq.s32.totalorder %s26, 1
    %p401 = scmp.ne.s32.totalorder %s396, %s398
    %p402 = scmp.eq.s32.totalorder %s26, 0
    %p403 = por %p401, %p402
    %p404 = scmp.ne.s32.totalorder %s396, %s398
    %p405 = scmp.eq.s32.totalorder %s31, 1
    %p406 = por %p404, %p405
    %p407 = scmp.ne.s32.totalorder %s398, %s399
    %p408 = scmp.eq.s32.totalorder %s31, 0
    %p409 = por %p407, %p408
    %p410 = scmp.ne.s32.totalorder %s398, %s399
    %p411 = scmp.eq.s32.totalorder %s32, 1
    %p412 = por %p410, %p411
    %p414 = scmp.ne.s32.totalorder %s399, %s413
    %p415 = scmp.eq.s32.totalorder %s32, 0
    %p416 = por %p414, %p415
    %s418 = sadd.s32 %s417, 1
    %p421 = scmp.eq.s32.totalorder %s26, 1
    %p422 = scmp.ne.s32.totalorder %s417, %s419
    %p423 = scmp.eq.s32.totalorder %s26, 0
    %p424 = por %p422, %p423
    %p425 = scmp.ne.s32.totalorder %s417, %s419
    %p426 = scmp.eq.s32.totalorder %s31, 1
    %p427 = por %p425, %p426
    %p428 = scmp.ne.s32.totalorder %s419, %s420
    %p429 = scmp.eq.s32.totalorder %s31, 0
    %p430 = por %p428, %p429
    %p431 = scmp.ne.s32.totalorder %s419, %s420
    %p432 = scmp.eq.s32.totalorder %s32, 1
    %p433 = por %p431, %p432
    %p435 = scmp.ne.s32.totalorder %s420, %s434
    %p436 = scmp.eq.s32.totalorder %s32, 0
    %p437 = por %p435, %p436
    %s439 = sadd.s32 %s438, 1
    %p442 = scmp.eq.s32.totalorder %s26, 1
    %p443 = scmp.ne.s32.totalorder %s438, %s440
    %p444 = scmp.eq.s32.totalorder %s26, 0
    %p445 = por %p443, %p444
    %p446 = scmp.ne.s32.totalorder %s438, %s440
    %p447 = scmp.eq.s32.totalorder %s31, 1
    %p448 = por %p446, %p447
    %p449 = scmp.ne.s32.totalorder %s440, %s441
    %p450 = scmp.eq.s32.totalorder %s31, 0
    %p451 = por %p449, %p450
    %p452 = scmp.ne.s32.totalorder %s440, %s441
    %p453 = scmp.eq.s32.totalorder %s32, 1
    %p454 = por %p452, %p453
    %p456 = scmp.ne.s32.totalorder %s441, %s455
    %p457 = scmp.eq.s32.totalorder %s32, 0
    %p458 = por %p456, %p457
    %s459 = ssub.s32 %s26, %s33
    %p460 = scmp.eq.s32.totalorder %s459, 0
    %s462 = sadd.s32 %s461, 1
    %s463 = scalar_select %p460, %s461, %s462
    %p466 = pneg %p460
    %p467 = scmp.eq.s32.totalorder %s26, 1
    %p468 = por %p466, %p467
    %p469 = scmp.ne.s32.totalorder %s461, %s464
    %p470 = scmp.eq.s32.totalorder %s26, 0
    %p471 = por %p469, %p470
    %p472 = scmp.ne.s32.totalorder %s461, %s464
    %p473 = scmp.eq.s32.totalorder %s31, 1
    %p474 = por %p472, %p473
    %p475 = scmp.ne.s32.totalorder %s464, %s465
    %p476 = scmp.eq.s32.totalorder %s31, 0
    %p477 = por %p475, %p476
    %p478 = scmp.ne.s32.totalorder %s464, %s465
    %p479 = scmp.eq.s32.totalorder %s32, 1
    %p480 = por %p478, %p479
    %p482 = scmp.ne.s32.totalorder %s465, %s481
    %p483 = scmp.eq.s32.totalorder %s32, 0
    %p484 = por %p482, %p483
    %p485 = scmp.le.s32.totalorder 1, %s26
    %p486 = scmp.lt.s32.totalorder %s26, 3
    %p487 = pnand %p485, %p486
    %p488 = pneg %p487
    // Predicated region
    $region9: #{panovit_forward.3} parent=5 // pred_check
      _
    $region10: #{panovit_forward.3} parent=5 // pred_check_branch
      %490 = sbr.rel (%p487) target = $region12
    $region11: #{panovit_forward.3} parent=5 // pred_region
      %s491 = ssub.s32 %s26, 1
      // Predicated region
      $region13: #{panovit_forward.3} parent=11 // pred_check
        %p492 = pneg %p73
      $region14: #{panovit_forward.3} parent=11 // pred_check_branch
        %494 = sbr.rel (%p492) target = $region16
      $region15: #{panovit_forward.3} parent=11 // pred_region
        _
      $region16: #{panovit_forward.3} parent=11 // pred_fallthru
        _
      // Predicated region
      $region17: #{panovit_forward.3} parent=11 // pred_check
        %p495 = pneg %p94
      $region18: #{panovit_forward.3} parent=11 // pred_check_branch
        %497 = sbr.rel (%p495) target = $region20
      $region19: #{panovit_forward.3} parent=11 // pred_region
        _
      $region20: #{panovit_forward.3} parent=11 // pred_fallthru
        _
      // Predicated region
      $region21: #{panovit_forward.3} parent=11 // pred_check
        %p498 = pneg %p115
      $region22: #{panovit_forward.3} parent=11 // pred_check_branch
        %500 = sbr.rel (%p498) target = $region24
      $region23: #{panovit_forward.3} parent=11 // pred_region
        _
      $region24: #{panovit_forward.3} parent=11 // pred_fallthru
        _
      // Predicated region
      $region25: #{panovit_forward.3} parent=11 // pred_check
        %p501 = pneg %p136
      $region26: #{panovit_forward.3} parent=11 // pred_check_branch
        %503 = sbr.rel (%p501) target = $region28
      $region27: #{panovit_forward.3} parent=11 // pred_region
        _
      $region28: #{panovit_forward.3} parent=11 // pred_fallthru
        _
      // Predicated region
      $region29: #{panovit_forward.3} parent=11 // pred_check
        %p504 = pneg %p157
      $region30: #{panovit_forward.3} parent=11 // pred_check_branch
        %506 = sbr.rel (%p504) target = $region32
      $region31: #{panovit_forward.3} parent=11 // pred_region
        _
      $region32: #{panovit_forward.3} parent=11 // pred_fallthru
        _
      // Predicated region
      $region33: #{panovit_forward.3} parent=11 // pred_check
        %p507 = pneg %p178
      $region34: #{panovit_forward.3} parent=11 // pred_check_branch
        %509 = sbr.rel (%p507) target = $region36
      $region35: #{panovit_forward.3} parent=11 // pred_region
        _
      $region36: #{panovit_forward.3} parent=11 // pred_fallthru
        _
      // Predicated region
      $region37: #{panovit_forward.3} parent=11 // pred_check
        %p510 = pneg %p199
      $region38: #{panovit_forward.3} parent=11 // pred_check_branch
        %512 = sbr.rel (%p510) target = $region40
      $region39: #{panovit_forward.3} parent=11 // pred_region
        _
      $region40: #{panovit_forward.3} parent=11 // pred_fallthru
        _
      // Predicated region
      $region41: #{panovit_forward.3} parent=11 // pred_check
        %p513 = pneg %p220
      $region42: #{panovit_forward.3} parent=11 // pred_check_branch
        %515 = sbr.rel (%p513) target = $region44
      $region43: #{panovit_forward.3} parent=11 // pred_region
        _
      $region44: #{panovit_forward.3} parent=11 // pred_fallthru
        _
      // Predicated region
      $region45: #{panovit_forward.3} parent=11 // pred_check
        %p516 = pneg %p241
      $region46: #{panovit_forward.3} parent=11 // pred_check_branch
        %518 = sbr.rel (%p516) target = $region48
      $region47: #{panovit_forward.3} parent=11 // pred_region
        _
      $region48: #{panovit_forward.3} parent=11 // pred_fallthru
        _
      // Predicated region
      $region49: #{panovit_forward.3} parent=11 // pred_check
        %p519 = pneg %p262
      $region50: #{panovit_forward.3} parent=11 // pred_check_branch
        %521 = sbr.rel (%p519) target = $region52
      $region51: #{panovit_forward.3} parent=11 // pred_region
        _
      $region52: #{panovit_forward.3} parent=11 // pred_fallthru
        _
      // Predicated region
      $region53: #{panovit_forward.3} parent=11 // pred_check
        %p522 = pneg %p283
      $region54: #{panovit_forward.3} parent=11 // pred_check_branch
        %524 = sbr.rel (%p522) target = $region56
      $region55: #{panovit_forward.3} parent=11 // pred_region
        _
      $region56: #{panovit_forward.3} parent=11 // pred_fallthru
        _
      // Predicated region
      $region57: #{panovit_forward.3} parent=11 // pred_check
        %p525 = pneg %p304
      $region58: #{panovit_forward.3} parent=11 // pred_check_branch
        %527 = sbr.rel (%p525) target = $region60
      $region59: #{panovit_forward.3} parent=11 // pred_region
        _
      $region60: #{panovit_forward.3} parent=11 // pred_fallthru
        _
      // Predicated region
      $region61: #{panovit_forward.3} parent=11 // pred_check
        %p528 = pneg %p325
      $region62: #{panovit_forward.3} parent=11 // pred_check_branch
        %530 = sbr.rel (%p528) target = $region64
      $region63: #{panovit_forward.3} parent=11 // pred_region
        _
      $region64: #{panovit_forward.3} parent=11 // pred_fallthru
        _
      // Predicated region
      $region65: #{panovit_forward.3} parent=11 // pred_check
        %p531 = pneg %p346
      $region66: #{panovit_forward.3} parent=11 // pred_check_branch
        %533 = sbr.rel (%p531) target = $region68
      $region67: #{panovit_forward.3} parent=11 // pred_region
        _
      $region68: #{panovit_forward.3} parent=11 // pred_fallthru
        _
      // Predicated region
      $region69: #{panovit_forward.3} parent=11 // pred_check
        %p534 = pneg %p367
      $region70: #{panovit_forward.3} parent=11 // pred_check_branch
        %536 = sbr.rel (%p534) target = $region72
      $region71: #{panovit_forward.3} parent=11 // pred_region
        _
      $region72: #{panovit_forward.3} parent=11 // pred_fallthru
        _
      // Predicated region
      $region73: #{panovit_forward.3} parent=11 // pred_check
        %p537 = pneg %p388
      $region74: #{panovit_forward.3} parent=11 // pred_check_branch
        %539 = sbr.rel (%p537) target = $region76
      $region75: #{panovit_forward.3} parent=11 // pred_region
        _
      $region76: #{panovit_forward.3} parent=11 // pred_fallthru
        _
      // Predicated region
      $region77: #{panovit_forward.3} parent=11 // pred_check
        %p540 = pneg %p409
      $region78: #{panovit_forward.3} parent=11 // pred_check_branch
        %542 = sbr.rel (%p540) target = $region80
      $region79: #{panovit_forward.3} parent=11 // pred_region
        _
      $region80: #{panovit_forward.3} parent=11 // pred_fallthru
        _
      // Predicated region
      $region81: #{panovit_forward.3} parent=11 // pred_check
        %p543 = pneg %p430
      $region82: #{panovit_forward.3} parent=11 // pred_check_branch
        %545 = sbr.rel (%p543) target = $region84
      $region83: #{panovit_forward.3} parent=11 // pred_region
        _
      $region84: #{panovit_forward.3} parent=11 // pred_fallthru
        _
      // Predicated region
      $region85: #{panovit_forward.3} parent=11 // pred_check
        %p546 = pneg %p451
      $region86: #{panovit_forward.3} parent=11 // pred_check_branch
        %548 = sbr.rel (%p546) target = $region88
      $region87: #{panovit_forward.3} parent=11 // pred_region
        _
      $region88: #{panovit_forward.3} parent=11 // pred_fallthru
        _
    $region12: #{panovit_forward.3} parent=5 // pred_fallthru
      _
    %p549 = scmp.lt.s32.totalorder %s26, 2
    // Predicated region
    $region89: #{panovit_forward.3} parent=5 // pred_check
      %p550 = pneg %p549
    $region90: #{panovit_forward.3} parent=5 // pred_check_branch
      %552 = sbr.rel (%p550) target = $region92
    $region91: #{panovit_forward.3} parent=5 // pred_region
      // Predicated region
      $region93: #{panovit_forward.3} parent=91 // pred_check
        %p553 = pneg %p46
      $region94: #{panovit_forward.3} parent=91 // pred_check_branch
        %555 = sbr.rel (%p553) target = $region96
      $region95: #{panovit_forward.3} parent=91 // pred_region
        %p556 = scmp.lt.s32.totalorder %s26, 1
        %s557 = scalar_select %p556, %s26, 1
        %s558 = smul.addr %s557, 2
        %s559 = smul.addr %s558, 8
        %s560 = scalar_lea.vmem %s0, %s559
      $region96: #{panovit_forward.3} parent=91 // pred_fallthru
        _
    $region92: #{panovit_forward.3} parent=5 // pred_fallthru
      _
    %p561 = scmp.le.s32.totalorder 1, %s26
    %p562 = scmp.lt.s32.totalorder %s26, 3
    %p563 = pnand %p561, %p562
    %p564 = pneg %p563
    // Predicated region
    $region97: #{panovit_forward.3} parent=5 // pred_check
      _
    $region98: #{panovit_forward.3} parent=5 // pred_check_branch
      %566 = sbr.rel (%p563) target = $region100
    $region99: #{panovit_forward.3} parent=5 // pred_region
      %s567 = ssub.s32 %s26, 1
      %p568 = scmp.lt.s32.totalorder %s31, 1
      %s569 = scalar_select %p568, %s31, 1
      %s570 = smul.addr %s569, 2
      %s571 = smul.addr %s570, 8
      %s572 = scalar_lea.vmem %s0, %s571
      %p573 = pneg %p52
      %p574 = pneg %p49
      %p575 = pneg %p73
      %p576 = pneg %p70
      %p577 = pneg %p94
      %p578 = pneg %p91
      %p579 = pneg %p115
      %p580 = pneg %p112
      %p581 = pneg %p136
      %p582 = pneg %p133
      %p583 = pneg %p157
      %p584 = pneg %p154
      %p585 = pneg %p178
      %p586 = pneg %p175
      %p587 = pneg %p199
      %p588 = pneg %p196
      %p589 = pneg %p220
      %p590 = pneg %p217
      %p591 = pneg %p241
      %p592 = pneg %p238
      %p593 = pneg %p262
      %p594 = pneg %p259
      %p595 = pneg %p283
      %p596 = pneg %p280
      %p597 = pneg %p304
      %p598 = pneg %p301
      %p599 = pneg %p325
      %p600 = pneg %p322
      %p601 = pneg %p346
      %p602 = pneg %p343
      %p603 = pneg %p367
      %p604 = pneg %p364
      %p605 = pneg %p388
      %p606 = pneg %p385
      %p607 = pneg %p409
      %p608 = pneg %p406
      %p609 = pneg %p430
      %p610 = pneg %p427
      %p611 = pneg %p451
      %p612 = pneg %p448
      %p613 = pneg %p477
      %p614 = pneg %p474
      %p615 = scmp.lt.s32.totalorder %s31, 1
      %s616 = scalar_select %p615, %s31, 1
      %s617 = smul.addr %s616, 4
      %s618 = scalar_lea.vmem %s20, %s617
      %p619 = scmp.lt.s32.totalorder %s31, 1
      %s620 = scalar_select %p619, %s31, 1
      %s621 = smul.addr %s620, 2
      %s622 = smul.addr %s621, 8
      %s623 = scalar_lea.vmem %s0, %s622
      %p624 = scmp.lt.s32.totalorder %s31, 1
      %s625 = scalar_select %p624, %s31, 1
      %s626 = smul.addr %s625, 4
      %s627 = scalar_lea.vmem %s20, %s626
      %v629 = vld [vmem:[%s623] sm:$0xff]
      %v630 = vld [vmem:[%s623 + $0x8] sm:$0xff]
      %v631 = vpack.c.bf16 %v630, %v629
      %v632 = vld [vmem:[%s1] sm:$0xf]
      %v633 = vld [vmem:[%s1 + $0x4] sm:$0xf]
      %v634 = vld [vmem:[%s1 + $0x8] sm:$0xf]
      %v635 = vld [vmem:[%s1 + $0xc] sm:$0xf]
      %v636 = vld [vmem:[%s1 + $0x10] sm:$0xf]
      %v637 = vld [vmem:[%s1 + $0x14] sm:$0xf]
      %v638 = vld [vmem:[%s1 + $0x18] sm:$0xf]
      %v639 = vld [vmem:[%s1 + $0x1c] sm:$0xf]
      %v640 = vld [vmem:[%s2] sm:$0x1]
      %v642 = vperm.slane %v640, 0
      %v652 = vunpack.c.l.b16 %v632
      %v653 = vunpack.c.l.b16 %v633
      %v654 = vunpack.c.l.b16 %v634
      %v655 = vunpack.c.l.b16 %v635
      %v656 = vunpack.c.l.b16 %v636
      %v657 = vunpack.c.l.b16 %v637
      %v658 = vunpack.c.l.b16 %v638
      %v659 = vunpack.c.l.b16 %v639
      %v660 = vpack.c.b16 %v653, %v652
      %v661 = vpack.c.b16 %v655, %v654
      %v662 = vpack.c.b16 %v657, %v656
      %v663 = vpack.c.b16 %v659, %v658
      %vm668 = vcmask 523264
      %v670 = vsel %vm668, %v631, 0
      %672 = vmatpush.bf16.msra.mxu0 0
      %673 = vmatpush.bf16.msra.mxu0 0
      %674 = vmatpush.bf16.msra.mxu0 0
      %675 = vmatpush.bf16.msra.mxu0 0
      %676 = vmatpush.bf16.msra.mxu0 %v663
      %677 = vmatpush.bf16.msra.mxu0 %v662
      %678 = vmatpush.bf16.msra.mxu0 %v661
      %679 = vmatpush.bf16.msra.mxu0 %v660
      %680 = vmatmul.bf16.gmra.mxu0 %v670
      %v681 = vpop.f32.mrf.mxu0
      %v682 = vadd.f32 %v642, %v681
      %v683 = vpop.f32.mrf.mxu0
      %v684 = vadd.f32 %v642, %v683
      %685 = vdwg.mxu0
      %v686 = vld [vmem:[%s3] sm:$0xff]
      %v687 = vld [vmem:[%s3 + $0x8] sm:$0xff]
      %v688 = vadd.f32 %v682, %v686
      %v689 = vadd.f32 %v684, %v687
      %vm690 = vcmask 261120
      %v691 = vsel %vm690, %v688, 0.0
      %692 = vadd.xlane.f32.xlu0 %v691
      %v693 = vpop.xlane.xlu0 %692
      %v694 = vsel %vm690, %v689, 0.0
      %695 = vadd.xlane.f32.xlu0 %v694
      %v696 = vpop.xlane.xlu0 %695
      %v697 = vrcp.pop 32.0
      %v698 = vmul.f32 32.0, %v697
      %v699 = vsub.f32 1.0, %v698
      %v700 = vmul.f32 %v697, %v699
      %v701 = vadd.f32 %v697, %v700
      %vm702 = vweird.f32 %v697
      %v703 = vsel %vm702, %v697, %v701
      %v704 = vmul.f32 %v693, %v703
      %v705 = vmul.f32 %v696, %v703
      %v706 = vsub.f32 %v688, %v704
      %v707 = vsub.f32 %v689, %v705
      %v708 = vmul.f32 %v706, %v706
      %v709 = vmul.f32 %v707, %v707
      %v710 = vsel %vm690, %v708, 0.0
      %711 = vadd.xlane.f32.xlu0 %v710
      %v712 = vpop.xlane.xlu0 %711
      %v713 = vsel %vm690, %v709, 0.0
      %714 = vadd.xlane.f32.xlu0 %v713
      %v715 = vpop.xlane.xlu0 %714
      %v716 = vmul.f32 %v712, %v703
      %v717 = vmul.f32 %v715, %v703
      %v718 = vadd.f32 %v716, 1e-05
      %v719 = vadd.f32 %v717, 1e-05
      %v720 = vrsqrt.pop %v718
      %v721 = vmul.f32 %v720, %v718
      %v722 = vmul.f32 %v721, %v720
      %v723 = vmul.f32 0.5, %v722
      %v724 = vsub.f32 1.5, %v723
      %v725 = vmul.f32 %v720, %v724
      %vm726 = vweird.f32 %v718
      %vm727 = vweird.f32 %v720
      %vm728 = vmor %vm726, %vm727
      %v729 = vsel %vm728, %v720, %v725
      %v730 = vrsqrt.pop %v719
      %v731 = vmul.f32 %v730, %v719
      %v732 = vmul.f32 %v731, %v730
      %v733 = vmul.f32 0.5, %v732
      %v734 = vsub.f32 1.5, %v733
      %v735 = vmul.f32 %v730, %v734
      %vm736 = vweird.f32 %v719
      %vm737 = vweird.f32 %v730
      %vm738 = vmor %vm736, %vm737
      %v739 = vsel %vm738, %v730, %v735
      %v740 = vmul.f32 %v706, %v729
      %v741 = vmul.f32 %v707, %v739
      %v742 = vld [vmem:[%s4] sm:$0x1]
      %v744 = vperm.slane %v742, 0
      %v746 = vmul.f32 %v740, %v744
      %v747 = vmul.f32 %v741, %v744
      %v748 = vld [vmem:[%s5] sm:$0x1]
      %v750 = vperm.slane %v748, 0
      %v752 = vadd.f32 %v746, %v750
      %v753 = vadd.f32 %v747, %v750
      %v754 = vpack.c.bf16 %v753, %v752
      %v755 = vld [vmem:[%s6] sm:$0xf]
      %v756 = vld [vmem:[%s6 + $0x4] sm:$0xf]
      %v757 = vld [vmem:[%s6 + $0x8] sm:$0xf]
      %v758 = vld [vmem:[%s6 + $0xc] sm:$0xf]
      %v759 = vld [vmem:[%s7] sm:$0x1]
      %v761 = vperm.slane %v759, 0
      %v767 = vunpack.c.l.b16 %v755
      %v768 = vunpack.c.l.b16 %v756
      %v769 = vunpack.c.l.b16 %v757
      %v770 = vunpack.c.l.b16 %v758
      %v771 = vpack.c.b16 %v768, %v767
      %v772 = vpack.c.b16 %v770, %v769
      %v776 = vsel %vm690, %v754, 0
      %778 = vmatpush.bf16.msra.mxu0 0
      %779 = vmatpush.bf16.msra.mxu0 0
      %780 = vmatpush.bf16.msra.mxu0 0
      %781 = vmatpush.bf16.msra.mxu0 0
      %782 = vmatpush.bf16.msra.mxu0 0
      %783 = vmatpush.bf16.msra.mxu0 0
      %784 = vmatpush.bf16.msra.mxu0 %v772
      %785 = vmatpush.bf16.msra.mxu0 %v771
      %786 = vmatmul.bf16.gmra.mxu0 %v776
      %v787 = vpop.f32.mrf.mxu0
      %v788 = vadd.f32 %v761, %v787
      %v789 = vpop.f32.mrf.mxu0
      %v790 = vadd.f32 %v761, %v789
      %791 = vdwg.mxu0
      %v792 = vpack.c.bf16 %v790, %v788
      %794 = vrot.lane.b32.xlu0 %v792, 96
      %v795 = vpop.permute.xlu0 %794
      %vm796 = vcmask 130048
      %v798 = vsel %vm796, %v792, 0
      %v801 = vsel %vm796, %v795, 0
      %803 = vmatpush.bf16.xpose.msra.mxu0 0
      %804 = vmatpush.bf16.xpose.msra.mxu0 0
      %805 = vmatpush.bf16.xpose.msra.mxu0 0
      %806 = vmatpush.bf16.xpose.msra.mxu0 0
      %807 = vmatpush.bf16.xpose.msra.mxu0 0
      %808 = vmatpush.bf16.xpose.msra.mxu0 0
      %809 = vmatpush.bf16.xpose.msra.mxu0 0
      %810 = vmatpush.bf16.xpose.msra.mxu0 %v801
      %811 = vmatmul.bf16.gmra.mxu0 %v798
      %v812 = vpop.f32.mrf.mxu0
      %v813 = vadd.f32 0.0, %v812
      %v814 = vpop.f32.mrf.mxu0
      %v815 = vadd.f32 0.0, %v814
      %816 = vdwg.mxu0
      %v817 = vmul.f32 %v813, 0.25
      %v818 = vmul.f32 %v815, 0.25
      %v819 = vsel %vm796, %v817, -inf
      %820 = vmax.xlane.f32.xlu0 %v819
      %v821 = vpop.xlane.xlu0 %820
      %v822 = vsel %vm796, %v818, -inf
      %823 = vmax.xlane.f32.xlu0 %v822
      %v824 = vpop.xlane.xlu0 %823
      %v825 = vsub.f32 %v817, %v821
      %v826 = vsub.f32 %v818, %v824
      %v827 = vmul.f32 %v825, 1.442695
      %v828 = vpow.pop %v827
      %v829 = vmul.f32 %v826, 1.442695
      %v830 = vpow.pop %v829
      %v831 = vsel %vm796, %v828, 0.0
      %832 = vadd.xlane.f32.xlu0 %v831
      %v833 = vpop.xlane.xlu0 %832
      %v834 = vsel %vm796, %v830, 0.0
      %835 = vadd.xlane.f32.xlu0 %v834
      %v836 = vpop.xlane.xlu0 %835
      %v837 = vrcp.pop %v833
      %v838 = vrcp.pop %v836
      %v839 = vmul.f32 %v828, %v837
      %v840 = vmul.f32 %v830, %v838
      %v841 = vpack.c.bf16 %v840, %v839
      %842 = vrot.lane.b32.xlu0 %v792, 64
      %v843 = vpop.permute.xlu0 %842
      %v846 = vsel %vm796, %v841, 0
      %848 = vmatpush.bf16.msra.mxu0 0
      %849 = vmatpush.bf16.msra.mxu0 0
      %850 = vmatpush.bf16.msra.mxu0 0
      %851 = vmatpush.bf16.msra.mxu0 0
      %852 = vmatpush.bf16.msra.mxu0 0
      %853 = vmatpush.bf16.msra.mxu0 0
      %854 = vmatpush.bf16.msra.mxu0 0
      %855 = vmatpush.bf16.msra.mxu0 %v843
      %856 = vmatmul.bf16.gmra.mxu0 %v846
      %v857 = vpop.f32.mrf.mxu0
      %v858 = vadd.f32 0.0, %v857
      %v859 = vpop.f32.mrf.mxu0
      %v860 = vadd.f32 0.0, %v859
      %861 = vdwg.mxu0
      %862 = vrot.lane.b32.xlu0 %v792, 112
      %v863 = vpop.permute.xlu0 %862
      %864 = vrot.lane.b32.xlu0 %v792, 80
      %v865 = vpop.permute.xlu0 %864
      %v867 = vsel %vm796, %v863, 0
      %v870 = vsel %vm796, %v865, 0
      %872 = vmatpush.bf16.xpose.msra.mxu0 0
      %873 = vmatpush.bf16.xpose.msra.mxu0 0
      %874 = vmatpush.bf16.xpose.msra.mxu0 0
      %875 = vmatpush.bf16.xpose.msra.mxu0 0
      %876 = vmatpush.bf16.xpose.msra.mxu0 0
      %877 = vmatpush.bf16.xpose.msra.mxu0 0
      %878 = vmatpush.bf16.xpose.msra.mxu0 0
      %879 = vmatpush.bf16.xpose.msra.mxu0 %v870
      %880 = vmatmul.bf16.gmra.mxu0 %v867
      %v881 = vpop.f32.mrf.mxu0
      %v882 = vadd.f32 0.0, %v881
      %v883 = vpop.f32.mrf.mxu0
      %v884 = vadd.f32 0.0, %v883
      %885 = vdwg.mxu0
      %v886 = vmul.f32 %v882, 0.25
      %v887 = vmul.f32 %v884, 0.25
      %v888 = vsel %vm796, %v886, -inf
      %889 = vmax.xlane.f32.xlu0 %v888
      %v890 = vpop.xlane.xlu0 %889
      %v891 = vsel %vm796, %v887, -inf
      %892 = vmax.xlane.f32.xlu0 %v891
      %v893 = vpop.xlane.xlu0 %892
      %v894 = vsub.f32 %v886, %v890
      %v895 = vsub.f32 %v887, %v893
      %v896 = vmul.f32 %v894, 1.442695
      %v897 = vpow.pop %v896
      %v898 = vmul.f32 %v895, 1.442695
      %v899 = vpow.pop %v898
      %v900 = vsel %vm796, %v897, 0.0
      %901 = vadd.xlane.f32.xlu0 %v900
      %v902 = vpop.xlane.xlu0 %901
      %v903 = vsel %vm796, %v899, 0.0
      %904 = vadd.xlane.f32.xlu0 %v903
      %v905 = vpop.xlane.xlu0 %904
      %v906 = vrcp.pop %v902
      %v907 = vrcp.pop %v905
      %v908 = vmul.f32 %v897, %v906
      %v909 = vmul.f32 %v899, %v907
      %v910 = vpack.c.bf16 %v909, %v908
      %911 = vrot.lane.b32.xlu0 %v792, 48
      %v912 = vpop.permute.xlu0 %911
      %v915 = vsel %vm796, %v910, 0
      %917 = vmatpush.bf16.msra.mxu0 0
      %918 = vmatpush.bf16.msra.mxu0 0
      %919 = vmatpush.bf16.msra.mxu0 0
      %920 = vmatpush.bf16.msra.mxu0 0
      %921 = vmatpush.bf16.msra.mxu0 0
      %922 = vmatpush.bf16.msra.mxu0 0
      %923 = vmatpush.bf16.msra.mxu0 0
      %924 = vmatpush.bf16.msra.mxu0 %v912
      %925 = vmatmul.bf16.gmra.mxu0 %v915
      %v926 = vpop.f32.mrf.mxu0
      %v927 = vadd.f32 0.0, %v926
      %v928 = vpop.f32.mrf.mxu0
      %v929 = vadd.f32 0.0, %v928
      %930 = vdwg.mxu0
      %933 = vrot.lane.b32.xlu0 %v927, 16
      %v934 = vpop.permute.xlu0 %933
      %935 = vrot.lane.b32.xlu0 %v929, 16
      %v936 = vpop.permute.xlu0 %935
      %v939 = vsel %vm796, %v858, %v934
      %v940 = vsel %vm796, %v860, %v936
      %v941 = vpack.c.bf16 %v940, %v939
      %v942 = vld [vmem:[%s8] sm:$0xf]
      %v943 = vld [vmem:[%s8 + $0x4] sm:$0xf]
      %v944 = vld [vmem:[%s8 + $0x8] sm:$0xf]
      %v945 = vld [vmem:[%s8 + $0xc] sm:$0xf]
      %v950 = vunpack.c.l.b16 %v942
      %v951 = vunpack.c.l.b16 %v943
      %v952 = vunpack.c.l.b16 %v944
      %v953 = vunpack.c.l.b16 %v945
      %v954 = vpack.c.b16 %v951, %v950
      %v955 = vpack.c.b16 %v953, %v952
      %v959 = vsel %vm690, %v941, 0
      %961 = vmatpush.bf16.msra.mxu0 0
      %962 = vmatpush.bf16.msra.mxu0 0
      %963 = vmatpush.bf16.msra.mxu0 0
      %964 = vmatpush.bf16.msra.mxu0 0
      %965 = vmatpush.bf16.msra.mxu0 0
      %966 = vmatpush.bf16.msra.mxu0 0
      %967 = vmatpush.bf16.msra.mxu0 %v955
      %968 = vmatpush.bf16.msra.mxu0 %v954
      %969 = vmatmul.bf16.gmra.mxu0 %v959
      %v970 = vpop.f32.mrf.mxu0
      %v971 = vadd.f32 0.0, %v970
      %v972 = vpop.f32.mrf.mxu0
      %v973 = vadd.f32 0.0, %v972
      %974 = vdwg.mxu0
      %v975 = vadd.f32 %v688, %v971
      %v976 = vadd.f32 %v689, %v973
      %v977 = vld [vmem:[%s9] sm:$0x1]
      %v979 = vperm.slane %v977, 0
      %v981 = vadd.f32 %v975, %v979
      %v982 = vadd.f32 %v976, %v979
      %v983 = vsel %vm690, %v981, 0.0
      %984 = vadd.xlane.f32.xlu0 %v983
      %v985 = vpop.xlane.xlu0 %984
      %v986 = vsel %vm690, %v982, 0.0
      %987 = vadd.xlane.f32.xlu0 %v986
      %v988 = vpop.xlane.xlu0 %987
      %v989 = vmul.f32 %v985, %v703
      %v990 = vmul.f32 %v988, %v703
      %v991 = vsub.f32 %v981, %v989
      %v992 = vsub.f32 %v982, %v990
      %v993 = vmul.f32 %v991, %v991
      %v994 = vmul.f32 %v992, %v992
      %v995 = vsel %vm690, %v993, 0.0
      %996 = vadd.xlane.f32.xlu0 %v995
      %v997 = vpop.xlane.xlu0 %996
      %v998 = vsel %vm690, %v994, 0.0
      %999 = vadd.xlane.f32.xlu0 %v998
      %v1000 = vpop.xlane.xlu0 %999
      %v1001 = vmul.f32 %v997, %v703
      %v1002 = vmul.f32 %v1000, %v703
      %v1003 = vadd.f32 %v1001, 1e-05
      %v1004 = vadd.f32 %v1002, 1e-05
      %v1005 = vrsqrt.pop %v1003
      %v1006 = vmul.f32 %v1005, %v1003
      %v1007 = vmul.f32 %v1006, %v1005
      %v1008 = vmul.f32 0.5, %v1007
      %v1009 = vsub.f32 1.5, %v1008
      %v1010 = vmul.f32 %v1005, %v1009
      %vm1011 = vweird.f32 %v1003
      %vm1012 = vweird.f32 %v1005
      %vm1013 = vmor %vm1011, %vm1012
      %v1014 = vsel %vm1013, %v1005, %v1010
      %v1015 = vrsqrt.pop %v1004
      %v1016 = vmul.f32 %v1015, %v1004
      %v1017 = vmul.f32 %v1016, %v1015
      %v1018 = vmul.f32 0.5, %v1017
      %v1019 = vsub.f32 1.5, %v1018
      %v1020 = vmul.f32 %v1015, %v1019
      %vm1021 = vweird.f32 %v1004
      %vm1022 = vweird.f32 %v1015
      %vm1023 = vmor %vm1021, %vm1022
      %v1024 = vsel %vm1023, %v1015, %v1020
      %v1025 = vmul.f32 %v991, %v1014
      %v1026 = vmul.f32 %v992, %v1024
      %v1027 = vld [vmem:[%s10] sm:$0x1]
      %v1029 = vperm.slane %v1027, 0
      %v1031 = vmul.f32 %v1025, %v1029
      %v1032 = vmul.f32 %v1026, %v1029
      %v1033 = vld [vmem:[%s11] sm:$0x1]
      %v1035 = vperm.slane %v1033, 0
      %v1037 = vadd.f32 %v1031, %v1035
      %v1038 = vadd.f32 %v1032, %v1035
      %v1039 = vpack.c.bf16 %v1038, %v1037
      %v1040 = vld [vmem:[%s12] sm:$0xf]
      %v1041 = vld [vmem:[%s12 + $0x4] sm:$0xf]
      %v1042 = vld [vmem:[%s12 + $0x8] sm:$0xf]
      %v1043 = vld [vmem:[%s12 + $0xc] sm:$0xf]
      %v1044 = vld [vmem:[%s13] sm:$0x1]
      %v1046 = vperm.slane %v1044, 0
      %v1052 = vunpack.c.l.b16 %v1040
      %v1053 = vunpack.c.l.b16 %v1041
      %v1054 = vunpack.c.l.b16 %v1042
      %v1055 = vunpack.c.l.b16 %v1043
      %v1056 = vpack.c.b16 %v1053, %v1052
      %v1057 = vpack.c.b16 %v1055, %v1054
      %v1061 = vsel %vm690, %v1039, 0
      %1063 = vmatpush.bf16.msra.mxu0 0
      %1064 = vmatpush.bf16.msra.mxu0 0
      %1065 = vmatpush.bf16.msra.mxu0 0
      %1066 = vmatpush.bf16.msra.mxu0 0
      %1067 = vmatpush.bf16.msra.mxu0 0
      %1068 = vmatpush.bf16.msra.mxu0 0
      %1069 = vmatpush.bf16.msra.mxu0 %v1057
      %1070 = vmatpush.bf16.msra.mxu0 %v1056
      %1071 = vmatmul.bf16.gmra.mxu0 %v1061
      %v1072 = vpop.f32.mrf.mxu0
      %v1073 = vadd.f32 %v1046, %v1072
      %v1074 = vpop.f32.mrf.mxu0
      %v1075 = vadd.f32 %v1046, %v1074
      %1076 = vdwg.mxu0
      %v1077 = vmul.f32 %v1073, %v1073
      %v1078 = vmul.f32 %v1075, %v1075
      %v1079 = vmul.f32 %v1073, %v1077
      %v1080 = vmul.f32 %v1075, %v1078
      %v1081 = vmul.f32 %v1079, 0.044715
      %v1082 = vmul.f32 %v1080, 0.044715
      %v1083 = vadd.f32 %v1073, %v1081
      %v1084 = vadd.f32 %v1075, %v1082
      %v1085 = vmul.f32 %v1083, 0.7978846
      %v1086 = vmul.f32 %v1084, 0.7978846
      %v1087 = vtanh.pop %v1085
      %v1088 = vtanh.pop %v1086
      %v1089 = vadd.f32 %v1087, 1.0
      %v1090 = vadd.f32 %v1088, 1.0
      %v1091 = vmul.f32 %v1089, 0.5
      %v1092 = vmul.f32 %v1090, 0.5
      %v1093 = vmul.f32 %v1073, %v1091
      %v1094 = vmul.f32 %v1075, %v1092
      %v1095 = vpack.c.bf16 %v1094, %v1093
      %v1096 = vld [vmem:[%s14] sm:$0xf]
      %v1097 = vld [vmem:[%s14 + $0x4] sm:$0xf]
      %v1098 = vld [vmem:[%s14 + $0x8] sm:$0xf]
      %v1099 = vld [vmem:[%s14 + $0xc] sm:$0xf]
      %v1100 = vld [vmem:[%s14 + $0x10] sm:$0xf]
      %v1101 = vld [vmem:[%s14 + $0x14] sm:$0xf]
      %v1102 = vld [vmem:[%s14 + $0x18] sm:$0xf]
      %v1103 = vld [vmem:[%s14 + $0x1c] sm:$0xf]
      %v1112 = vunpack.c.l.b16 %v1096
      %v1113 = vunpack.c.l.b16 %v1097
      %v1114 = vunpack.c.l.b16 %v1098
      %v1115 = vunpack.c.l.b16 %v1099
      %v1116 = vunpack.c.l.b16 %v1100
      %v1117 = vunpack.c.l.b16 %v1101
      %v1118 = vunpack.c.l.b16 %v1102
      %v1119 = vunpack.c.l.b16 %v1103
      %v1120 = vpack.c.b16 %v1113, %v1112
      %v1121 = vpack.c.b16 %v1115, %v1114
      %v1122 = vpack.c.b16 %v1117, %v1116
      %v1123 = vpack.c.b16 %v1119, %v1118
      %v1129 = vsel %vm668, %v1095, 0
      %1131 = vmatpush.bf16.msra.mxu0 0
      %1132 = vmatpush.bf16.msra.mxu0 0
      %1133 = vmatpush.bf16.msra.mxu0 0
      %1134 = vmatpush.bf16.msra.mxu0 0
      %1135 = vmatpush.bf16.msra.mxu0 %v1123
      %1136 = vmatpush.bf16.msra.mxu0 %v1122
      %1137 = vmatpush.bf16.msra.mxu0 %v1121
      %1138 = vmatpush.bf16.msra.mxu0 %v1120
      %1139 = vmatmul.bf16.gmra.mxu0 %v1129
      %v1140 = vpop.f32.mrf.mxu0
      %v1141 = vadd.f32 0.0, %v1140
      %v1142 = vpop.f32.mrf.mxu0
      %v1143 = vadd.f32 0.0, %v1142
      %1144 = vdwg.mxu0
      %v1145 = vadd.f32 %v981, %v1141
      %v1146 = vadd.f32 %v982, %v1143
      %v1147 = vld [vmem:[%s15] sm:$0x1]
      %v1149 = vperm.slane %v1147, 0
      %v1151 = vadd.f32 %v1145, %v1149
      %v1152 = vadd.f32 %v1146, %v1149
      %v1153 = vsel %vm690, %v1151, 0.0
      %1154 = vadd.xlane.f32.xlu0 %v1153
      %v1155 = vpop.xlane.xlu0 %1154
      %v1156 = vsel %vm690, %v1152, 0.0
      %1157 = vadd.xlane.f32.xlu0 %v1156
      %v1158 = vpop.xlane.xlu0 %1157
      %v1159 = vmul.f32 %v1155, %v703
      %v1160 = vmul.f32 %v1158, %v703
      %v1161 = vsub.f32 %v1151, %v1159
      %v1162 = vsub.f32 %v1152, %v1160
      %v1163 = vmul.f32 %v1161, %v1161
      %v1164 = vmul.f32 %v1162, %v1162
      %v1165 = vsel %vm690, %v1163, 0.0
      %1166 = vadd.xlane.f32.xlu0 %v1165
      %v1167 = vpop.xlane.xlu0 %1166
      %v1168 = vsel %vm690, %v1164, 0.0
      %1169 = vadd.xlane.f32.xlu0 %v1168
      %v1170 = vpop.xlane.xlu0 %1169
      %v1171 = vmul.f32 %v1167, %v703
      %v1172 = vmul.f32 %v1170, %v703
      %v1173 = vadd.f32 %v1171, 1e-05
      %v1174 = vadd.f32 %v1172, 1e-05
      %v1175 = vrsqrt.pop %v1173
      %v1176 = vmul.f32 %v1175, %v1173
      %v1177 = vmul.f32 %v1176, %v1175
      %v1178 = vmul.f32 0.5, %v1177
      %v1179 = vsub.f32 1.5, %v1178
      %v1180 = vmul.f32 %v1175, %v1179
      %vm1181 = vweird.f32 %v1173
      %vm1182 = vweird.f32 %v1175
      %vm1183 = vmor %vm1181, %vm1182
      %v1184 = vsel %vm1183, %v1175, %v1180
      %v1185 = vrsqrt.pop %v1174
      %v1186 = vmul.f32 %v1185, %v1174
      %v1187 = vmul.f32 %v1186, %v1185
      %v1188 = vmul.f32 0.5, %v1187
      %v1189 = vsub.f32 1.5, %v1188
      %v1190 = vmul.f32 %v1185, %v1189
      %vm1191 = vweird.f32 %v1174
      %vm1192 = vweird.f32 %v1185
      %vm1193 = vmor %vm1191, %vm1192
      %v1194 = vsel %vm1193, %v1185, %v1190
      %v1195 = vmul.f32 %v1161, %v1184
      %v1196 = vmul.f32 %v1162, %v1194
      %v1197 = vld [vmem:[%s16] sm:$0x1]
      %v1199 = vperm.slane %v1197, 0
      %v1201 = vmul.f32 %v1195, %v1199
      %v1202 = vmul.f32 %v1196, %v1199
      %v1203 = vld [vmem:[%s17] sm:$0x1]
      %v1205 = vperm.slane %v1203, 0
      %v1207 = vadd.f32 %v1201, %v1205
      %v1208 = vadd.f32 %v1202, %v1205
      %v1209 = vld [vmem:[%s18] sm:$0x3]
      %v1210 = vpack.c.bf16 %v1208, %v1207
      %v1211 = vld [vmem:[%s19] sm:$0x7]
      %1213 = vset.pattern.permute.xlu0 0
      %1214 = vperm.xlu0 %1213, %v1211
      %v1215 = vpop.permute.xlu0 %1214
      %v1218 = vsel %vm690, %v1209, 0
      %v1221 = vsel %vm690, %v1210, 0
      %1223 = vmatpush.bf16.xpose.msra.mxu0 0
      %1224 = vmatpush.bf16.xpose.msra.mxu0 0
      %1225 = vmatpush.bf16.xpose.msra.mxu0 0
      %1226 = vmatpush.bf16.xpose.msra.mxu0 0
      %1227 = vmatpush.bf16.xpose.msra.mxu0 0
      %1228 = vmatpush.bf16.xpose.msra.mxu0 0
      %1229 = vmatpush.bf16.xpose.msra.mxu0 0
      %1230 = vmatpush.bf16.xpose.msra.mxu0 %v1221
      %1231 = vmatmul.bf16.gmra.mxu0 %v1218
      %v1232 = vpop.f32.mrf.mxu0
      %v1233 = vadd.f32 %v1215, %v1232
      %v1234 = vpop.f32.mrf.mxu0
      %1235 = vdwg.mxu0
      %vm1236 = vcmask 124928
      %1237 = vst.msk [vmem:[%s627] sm:$0x7] %vm1236, %v1233
      %p1238 = scmp.lt.s32.totalorder %s31, 1
      %s1239 = scalar_select %p1238, %s31, 1
      %s1240 = smul.addr %s1239, 4
      %s1241 = scalar_lea.vmem %s20, %s1240
      // Predicated region
      $region101: #{panovit_forward.3} parent=99 // pred_check
        %p1242 = pneg %p474
      $region102: #{panovit_forward.3} parent=99 // pred_check_branch
        %1244 = sbr.rel (%p1242) target = $region104
      $region103: #{panovit_forward.3} parent=99 // pred_region
        _
      $region104: #{panovit_forward.3} parent=99 // pred_fallthru
        _
    $region100: #{panovit_forward.3} parent=5 // pred_fallthru
      _
    %p1245 = scmp.le.s32.totalorder 2, %s26
    // Predicated region
    $region105: #{panovit_forward.3} parent=5 // pred_check
      %p1246 = pneg %p1245
    $region106: #{panovit_forward.3} parent=5 // pred_check_branch
      %1248 = sbr.rel (%p1246) target = $region108
    $region107: #{panovit_forward.3} parent=5 // pred_region
      %s1249 = ssub.s32 %s26, 2
      // Predicated region
      $region109: #{panovit_forward.3} parent=107 // pred_check
        %p1250 = pneg %p480
      $region110: #{panovit_forward.3} parent=107 // pred_check_branch
        %1252 = sbr.rel (%p1250) target = $region112
      $region111: #{panovit_forward.3} parent=107 // pred_region
        %p1253 = scmp.lt.s32.totalorder %s32, 1
        %s1254 = scalar_select %p1253, %s32, 1
        %s1255 = smul.addr %s1254, 4
        %s1256 = scalar_lea.vmem %s20, %s1255
      $region112: #{panovit_forward.3} parent=107 // pred_fallthru
        _
    $region108: #{panovit_forward.3} parent=5 // pred_fallthru
      _
  $region6: #{panovit_forward.3} parent=0 // loop_footer
    %s30 = sadd.s32 1, %s26
  $region7: #{panovit_forward.3} parent=0 // loop_footer_branch
    %25 = sbr.rel target = $region3
  $region8: #{panovit_forward.3} parent=0 // loop_exit
    _

// kernel: panovit_forward.2
$region0: #{panovit_forward.2}
  #allocation0 [shape = 'u32[]', space=smem, size = 0x4, offset = 0x4, fixed_abs, tag = 'smem constant byte address 0x4 - core index']
  #allocation1 [shape = 'u32[72,128]{1,0:T(1,128)}', space=vmem, size = 0x9000, scoped, tag = 'internal scratch']
  %s0 = inlined_call_operand.vmem [shape: f32[2,3,18,18], index: 0, kind: input, shape index: {}]
  %s1 = inlined_call_operand.vmem [shape: bf16[16,32], index: 1, kind: input, shape index: {}]
  %s2 = inlined_call_operand.vmem [shape: f32[16,1], index: 2, kind: input, shape index: {}]
  %s3 = inlined_call_operand.hbm [shape: f32[2,16,16,16], index: 3, kind: output, shape index: {}]
  %s4 = sld [smem:[#allocation0]]
  $region45: #{panovit_forward.2} parent=0
    _
  %s6 = ssub.s32 1, %s4
  %s7 = scalar_select 0, %s6, %s4
  $region1: #{panovit_forward.2} parent=0
    #allocation2 [shape = 'u8[131072]{0}', space=vmem, size = 0x20000, scoped, tag = 'output window, operand 0']
    #allocation3 [shape = 's32[2]{0}', space=sflag, size = 0x8, scoped, tag = 'scoped memory for panovit_forward.2']
    %8 = vsyncpa [#allocation3], 0
    %s9 = scalar_lea.sflag [#allocation3], 1
    %10 = vsyncpa %s9, 0
    loop: start=0, step=1, limit=6
    $region2: #{panovit_forward.2} parent=1 // loop_pre_header
      _
    $region3: #{panovit_forward.2} parent=1 // loop_header
      %s12 = sphi 0, %s16
      %p13 = scmp.ge.s32.totalorder %s12, 6
      %s19 = sphi 0, %s31
      %s20 = sphi 0, %s27
      %s21 = sphi 0, %s19
      %s22 = sphi 0, %s20
      %s23 = sphi 0, %s21
      %s24 = sphi 0, %s22
      %s34 = sphi 0, %s36
      %s37 = sphi 0, %s34
      %s38 = sphi 0, %s37
      %s54 = sphi 0, %s38
      %s58 = sphi 0, %s58
      %s60 = sphi 0, %s58
      %s61 = sphi 0, %s60
      %s75 = sphi 0, %s61
      %s79 = sphi 0, %s79
      %s81 = sphi 0, %s79
      %s82 = sphi 0, %s81
      %s96 = sphi 0, %s82
      %s104 = sphi 0, %s106
      %s107 = sphi 0, %s104
      %s108 = sphi 0, %s107
      %s124 = sphi 0, %s108
    $region4: #{panovit_forward.2} parent=1 // loop_header_branch
      %15 = sbr.rel (%p13) target = $region8
    $region5: #{panovit_forward.2} parent=1 // loop_body
      %s17 = ssub.s32 %s12, 1
      %s18 = ssub.s32 %s12, 2
      %s25 = sadd.s32 1, %s20
      %p26 = scmp.ge.s32.totalorder %s25, 2
      %s27 = scalar_select %p26, 0, %s25
      %s28 = sadd.s32 1, %s19
      %s29 = scalar_select %p26, %s28, %s19
      %p30 = scmp.ge.s32.totalorder %s29, 2
      %s31 = scalar_select %p30, 0, %s29
      %s32 = ssub.s32 %s19, %s31
      %p33 = scmp.eq.s32.totalorder %s32, 0
      %s35 = sadd.s32 %s34, 1
      %s36 = scalar_select %p33, %s34, %s35
      %p39 = pneg %p33
      %p40 = scmp.eq.s32.totalorder %s12, 3
      %p41 = por %p39, %p40
      %p42 = scmp.ne.s32.totalorder %s34, %s37
      %p43 = scmp.eq.s32.totalorder %s12, 0
      %p44 = por %p42, %p43
      %p45 = scmp.ne.s32.totalorder %s34, %s37
      %p46 = scmp.eq.s32.totalorder %s17, 3
      %p47 = por %p45, %p46
      %p48 = scmp.ne.s32.totalorder %s37, %s38
      %p49 = scmp.eq.s32.totalorder %s17, 0
      %p50 = por %p48, %p49
      %p51 = scmp.ne.s32.totalorder %s37, %s38
      %p52 = scmp.eq.s32.totalorder %s18, 3
      %p53 = por %p51, %p52
      %p55 = scmp.ne.s32.totalorder %s38, %s54
      %p56 = scmp.eq.s32.totalorder %s18, 0
      %p57 = por %p55, %p56
      %s59 = sadd.s32 %s58, 1
      %p62 = scmp.eq.s32.totalorder %s12, 3
      %p63 = scmp.ne.s32.totalorder %s58, %s60
      %p64 = scmp.eq.s32.totalorder %s12, 0
      %p65 = por %p63, %p64
      %p66 = scmp.ne.s32.totalorder %s58, %s60
      %p67 = scmp.eq.s32.totalorder %s17, 3
      %p68 = por %p66, %p67
      %p69 = scmp.ne.s32.totalorder %s60, %s61
      %p70 = scmp.eq.s32.totalorder %s17, 0
      %p71 = por %p69, %p70
      %p72 = scmp.ne.s32.totalorder %s60, %s61
      %p73 = scmp.eq.s32.totalorder %s18, 3
      %p74 = por %p72, %p73
      %p76 = scmp.ne.s32.totalorder %s61, %s75
      %p77 = scmp.eq.s32.totalorder %s18, 0
      %p78 = por %p76, %p77
      %s80 = sadd.s32 %s79, 1
      %p83 = scmp.eq.s32.totalorder %s12, 3
      %p84 = scmp.ne.s32.totalorder %s79, %s81
      %p85 = scmp.eq.s32.totalorder %s12, 0
      %p86 = por %p84, %p85
      %p87 = scmp.ne.s32.totalorder %s79, %s81
      %p88 = scmp.eq.s32.totalorder %s17, 3
      %p89 = por %p87, %p88
      %p90 = scmp.ne.s32.totalorder %s81, %s82
      %p91 = scmp.eq.s32.totalorder %s17, 0
      %p92 = por %p90, %p91
      %p93 = scmp.ne.s32.totalorder %s81, %s82
      %p94 = scmp.eq.s32.totalorder %s18, 3
      %p95 = por %p93, %p94
      %p97 = scmp.ne.s32.totalorder %s82, %s96
      %p98 = scmp.eq.s32.totalorder %s18, 0
      %p99 = por %p97, %p98
      %s100 = ssub.s32 %s19, %s31
      %s101 = ssub.s32 %s20, %s27
      %s102 = sor.u32 %s100, %s101
      %p103 = scmp.eq.s32.totalorder %s102, 0
      %s105 = sadd.s32 %s104, 1
      %s106 = scalar_select %p103, %s104, %s105
      %p109 = pneg %p103
      %p110 = scmp.eq.s32.totalorder %s12, 3
      %p111 = por %p109, %p110
      %p112 = scmp.ne.s32.totalorder %s104, %s107
      %p113 = scmp.eq.s32.totalorder %s12, 0
      %p114 = por %p112, %p113
      %p115 = scmp.ne.s32.totalorder %s104, %s107
      %p116 = scmp.eq.s32.totalorder %s17, 3
      %p117 = por %p115, %p116
      %p118 = scmp.ne.s32.totalorder %s107, %s108
      %p119 = scmp.eq.s32.totalorder %s17, 0
      %p120 = por %p118, %p119
      %p121 = scmp.ne.s32.totalorder %s107, %s108
      %p122 = scmp.eq.s32.totalorder %s18, 3
      %p123 = por %p121, %p122
      %p125 = scmp.ne.s32.totalorder %s108, %s124
      %p126 = scmp.eq.s32.totalorder %s18, 0
      %p127 = por %p125, %p126
      %p128 = scmp.le.s32.totalorder 1, %s12
      %p129 = scmp.lt.s32.totalorder %s12, 5
      %p130 = pnand %p128, %p129
      %p131 = pneg %p130
      // Predicated region
      $region9: #{panovit_forward.2} parent=5 // pred_check
        _
      $region10: #{panovit_forward.2} parent=5 // pred_check_branch
        %133 = sbr.rel (%p130) target = $region12
      $region11: #{panovit_forward.2} parent=5 // pred_region
        %s134 = ssub.s32 %s12, 1
        // Predicated region
        $region13: #{panovit_forward.2} parent=11 // pred_check
          %p135 = pneg %p71
        $region14: #{panovit_forward.2} parent=11 // pred_check_branch
          %137 = sbr.rel (%p135) target = $region16
        $region15: #{panovit_forward.2} parent=11 // pred_region
          _
        $region16: #{panovit_forward.2} parent=11 // pred_fallthru
          _
        // Predicated region
        $region17: #{panovit_forward.2} parent=11 // pred_check
          %p138 = pneg %p92
        $region18: #{panovit_forward.2} parent=11 // pred_check_branch
          %140 = sbr.rel (%p138) target = $region20
        $region19: #{panovit_forward.2} parent=11 // pred_region
          _
        $region20: #{panovit_forward.2} parent=11 // pred_fallthru
          _
      $region12: #{panovit_forward.2} parent=5 // pred_fallthru
        _
      %p141 = scmp.lt.s32.totalorder %s12, 4
      // Predicated region
      $region21: #{panovit_forward.2} parent=5 // pred_check
        %p142 = pneg %p141
      $region22: #{panovit_forward.2} parent=5 // pred_check_branch
        %144 = sbr.rel (%p142) target = $region24
      $region23: #{panovit_forward.2} parent=5 // pred_region
        // Predicated region
        $region25: #{panovit_forward.2} parent=23 // pred_check
          %p145 = pneg %p44
        $region26: #{panovit_forward.2} parent=23 // pred_check_branch
          %147 = sbr.rel (%p145) target = $region28
        $region27: #{panovit_forward.2} parent=23 // pred_region
          %p148 = scmp.lt.s32.totalorder %s19, 1
          %s149 = scalar_select %p148, %s19, 1
          %s150 = smul.addr %s149, 9
          %s151 = smul.addr %s150, 8
          %s152 = scalar_lea.vmem %s0, %s151
        $region28: #{panovit_forward.2} parent=23 // pred_fallthru
          _
      $region24: #{panovit_forward.2} parent=5 // pred_fallthru
        _
      %p153 = scmp.le.s32.totalorder 1, %s12
      %p154 = scmp.lt.s32.totalorder %s12, 5
      %p155 = pnand %p153, %p154
      %p156 = pneg %p155
      // Predicated region
      $region29: #{panovit_forward.2} parent=5 // pred_check
        _
      $region30: #{panovit_forward.2} parent=5 // pred_check_branch
        %158 = sbr.rel (%p155) target = $region32
      $region31: #{panovit_forward.2} parent=5 // pred_region
        %s159 = ssub.s32 %s12, 1
        %p160 = scmp.lt.s32.totalorder %s21, 1
        %s161 = scalar_select %p160, %s21, 1
        %s162 = smul.addr %s161, 9
        %s163 = smul.addr %s162, 8
        %s164 = scalar_lea.vmem %s0, %s163
        %p165 = pneg %p50
        %p166 = pneg %p47
        %p167 = pneg %p71
        %p168 = pneg %p68
        %p169 = pneg %p92
        %p170 = pneg %p89
        %p171 = pneg %p120
        %p172 = pneg %p117
        %s173 = sand.u32 %s107, 1
        %s174 = scalar_lea.sflag [#allocation3], %s173
        %s175 = sand.u32 %s107, 1
        %s176 = smul.addr %s175, 128
        %s177 = scalar_lea.vmem [#allocation2], %s176
        %p178 = scmp.lt.s32.totalorder %s21, 1
        %s179 = scalar_select %p178, %s21, 1
        %s180 = smul.addr %s179, 9
        %s181 = smul.addr %s180, 8
        %s182 = scalar_lea.vmem %s0, %s181
        %s183 = smul.u32 8, %s22
        %s185 = smul.u32 %s22, 8
        %v186 = vld [vmem:[%s1] sm:$0xf]
        %v187 = vld [vmem:[%s1 + $0x4] sm:$0xf]
        %v188 = vld [vmem:[%s2] sm:$0xff]
        %v189 = vld [vmem:[%s2 + $0x8] sm:$0xff]
        %s190 = scalar_lea.vmem %s182, %s185
        %v191 = vld [vmem:[%s190] sm:$0x1]
        %s192 = sadd.s32 %s185, 1
        %s193 = scalar_lea.vmem %s182, %s192
        %v194 = vld [vmem:[%s193] sm:$0x1]
        %s195 = sadd.s32 %s185, 2
        %s196 = scalar_lea.vmem %s182, %s195
        %v197 = vld [vmem:[%s196] sm:$0x1]
        %s198 = sadd.s32 %s185, 24
        %s199 = scalar_lea.vmem %s182, %s198
        %v200 = vld [vmem:[%s199] sm:$0x1]
        %s201 = sadd.s32 %s192, 24
        %s202 = scalar_lea.vmem %s182, %s201
        %v203 = vld [vmem:[%s202] sm:$0x1]
        %s204 = sadd.s32 %s195, 24
        %s205 = scalar_lea.vmem %s182, %s204
        %v206 = vld [vmem:[%s205] sm:$0x1]
        %s207 = sadd.s32 %s185, 48
        %s208 = scalar_lea.vmem %s182, %s207
        %v209 = vld [vmem:[%s208] sm:$0x1]
        %s210 = sadd.s32 %s192, 48
        %s211 = scalar_lea.vmem %s182, %s210
        %v212 = vld [vmem:[%s211] sm:$0x1]
        %s213 = sadd.s32 %s195, 48
        %s214 = scalar_lea.vmem %s182, %s213
        %v215 = vld [vmem:[%s214] sm:$0x1]
        %v217 = vrot.slane %v191, 7
        %218 = vrot.lane.b32.xlu0 %v217, 127
        %v219 = vpop.permute.xlu0 %218
        %v221 = vrot.slane %v191, 6
        %222 = vrot.lane.b32.xlu0 %v221, 126
        %v223 = vpop.permute.xlu0 %222
        %v226 = vrot.slane %v194, 5
        %v228 = vrot.slane %v194, 4
        %229 = vrot.lane.b32.xlu0 %v228, 127
        %v230 = vpop.permute.xlu0 %229
        %v232 = vrot.slane %v194, 3
        %233 = vrot.lane.b32.xlu0 %v232, 126
        %v234 = vpop.permute.xlu0 %233
        %v237 = vrot.slane %v197, 2
        %v239 = vrot.slane %v197, 1
        %240 = vrot.lane.b32.xlu0 %v239, 127
        %v241 = vpop.permute.xlu0 %240
        %243 = vrot.lane.b32.xlu0 %v197, 126
        %v244 = vpop.permute.xlu0 %243
        %v247 = vrot.slane %v200, 7
        %v249 = vrot.slane %v200, 6
        %250 = vrot.lane.b32.xlu0 %v249, 127
        %v251 = vpop.permute.xlu0 %250
        %v253 = vrot.slane %v200, 5
        %254 = vrot.lane.b32.xlu0 %v253, 126
        %v255 = vpop.permute.xlu0 %254
        %v258 = vrot.slane %v203, 4
        %v260 = vrot.slane %v203, 3
        %261 = vrot.lane.b32.xlu0 %v260, 127
        %v262 = vpop.permute.xlu0 %261
        %v264 = vrot.slane %v203, 2
        %265 = vrot.lane.b32.xlu0 %v264, 126
        %v266 = vpop.permute.xlu0 %265
        %v269 = vrot.slane %v206, 1
        %vm271 = vcmask 1040384
        %v272 = vsel %vm271, %v191, %v219
        %vm273 = vcmask 1041408
        %v274 = vsel %vm273, %v272, %v223
        %vm275 = vcmask 1042432
        %v276 = vsel %vm275, %v274, %v226
        %vm277 = vcmask 1043456
        %v278 = vsel %vm277, %v276, %v230
        %vm279 = vcmask 1044480
        %v280 = vsel %vm279, %v278, %v234
        %vm281 = vcmask 1045504
        %v282 = vsel %vm281, %v280, %v237
        %vm283 = vcmask 1046528
        %v284 = vsel %vm283, %v282, %v241
        %v285 = vsel %vm271, %v244, %v247
        %v286 = vsel %vm273, %v285, %v251
        %v287 = vsel %vm275, %v286, %v255
        %v288 = vsel %vm277, %v287, %v258
        %v289 = vsel %vm279, %v288, %v262
        %v290 = vsel %vm281, %v289, %v266
        %v291 = vsel %vm283, %v290, %v269
        %v292 = vrot.slane %v206, 7
        %293 = vrot.lane.b32.xlu0 %v292, 127
        %v294 = vpop.permute.xlu0 %293
        %v297 = vrot.slane %v209, 6
        %298 = vrot.lane.b32.xlu0 %v297, 1
        %v299 = vpop.permute.xlu0 %298
        %v301 = vrot.slane %v209, 5
        %v303 = vrot.slane %v209, 4
        %304 = vrot.lane.b32.xlu0 %v303, 127
        %v305 = vpop.permute.xlu0 %304
        %v308 = vrot.slane %v212, 3
        %309 = vrot.lane.b32.xlu0 %v308, 1
        %v310 = vpop.permute.xlu0 %309
        %v312 = vrot.slane %v212, 2
        %v314 = vrot.slane %v212, 1
        %315 = vrot.lane.b32.xlu0 %v314, 127
        %v316 = vpop.permute.xlu0 %315
        %319 = vrot.lane.b32.xlu0 %v215, 1
        %v320 = vpop.permute.xlu0 %319
        %v322 = vrot.slane %v215, 7
        %v324 = vrot.slane %v215, 6
        %325 = vrot.lane.b32.xlu0 %v324, 127
        %v326 = vpop.permute.xlu0 %325
        %v328 = vsel %vm271, %v206, %v294
        %v329 = vsel %vm273, %v328, %v299
        %v330 = vsel %vm275, %v329, %v301
        %v331 = vsel %vm277, %v330, %v305
        %v332 = vsel %vm279, %v331, %v310
        %v333 = vsel %vm281, %v332, %v312
        %v334 = vsel %vm283, %v333, %v316
        %v335 = vsel %vm271, %v320, %v322
        %v336 = vsel %vm273, %v335, %v326
        %v337 = vsel %vm275, %v336, 0.0
        %340 = vrot.lane.b32.xlu0 %v334, 127
        %v341 = vpop.permute.xlu0 %340
        %342 = vrot.lane.b32.xlu0 %v337, 127
        %v343 = vpop.permute.xlu0 %342
        %v346 = vpack.c.bf16 %v291, %v284
        %v347 = vpack.c.bf16 %v343, %v341
        %349 = vset.pattern.permute.xlu0 0
        %350 = vperm.xlu0 %349, %v188
        %v351 = vpop.permute.xlu0 %350
        %354 = vset.pattern.permute.xlu0 0
        %355 = vperm.xlu0 %354, %v189
        %v356 = vpop.permute.xlu0 %355
        %v360 = vunpack.c.l.b16 %v186
        %v361 = vunpack.c.l.b16 %v187
        %v362 = vpack.c.b16 %v361, %v360
        %vm363 = vcmask 261120
        %v365 = vsel %vm363, %v362, 0
        %367 = vmatpush.bf16.msra.mxu0 0
        %368 = vmatpush.bf16.msra.mxu0 0
        %369 = vmatpush.bf16.msra.mxu0 0
        %370 = vmatpush.bf16.msra.mxu0 0
        %371 = vmatpush.bf16.msra.mxu0 0
        %372 = vmatpush.bf16.msra.mxu0 0
        %373 = vmatpush.bf16.msra.mxu0 %v347
        %374 = vmatpush.bf16.msra.mxu0 %v346
        %375 = vmatmul.bf16.gmra.mxu0 %v365
        %v376 = vpop.f32.mrf.mxu0
        %v377 = vadd.f32 %v351, %v376
        %v378 = vpop.f32.mrf.mxu0
        %v379 = vadd.f32 %v356, %v378
        %380 = vdwg.mxu0
        %v381 = vmax.f32 %v377, 0.0
        %v382 = vmax.f32 %v379, 0.0
        %vm383 = vcmask 130048
        %384 = vst.msk [vmem:[%s177] sm:$0xff] %vm383, %v381
        %385 = vst.msk [vmem:[%s177 + $0x8] sm:$0xff] %vm383, %v382
        %v386 = vld [vmem:[%s193] sm:$0x1]
        %v387 = vld [vmem:[%s196] sm:$0x1]
        %s388 = sadd.s32 %s185, 3
        %s389 = scalar_lea.vmem %s182, %s388
        %v390 = vld [vmem:[%s389] sm:$0x1]
        %v391 = vld [vmem:[%s202] sm:$0x1]
        %v392 = vld [vmem:[%s205] sm:$0x1]
        %s393 = sadd.s32 %s388, 24
        %s394 = scalar_lea.vmem %s182, %s393
        %v395 = vld [vmem:[%s394] sm:$0x1]
        %v396 = vld [vmem:[%s211] sm:$0x1]
        %v397 = vld [vmem:[%s214] sm:$0x1]
        %s398 = sadd.s32 %s388, 48
        %s399 = scalar_lea.vmem %s182, %s398
        %v400 = vld [vmem:[%s399] sm:$0x1]
        %v402 = vrot.slane %v386, 7
        %403 = vrot.lane.b32.xlu0 %v402, 127
        %v404 = vpop.permute.xlu0 %403
        %v406 = vrot.slane %v386, 6
        %407 = vrot.lane.b32.xlu0 %v406, 126
        %v408 = vpop.permute.xlu0 %407
        %v411 = vrot.slane %v387, 5
        %v413 = vrot.slane %v387, 4
        %414 = vrot.lane.b32.xlu0 %v413, 127
        %v415 = vpop.permute.xlu0 %414
        %v417 = vrot.slane %v387, 3
        %418 = vrot.lane.b32.xlu0 %v417, 126
        %v419 = vpop.permute.xlu0 %418
        %v422 = vrot.slane %v390, 2
        %v424 = vrot.slane %v390, 1
        %425 = vrot.lane.b32.xlu0 %v424, 127
        %v426 = vpop.permute.xlu0 %425
        %428 = vrot.lane.b32.xlu0 %v390, 126
        %v429 = vpop.permute.xlu0 %428
        %v432 = vrot.slane %v391, 7
        %v434 = vrot.slane %v391, 6
        %435 = vrot.lane.b32.xlu0 %v434, 127
        %v436 = vpop.permute.xlu0 %435
        %v438 = vrot.slane %v391, 5
        %439 = vrot.lane.b32.xlu0 %v438, 126
        %v440 = vpop.permute.xlu0 %439
        %v443 = vrot.slane %v392, 4
        %v445 = vrot.slane %v392, 3
        %446 = vrot.lane.b32.xlu0 %v445, 127
        %v447 = vpop.permute.xlu0 %446
        %v449 = vrot.slane %v392, 2
        %450 = vrot.lane.b32.xlu0 %v449, 126
        %v451 = vpop.permute.xlu0 %450
        %v454 = vrot.slane %v395, 1
        %v456 = vsel %vm271, %v386, %v404
        %v457 = vsel %vm273, %v456, %v408
        %v458 = vsel %vm275, %v457, %v411
        %v459 = vsel %vm277, %v458, %v415
        %v460 = vsel %vm279, %v459, %v419
        %v461 = vsel %vm281, %v460, %v422
        %v462 = vsel %vm283, %v461, %v426
        %v463 = vsel %vm271, %v429, %v432
        %v464 = vsel %vm273, %v463, %v436
        %v465 = vsel %vm275, %v464, %v440
        %v466 = vsel %vm277, %v465, %v443
        %v467 = vsel %vm279, %v466, %v447
        %v468 = vsel %vm281, %v467, %v451
        %v469 = vsel %vm283, %v468, %v454
        %v470 = vrot.slane %v395, 7
        %471 = vrot.lane.b32.xlu0 %v470, 127
        %v472 = vpop.permute.xlu0 %471
        %v475 = vrot.slane %v396, 6
        %476 = vrot.lane.b32.xlu0 %v475, 1
        %v477 = vpop.permute.xlu0 %476
        %v479 = vrot.slane %v396, 5
        %v481 = vrot.slane %v396, 4
        %482 = vrot.lane.b32.xlu0 %v481, 127
        %v483 = vpop.permute.xlu0 %482
        %v486 = vrot.slane %v397, 3
        %487 = vrot.lane.b32.xlu0 %v486, 1
        %v488 = vpop.permute.xlu0 %487
        %v490 = vrot.slane %v397, 2
        %v492 = vrot.slane %v397, 1
        %493 = vrot.lane.b32.xlu0 %v492, 127
        %v494 = vpop.permute.xlu0 %493
        %497 = vrot.lane.b32.xlu0 %v400, 1
        %v498 = vpop.permute.xlu0 %497
        %v500 = vrot.slane %v400, 7
        %v502 = vrot.slane %v400, 6
        %503 = vrot.lane.b32.xlu0 %v502, 127
        %v504 = vpop.permute.xlu0 %503
        %v506 = vsel %vm271, %v395, %v472
        %v507 = vsel %vm273, %v506, %v477
        %v508 = vsel %vm275, %v507, %v479
        %v509 = vsel %vm277, %v508, %v483
        %v510 = vsel %vm279, %v509, %v488
        %v511 = vsel %vm281, %v510, %v490
        %v512 = vsel %vm283, %v511, %v494
        %v513 = vsel %vm271, %v498, %v500
        %v514 = vsel %vm273, %v513, %v504
        %v515 = vsel %vm275, %v514, 0.0
        %518 = vrot.lane.b32.xlu0 %v512, 127
        %v519 = vpop.permute.xlu0 %518
        %520 = vrot.lane.b32.xlu0 %v515, 127
        %v521 = vpop.permute.xlu0 %520
        %v524 = vpack.c.bf16 %v469, %v462
        %v525 = vpack.c.bf16 %v521, %v519
        %526 = vmatpush.bf16.msra.mxu0 0
        %527 = vmatpush.bf16.msra.mxu0 0
        %528 = vmatpush.bf16.msra.mxu0 0
        %529 = vmatpush.bf16.msra.mxu0 0
        %530 = vmatpush.bf16.msra.mxu0 0
        %531 = vmatpush.bf16.msra.mxu0 0
        %532 = vmatpush.bf16.msra.mxu0 %v525
        %533 = vmatpush.bf16.msra.mxu0 %v524
        %534 = vmatmul.bf16.gmra.mxu0 %v365
        %v535 = vpop.f32.mrf.mxu0
        %v536 = vadd.f32 %v351, %v535
        %v537 = vpop.f32.mrf.mxu0
        %v538 = vadd.f32 %v356, %v537
        %539 = vdwg.mxu0
        %v540 = vmax.f32 %v536, 0.0
        %v541 = vmax.f32 %v538, 0.0
        %s542 = scalar_lea.vmem %s177, 16 [#allocation2]
        %543 = vst.msk [vmem:[%s542] sm:$0xff] %vm383, %v540
        %544 = vst.msk [vmem:[%s542 + $0x8] sm:$0xff] %vm383, %v541
        %v545 = vld [vmem:[%s196] sm:$0x1]
        %v546 = vld [vmem:[%s389] sm:$0x1]
        %s547 = sadd.s32 %s185, 4
        %s548 = scalar_lea.vmem %s182, %s547
        %v549 = vld [vmem:[%s548] sm:$0x1]
        %v550 = vld [vmem:[%s205] sm:$0x1]
        %v551 = vld [vmem:[%s394] sm:$0x1]
        %s552 = sadd.s32 %s547, 24
        %s553 = scalar_lea.vmem %s182, %s552
        %v554 = vld [vmem:[%s553] sm:$0x1]
        %v555 = vld [vmem:[%s214] sm:$0x1]
        %v556 = vld [vmem:[%s399] sm:$0x1]
        %s557 = sadd.s32 %s547, 48
        %s558 = scalar_lea.vmem %s182, %s557
        %v559 = vld [vmem:[%s558] sm:$0x1]
        %v561 = vrot.slane %v545, 7
        %562 = vrot.lane.b32.xlu0 %v561, 127
        %v563 = vpop.permute.xlu0 %562
        %v565 = vrot.slane %v545, 6
        %566 = vrot.lane.b32.xlu0 %v565, 126
        %v567 = vpop.permute.xlu0 %566
        %v570 = vrot.slane %v546, 5
        %v572 = vrot.slane %v546, 4
        %573 = vrot.lane.b32.xlu0 %v572, 127
        %v574 = vpop.permute.xlu0 %573
        %v576 = vrot.slane %v546, 3
        %577 = vrot.lane.b32.xlu0 %v576, 126
        %v578 = vpop.permute.xlu0 %577
        %v581 = vrot.slane %v549, 2
        %v583 = vrot.slane %v549, 1
        %584 = vrot.lane.b32.xlu0 %v583, 127
        %v585 = vpop.permute.xlu0 %584
        %587 = vrot.lane.b32.xlu0 %v549, 126
        %v588 = vpop.permute.xlu0 %587
        %v591 = vrot.slane %v550, 7
        %v593 = vrot.slane %v550, 6
        %594 = vrot.lane.b32.xlu0 %v593, 127
        %v595 = vpop.permute.xlu0 %594
        %v597 = vrot.slane %v550, 5
        %598 = vrot.lane.b32.xlu0 %v597, 126
        %v599 = vpop.permute.xlu0 %598
        %v602 = vrot.slane %v551, 4
        %v604 = vrot.slane %v551, 3
        %605 = vrot.lane.b32.xlu0 %v604, 127
        %v606 = vpop.permute.xlu0 %605
        %v608 = vrot.slane %v551, 2
        %609 = vrot.lane.b32.xlu0 %v608, 126
        %v610 = vpop.permute.xlu0 %609
        %v613 = vrot.slane %v554, 1
        %v615 = vsel %vm271, %v545, %v563
        %v616 = vsel %vm273, %v615, %v567
        %v617 = vsel %vm275, %v616, %v570
        %v618 = vsel %vm277, %v617, %v574
        %v619 = vsel %vm279, %v618, %v578
        %v620 = vsel %vm281, %v619, %v581
        %v621 = vsel %vm283, %v620, %v585
        %v622 = vsel %vm271, %v588, %v591
        %v623 = vsel %vm273, %v622, %v595
        %v624 = vsel %vm275, %v623, %v599
        %v625 = vsel %vm277, %v624, %v602
        %v626 = vsel %vm279, %v625, %v606
        %v627 = vsel %vm281, %v626, %v610
        %v628 = vsel %vm283, %v627, %v613
        %v629 = vrot.slane %v554, 7
        %630 = vrot.lane.b32.xlu0 %v629, 127
        %v631 = vpop.permute.xlu0 %630
        %v634 = vrot.slane %v555, 6
        %635 = vrot.lane.b32.xlu0 %v634, 1
        %v636 = vpop.permute.xlu0 %635
        %v638 = vrot.slane %v555, 5
        %v640 = vrot.slane %v555, 4
        %641 = vrot.lane.b32.xlu0 %v640, 127
        %v642 = vpop.permute.xlu0 %641
        %v645 = vrot.slane %v556, 3
        %646 = vrot.lane.b32.xlu0 %v645, 1
        %v647 = vpop.permute.xlu0 %646
        %v649 = vrot.slane %v556, 2
        %v651 = vrot.slane %v556, 1
        %652 = vrot.lane.b32.xlu0 %v651, 127
        %v653 = vpop.permute.xlu0 %652
        %656 = vrot.lane.b32.xlu0 %v559, 1
        %v657 = vpop.permute.xlu0 %656
        %v659 = vrot.slane %v559, 7
        %v661 = vrot.slane %v559, 6
        %662 = vrot.lane.b32.xlu0 %v661, 127
        %v663 = vpop.permute.xlu0 %662
        %v665 = vsel %vm271, %v554, %v631
        %v666 = vsel %vm273, %v665, %v636
        %v667 = vsel %vm275, %v666, %v638
        %v668 = vsel %vm277, %v667, %v642
        %v669 = vsel %vm279, %v668, %v647
        %v670 = vsel %vm281, %v669, %v649
        %v671 = vsel %vm283, %v670, %v653
        %v672 = vsel %vm271, %v657, %v659
        %v673 = vsel %vm273, %v672, %v663
        %v674 = vsel %vm275, %v673, 0.0
        %677 = vrot.lane.b32.xlu0 %v671, 127
        %v678 = vpop.permute.xlu0 %677
        %679 = vrot.lane.b32.xlu0 %v674, 127
        %v680 = vpop.permute.xlu0 %679
        %v683 = vpack.c.bf16 %v628, %v621
        %v684 = vpack.c.bf16 %v680, %v678
        %685 = vmatpush.bf16.msra.mxu0 0
        %686 = vmatpush.bf16.msra.mxu0 0
        %687 = vmatpush.bf16.msra.mxu0 0
        %688 = vmatpush.bf16.msra.mxu0 0
        %689 = vmatpush.bf16.msra.mxu0 0
        %690 = vmatpush.bf16.msra.mxu0 0
        %691 = vmatpush.bf16.msra.mxu0 %v684
        %692 = vmatpush.bf16.msra.mxu0 %v683
        %693 = vmatmul.bf16.gmra.mxu0 %v365
        %v694 = vpop.f32.mrf.mxu0
        %v695 = vadd.f32 %v351, %v694
        %v696 = vpop.f32.mrf.mxu0
        %v697 = vadd.f32 %v356, %v696
        %698 = vdwg.mxu0
        %v699 = vmax.f32 %v695, 0.0
        %v700 = vmax.f32 %v697, 0.0
        %s701 = scalar_lea.vmem %s177, 32 [#allocation2]
        %702 = vst.msk [vmem:[%s701] sm:$0xff] %vm383, %v699
        %703 = vst.msk [vmem:[%s701 + $0x8] sm:$0xff] %vm383, %v700
        %v704 = vld [vmem:[%s389] sm:$0x1]
        %v705 = vld [vmem:[%s548] sm:$0x1]
        %s706 = sadd.s32 %s185, 5
        %s707 = scalar_lea.vmem %s182, %s706
        %v708 = vld [vmem:[%s707] sm:$0x1]
        %v709 = vld [vmem:[%s394] sm:$0x1]
        %v710 = vld [vmem:[%s553] sm:$0x1]
        %s711 = sadd.s32 %s706, 24
        %s712 = scalar_lea.vmem %s182, %s711
        %v713 = vld [vmem:[%s712] sm:$0x1]
        %v714 = vld [vmem:[%s399] sm:$0x1]
        %v715 = vld [vmem:[%s558] sm:$0x1]
        %s716 = sadd.s32 %s706, 48
        %s717 = scalar_lea.vmem %s182, %s716
        %v718 = vld [vmem:[%s717] sm:$0x1]
        %v720 = vrot.slane %v704, 7
        %721 = vrot.lane.b32.xlu0 %v720, 127
        %v722 = vpop.permute.xlu0 %721
        %v724 = vrot.slane %v704, 6
        %725 = vrot.lane.b32.xlu0 %v724, 126
        %v726 = vpop.permute.xlu0 %725
        %v729 = vrot.slane %v705, 5
        %v731 = vrot.slane %v705, 4
        %732 = vrot.lane.b32.xlu0 %v731, 127
        %v733 = vpop.permute.xlu0 %732
        %v735 = vrot.slane %v705, 3
        %736 = vrot.lane.b32.xlu0 %v735, 126
        %v737 = vpop.permute.xlu0 %736
        %v740 = vrot.slane %v708, 2
        %v742 = vrot.slane %v708, 1
        %743 = vrot.lane.b32.xlu0 %v742, 127
        %v744 = vpop.permute.xlu0 %743
        %746 = vrot.lane.b32.xlu0 %v708, 126
        %v747 = vpop.permute.xlu0 %746
        %v750 = vrot.slane %v709, 7
        %v752 = vrot.slane %v709, 6
        %753 = vrot.lane.b32.xlu0 %v752, 127
        %v754 = vpop.permute.xlu0 %753
        %v756 = vrot.slane %v709, 5
        %757 = vrot.lane.b32.xlu0 %v756, 126
        %v758 = vpop.permute.xlu0 %757
        %v761 = vrot.slane %v710, 4
        %v763 = vrot.slane %v710, 3
        %764 = vrot.lane.b32.xlu0 %v763, 127
        %v765 = vpop.permute.xlu0 %764
        %v767 = vrot.slane %v710, 2
        %768 = vrot.lane.b32.xlu0 %v767, 126
        %v769 = vpop.permute.xlu0 %768
        %v772 = vrot.slane %v713, 1
        %v774 = vsel %vm271, %v704, %v722
        %v775 = vsel %vm273, %v774, %v726
        %v776 = vsel %vm275, %v775, %v729
        %v777 = vsel %vm277, %v776, %v733
        %v778 = vsel %vm279, %v777, %v737
        %v779 = vsel %vm281, %v778, %v740
        %v780 = vsel %vm283, %v779, %v744
        %v781 = vsel %vm271, %v747, %v750
        %v782 = vsel %vm273, %v781, %v754
        %v783 = vsel %vm275, %v782, %v758
        %v784 = vsel %vm277, %v783, %v761
        %v785 = vsel %vm279, %v784, %v765
        %v786 = vsel %vm281, %v785, %v769
        %v787 = vsel %vm283, %v786, %v772
        %v788 = vrot.slane %v713, 7
        %789 = vrot.lane.b32.xlu0 %v788, 127
        %v790 = vpop.permute.xlu0 %789
        %v793 = vrot.slane %v714, 6
        %794 = vrot.lane.b32.xlu0 %v793, 1
        %v795 = vpop.permute.xlu0 %794
        %v797 = vrot.slane %v714, 5
        %v799 = vrot.slane %v714, 4
        %800 = vrot.lane.b32.xlu0 %v799, 127
        %v801 = vpop.permute.xlu0 %800
        %v804 = vrot.slane %v715, 3
        %805 = vrot.lane.b32.xlu0 %v804, 1
        %v806 = vpop.permute.xlu0 %805
        %v808 = vrot.slane %v715, 2
        %v810 = vrot.slane %v715, 1
        %811 = vrot.lane.b32.xlu0 %v810, 127
        %v812 = vpop.permute.xlu0 %811
        %815 = vrot.lane.b32.xlu0 %v718, 1
        %v816 = vpop.permute.xlu0 %815
        %v818 = vrot.slane %v718, 7
        %v820 = vrot.slane %v718, 6
        %821 = vrot.lane.b32.xlu0 %v820, 127
        %v822 = vpop.permute.xlu0 %821
        %v824 = vsel %vm271, %v713, %v790
        %v825 = vsel %vm273, %v824, %v795
        %v826 = vsel %vm275, %v825, %v797
        %v827 = vsel %vm277, %v826, %v801
        %v828 = vsel %vm279, %v827, %v806
        %v829 = vsel %vm281, %v828, %v808
        %v830 = vsel %vm283, %v829, %v812
        %v831 = vsel %vm271, %v816, %v818
        %v832 = vsel %vm273, %v831, %v822
        %v833 = vsel %vm275, %v832, 0.0
        %836 = vrot.lane.b32.xlu0 %v830, 127
        %v837 = vpop.permute.xlu0 %836
        %838 = vrot.lane.b32.xlu0 %v833, 127
        %v839 = vpop.permute.xlu0 %838
        %v842 = vpack.c.bf16 %v787, %v780
        %v843 = vpack.c.bf16 %v839, %v837
        %844 = vmatpush.bf16.msra.mxu0 0
        %845 = vmatpush.bf16.msra.mxu0 0
        %846 = vmatpush.bf16.msra.mxu0 0
        %847 = vmatpush.bf16.msra.mxu0 0
        %848 = vmatpush.bf16.msra.mxu0 0
        %849 = vmatpush.bf16.msra.mxu0 0
        %850 = vmatpush.bf16.msra.mxu0 %v843
        %851 = vmatpush.bf16.msra.mxu0 %v842
        %852 = vmatmul.bf16.gmra.mxu0 %v365
        %v853 = vpop.f32.mrf.mxu0
        %v854 = vadd.f32 %v351, %v853
        %v855 = vpop.f32.mrf.mxu0
        %v856 = vadd.f32 %v356, %v855
        %857 = vdwg.mxu0
        %v858 = vmax.f32 %v854, 0.0
        %v859 = vmax.f32 %v856, 0.0
        %s860 = scalar_lea.vmem %s177, 48 [#allocation2]
        %861 = vst.msk [vmem:[%s860] sm:$0xff] %vm383, %v858
        %862 = vst.msk [vmem:[%s860 + $0x8] sm:$0xff] %vm383, %v859
        %v863 = vld [vmem:[%s548] sm:$0x1]
        %v864 = vld [vmem:[%s707] sm:$0x1]
        %s865 = sadd.s32 %s185, 6
        %s866 = scalar_lea.vmem %s182, %s865
        %v867 = vld [vmem:[%s866] sm:$0x1]
        %v868 = vld [vmem:[%s553] sm:$0x1]
        %v869 = vld [vmem:[%s712] sm:$0x1]
        %s870 = sadd.s32 %s865, 24
        %s871 = scalar_lea.vmem %s182, %s870
        %v872 = vld [vmem:[%s871] sm:$0x1]
        %v873 = vld [vmem:[%s558] sm:$0x1]
        %v874 = vld [vmem:[%s717] sm:$0x1]
        %s875 = sadd.s32 %s865, 48
        %s876 = scalar_lea.vmem %s182, %s875
        %v877 = vld [vmem:[%s876] sm:$0x1]
        %v879 = vrot.slane %v863, 7
        %880 = vrot.lane.b32.xlu0 %v879, 127
        %v881 = vpop.permute.xlu0 %880
        %v883 = vrot.slane %v863, 6
        %884 = vrot.lane.b32.xlu0 %v883, 126
        %v885 = vpop.permute.xlu0 %884
        %v888 = vrot.slane %v864, 5
        %v890 = vrot.slane %v864, 4
        %891 = vrot.lane.b32.xlu0 %v890, 127
        %v892 = vpop.permute.xlu0 %891
        %v894 = vrot.slane %v864, 3
        %895 = vrot.lane.b32.xlu0 %v894, 126
        %v896 = vpop.permute.xlu0 %895
        %v899 = vrot.slane %v867, 2
        %v901 = vrot.slane %v867, 1
        %902 = vrot.lane.b32.xlu0 %v901, 127
        %v903 = vpop.permute.xlu0 %902
        %905 = vrot.lane.b32.xlu0 %v867, 126
        %v906 = vpop.permute.xlu0 %905
        %v909 = vrot.slane %v868, 7
        %v911 = vrot.slane %v868, 6
        %912 = vrot.lane.b32.xlu0 %v911, 127
        %v913 = vpop.permute.xlu0 %912
        %v915 = vrot.slane %v868, 5
        %916 = vrot.lane.b32.xlu0 %v915, 126
        %v917 = vpop.permute.xlu0 %916
        %v920 = vrot.slane %v869, 4
        %v922 = vrot.slane %v869, 3
        %923 = vrot.lane.b32.xlu0 %v922, 127
        %v924 = vpop.permute.xlu0 %923
        %v926 = vrot.slane %v869, 2
        %927 = vrot.lane.b32.xlu0 %v926, 126
        %v928 = vpop.permute.xlu0 %927
        %v931 = vrot.slane %v872, 1
        %v933 = vsel %vm271, %v863, %v881
        %v934 = vsel %vm273, %v933, %v885
        %v935 = vsel %vm275, %v934, %v888
        %v936 = vsel %vm277, %v935, %v892
        %v937 = vsel %vm279, %v936, %v896
        %v938 = vsel %vm281, %v937, %v899
        %v939 = vsel %vm283, %v938, %v903
        %v940 = vsel %vm271, %v906, %v909
        %v941 = vsel %vm273, %v940, %v913
        %v942 = vsel %vm275, %v941, %v917
        %v943 = vsel %vm277, %v942, %v920
        %v944 = vsel %vm279, %v943, %v924
        %v945 = vsel %vm281, %v944, %v928
        %v946 = vsel %vm283, %v945, %v931
        %v947 = vrot.slane %v872, 7
        %948 = vrot.lane.b32.xlu0 %v947, 127
        %v949 = vpop.permute.xlu0 %948
        %v952 = vrot.slane %v873, 6
        %953 = vrot.lane.b32.xlu0 %v952, 1
        %v954 = vpop.permute.xlu0 %953
        %v956 = vrot.slane %v873, 5
        %v958 = vrot.slane %v873, 4
        %959 = vrot.lane.b32.xlu0 %v958, 127
        %v960 = vpop.permute.xlu0 %959
        %v963 = vrot.slane %v874, 3
        %964 = vrot.lane.b32.xlu0 %v963, 1
        %v965 = vpop.permute.xlu0 %964
        %v967 = vrot.slane %v874, 2
        %v969 = vrot.slane %v874, 1
        %970 = vrot.lane.b32.xlu0 %v969, 127
        %v971 = vpop.permute.xlu0 %970
        %974 = vrot.lane.b32.xlu0 %v877, 1
        %v975 = vpop.permute.xlu0 %974
        %v977 = vrot.slane %v877, 7
        %v979 = vrot.slane %v877, 6
        %980 = vrot.lane.b32.xlu0 %v979, 127
        %v981 = vpop.permute.xlu0 %980
        %v983 = vsel %vm271, %v872, %v949
        %v984 = vsel %vm273, %v983, %v954
        %v985 = vsel %vm275, %v984, %v956
        %v986 = vsel %vm277, %v985, %v960
        %v987 = vsel %vm279, %v986, %v965
        %v988 = vsel %vm281, %v987, %v967
        %v989 = vsel %vm283, %v988, %v971
        %v990 = vsel %vm271, %v975, %v977
        %v991 = vsel %vm273, %v990, %v981
        %v992 = vsel %vm275, %v991, 0.0
        %995 = vrot.lane.b32.xlu0 %v989, 127
        %v996 = vpop.permute.xlu0 %995
        %997 = vrot.lane.b32.xlu0 %v992, 127
        %v998 = vpop.permute.xlu0 %997
        %v1001 = vpack.c.bf16 %v946, %v939
        %v1002 = vpack.c.bf16 %v998, %v996
        %1003 = vmatpush.bf16.msra.mxu0 0
        %1004 = vmatpush.bf16.msra.mxu0 0
        %1005 = vmatpush.bf16.msra.mxu0 0
        %1006 = vmatpush.bf16.msra.mxu0 0
        %1007 = vmatpush.bf16.msra.mxu0 0
        %1008 = vmatpush.bf16.msra.mxu0 0
        %1009 = vmatpush.bf16.msra.mxu0 %v1002
        %1010 = vmatpush.bf16.msra.mxu0 %v1001
        %1011 = vmatmul.bf16.gmra.mxu0 %v365
        %v1012 = vpop.f32.mrf.mxu0
        %v1013 = vadd.f32 %v351, %v1012
        %v1014 = vpop.f32.mrf.mxu0
        %v1015 = vadd.f32 %v356, %v1014
        %1016 = vdwg.mxu0
        %v1017 = vmax.f32 %v1013, 0.0
        %v1018 = vmax.f32 %v1015, 0.0
        %s1019 = scalar_lea.vmem %s177, 64 [#allocation2]
        %1020 = vst.msk [vmem:[%s1019] sm:$0xff] %vm383, %v1017
        %1021 = vst.msk [vmem:[%s1019 + $0x8] sm:$0xff] %vm383, %v1018
        %v1022 = vld [vmem:[%s707] sm:$0x1]
        %v1023 = vld [vmem:[%s866] sm:$0x1]
        %s1024 = sadd.s32 %s185, 7
        %s1025 = scalar_lea.vmem %s182, %s1024
        %v1026 = vld [vmem:[%s1025] sm:$0x1]
        %v1027 = vld [vmem:[%s712] sm:$0x1]
        %v1028 = vld [vmem:[%s871] sm:$0x1]
        %s1029 = sadd.s32 %s1024, 24
        %s1030 = scalar_lea.vmem %s182, %s1029
        %v1031 = vld [vmem:[%s1030] sm:$0x1]
        %v1032 = vld [vmem:[%s717] sm:$0x1]
        %v1033 = vld [vmem:[%s876] sm:$0x1]
        %s1034 = sadd.s32 %s1024, 48
        %s1035 = scalar_lea.vmem %s182, %s1034
        %v1036 = vld [vmem:[%s1035] sm:$0x1]
        %v1038 = vrot.slane %v1022, 7
        %1039 = vrot.lane.b32.xlu0 %v1038, 127
        %v1040 = vpop.permute.xlu0 %1039
        %v1042 = vrot.slane %v1022, 6
        %1043 = vrot.lane.b32.xlu0 %v1042, 126
        %v1044 = vpop.permute.xlu0 %1043
        %v1047 = vrot.slane %v1023, 5
        %v1049 = vrot.slane %v1023, 4
        %1050 = vrot.lane.b32.xlu0 %v1049, 127
        %v1051 = vpop.permute.xlu0 %1050
        %v1053 = vrot.slane %v1023, 3
        %1054 = vrot.lane.b32.xlu0 %v1053, 126
        %v1055 = vpop.permute.xlu0 %1054
        %v1058 = vrot.slane %v1026, 2
        %v1060 = vrot.slane %v1026, 1
        %1061 = vrot.lane.b32.xlu0 %v1060, 127
        %v1062 = vpop.permute.xlu0 %1061
        %1064 = vrot.lane.b32.xlu0 %v1026, 126
        %v1065 = vpop.permute.xlu0 %1064
        %v1068 = vrot.slane %v1027, 7
        %v1070 = vrot.slane %v1027, 6
        %1071 = vrot.lane.b32.xlu0 %v1070, 127
        %v1072 = vpop.permute.xlu0 %1071
        %v1074 = vrot.slane %v1027, 5
        %1075 = vrot.lane.b32.xlu0 %v1074, 126
        %v1076 = vpop.permute.xlu0 %1075
        %v1079 = vrot.slane %v1028, 4
        %v1081 = vrot.slane %v1028, 3
        %1082 = vrot.lane.b32.xlu0 %v1081, 127
        %v1083 = vpop.permute.xlu0 %1082
        %v1085 = vrot.slane %v1028, 2
        %1086 = vrot.lane.b32.xlu0 %v1085, 126
        %v1087 = vpop.permute.xlu0 %1086
        %v1090 = vrot.slane %v1031, 1
        %v1092 = vsel %vm271, %v1022, %v1040
        %v1093 = vsel %vm273, %v1092, %v1044
        %v1094 = vsel %vm275, %v1093, %v1047
        %v1095 = vsel %vm277, %v1094, %v1051
        %v1096 = vsel %vm279, %v1095, %v1055
        %v1097 = vsel %vm281, %v1096, %v1058
        %v1098 = vsel %vm283, %v1097, %v1062
        %v1099 = vsel %vm271, %v1065, %v1068
        %v1100 = vsel %vm273, %v1099, %v1072
        %v1101 = vsel %vm275, %v1100, %v1076
        %v1102 = vsel %vm277, %v1101, %v1079
        %v1103 = vsel %vm279, %v1102, %v1083
        %v1104 = vsel %vm281, %v1103, %v1087
        %v1105 = vsel %vm283, %v1104, %v1090
        %v1106 = vrot.slane %v1031, 7
        %1107 = vrot.lane.b32.xlu0 %v1106, 127
        %v1108 = vpop.permute.xlu0 %1107
        %v1111 = vrot.slane %v1032, 6
        %1112 = vrot.lane.b32.xlu0 %v1111, 1
        %v1113 = vpop.permute.xlu0 %1112
        %v1115 = vrot.slane %v1032, 5
        %v1117 = vrot.slane %v1032, 4
        %1118 = vrot.lane.b32.xlu0 %v1117, 127
        %v1119 = vpop.permute.xlu0 %1118
        %v1122 = vrot.slane %v1033, 3
        %1123 = vrot.lane.b32.xlu0 %v1122, 1
        %v1124 = vpop.permute.xlu0 %1123
        %v1126 = vrot.slane %v1033, 2
        %v1128 = vrot.slane %v1033, 1
        %1129 = vrot.lane.b32.xlu0 %v1128, 127
        %v1130 = vpop.permute.xlu0 %1129
        %1133 = vrot.lane.b32.xlu0 %v1036, 1
        %v1134 = vpop.permute.xlu0 %1133
        %v1136 = vrot.slane %v1036, 7
        %v1138 = vrot.slane %v1036, 6
        %1139 = vrot.lane.b32.xlu0 %v1138, 127
        %v1140 = vpop.permute.xlu0 %1139
        %v1142 = vsel %vm271, %v1031, %v1108
        %v1143 = vsel %vm273, %v1142, %v1113
        %v1144 = vsel %vm275, %v1143, %v1115
        %v1145 = vsel %vm277, %v1144, %v1119
        %v1146 = vsel %vm279, %v1145, %v1124
        %v1147 = vsel %vm281, %v1146, %v1126
        %v1148 = vsel %vm283, %v1147, %v1130
        %v1149 = vsel %vm271, %v1134, %v1136
        %v1150 = vsel %vm273, %v1149, %v1140
        %v1151 = vsel %vm275, %v1150, 0.0
        %1154 = vrot.lane.b32.xlu0 %v1148, 127
        %v1155 = vpop.permute.xlu0 %1154
        %1156 = vrot.lane.b32.xlu0 %v1151, 127
        %v1157 = vpop.permute.xlu0 %1156
        %v1160 = vpack.c.bf16 %v1105, %v1098
        %v1161 = vpack.c.bf16 %v1157, %v1155
        %1162 = vmatpush.bf16.msra.mxu0 0
        %1163 = vmatpush.bf16.msra.mxu0 0
        %1164 = vmatpush.bf16.msra.mxu0 0
        %1165 = vmatpush.bf16.msra.mxu0 0
        %1166 = vmatpush.bf16.msra.mxu0 0
        %1167 = vmatpush.bf16.msra.mxu0 0
        %1168 = vmatpush.bf16.msra.mxu0 %v1161
        %1169 = vmatpush.bf16.msra.mxu0 %v1160
        %1170 = vmatmul.bf16.gmra.mxu0 %v365
        %v1171 = vpop.f32.mrf.mxu0
        %v1172 = vadd.f32 %v351, %v1171
        %v1173 = vpop.f32.mrf.mxu0
        %v1174 = vadd.f32 %v356, %v1173
        %1175 = vdwg.mxu0
        %v1176 = vmax.f32 %v1172, 0.0
        %v1177 = vmax.f32 %v1174, 0.0
        %s1178 = scalar_lea.vmem %s177, 80 [#allocation2]
        %1179 = vst.msk [vmem:[%s1178] sm:$0xff] %vm383, %v1176
        %1180 = vst.msk [vmem:[%s1178 + $0x8] sm:$0xff] %vm383, %v1177
        %v1181 = vld [vmem:[%s866] sm:$0x1]
        %v1182 = vld [vmem:[%s1025] sm:$0x1]
        %s1183 = sadd.s32 %s185, 8
        %s1184 = scalar_lea.vmem %s182, %s1183
        %v1185 = vld [vmem:[%s1184] sm:$0x1]
        %v1186 = vld [vmem:[%s871] sm:$0x1]
        %v1187 = vld [vmem:[%s1030] sm:$0x1]
        %s1188 = sadd.s32 %s1183, 24
        %s1189 = scalar_lea.vmem %s182, %s1188
        %v1190 = vld [vmem:[%s1189] sm:$0x1]
        %v1191 = vld [vmem:[%s876] sm:$0x1]
        %v1192 = vld [vmem:[%s1035] sm:$0x1]
        %s1193 = sadd.s32 %s1183, 48
        %s1194 = scalar_lea.vmem %s182, %s1193
        %v1195 = vld [vmem:[%s1194] sm:$0x1]
        %v1197 = vrot.slane %v1181, 7
        %1198 = vrot.lane.b32.xlu0 %v1197, 127
        %v1199 = vpop.permute.xlu0 %1198
        %v1201 = vrot.slane %v1181, 6
        %1202 = vrot.lane.b32.xlu0 %v1201, 126
        %v1203 = vpop.permute.xlu0 %1202
        %v1206 = vrot.slane %v1182, 5
        %v1208 = vrot.slane %v1182, 4
        %1209 = vrot.lane.b32.xlu0 %v1208, 127
        %v1210 = vpop.permute.xlu0 %1209
        %v1212 = vrot.slane %v1182, 3
        %1213 = vrot.lane.b32.xlu0 %v1212, 126
        %v1214 = vpop.permute.xlu0 %1213
        %v1217 = vrot.slane %v1185, 2
        %v1219 = vrot.slane %v1185, 1
        %1220 = vrot.lane.b32.xlu0 %v1219, 127
        %v1221 = vpop.permute.xlu0 %1220
        %1223 = vrot.lane.b32.xlu0 %v1185, 126
        %v1224 = vpop.permute.xlu0 %1223
        %v1227 = vrot.slane %v1186, 7
        %v1229 = vrot.slane %v1186, 6
        %1230 = vrot.lane.b32.xlu0 %v1229, 127
        %v1231 = vpop.permute.xlu0 %1230
        %v1233 = vrot.slane %v1186, 5
        %1234 = vrot.lane.b32.xlu0 %v1233, 126
        %v1235 = vpop.permute.xlu0 %1234
        %v1238 = vrot.slane %v1187, 4
        %v1240 = vrot.slane %v1187, 3
        %1241 = vrot.lane.b32.xlu0 %v1240, 127
        %v1242 = vpop.permute.xlu0 %1241
        %v1244 = vrot.slane %v1187, 2
        %1245 = vrot.lane.b32.xlu0 %v1244, 126
        %v1246 = vpop.permute.xlu0 %1245
        %v1249 = vrot.slane %v1190, 1
        %v1251 = vsel %vm271, %v1181, %v1199
        %v1252 = vsel %vm273, %v1251, %v1203
        %v1253 = vsel %vm275, %v1252, %v1206
        %v1254 = vsel %vm277, %v1253, %v1210
        %v1255 = vsel %vm279, %v1254, %v1214
        %v1256 = vsel %vm281, %v1255, %v1217
        %v1257 = vsel %vm283, %v1256, %v1221
        %v1258 = vsel %vm271, %v1224, %v1227
        %v1259 = vsel %vm273, %v1258, %v1231
        %v1260 = vsel %vm275, %v1259, %v1235
        %v1261 = vsel %vm277, %v1260, %v1238
        %v1262 = vsel %vm279, %v1261, %v1242
        %v1263 = vsel %vm281, %v1262, %v1246
        %v1264 = vsel %vm283, %v1263, %v1249
        %v1265 = vrot.slane %v1190, 7
        %1266 = vrot.lane.b32.xlu0 %v1265, 127
        %v1267 = vpop.permute.xlu0 %1266
        %v1270 = vrot.slane %v1191, 6
        %1271 = vrot.lane.b32.xlu0 %v1270, 1
        %v1272 = vpop.permute.xlu0 %1271
        %v1274 = vrot.slane %v1191, 5
        %v1276 = vrot.slane %v1191, 4
        %1277 = vrot.lane.b32.xlu0 %v1276, 127
        %v1278 = vpop.permute.xlu0 %1277
        %v1281 = vrot.slane %v1192, 3
        %1282 = vrot.lane.b32.xlu0 %v1281, 1
        %v1283 = vpop.permute.xlu0 %1282
        %v1285 = vrot.slane %v1192, 2
        %v1287 = vrot.slane %v1192, 1
        %1288 = vrot.lane.b32.xlu0 %v1287, 127
        %v1289 = vpop.permute.xlu0 %1288
        %1292 = vrot.lane.b32.xlu0 %v1195, 1
        %v1293 = vpop.permute.xlu0 %1292
        %v1295 = vrot.slane %v1195, 7
        %v1297 = vrot.slane %v1195, 6
        %1298 = vrot.lane.b32.xlu0 %v1297, 127
        %v1299 = vpop.permute.xlu0 %1298
        %v1301 = vsel %vm271, %v1190, %v1267
        %v1302 = vsel %vm273, %v1301, %v1272
        %v1303 = vsel %vm275, %v1302, %v1274
        %v1304 = vsel %vm277, %v1303, %v1278
        %v1305 = vsel %vm279, %v1304, %v1283
        %v1306 = vsel %vm281, %v1305, %v1285
        %v1307 = vsel %vm283, %v1306, %v1289
        %v1308 = vsel %vm271, %v1293, %v1295
        %v1309 = vsel %vm273, %v1308, %v1299
        %v1310 = vsel %vm275, %v1309, 0.0
        %1313 = vrot.lane.b32.xlu0 %v1307, 127
        %v1314 = vpop.permute.xlu0 %1313
        %1315 = vrot.lane.b32.xlu0 %v1310, 127
        %v1316 = vpop.permute.xlu0 %1315
        %v1319 = vpack.c.bf16 %v1264, %v1257
        %v1320 = vpack.c.bf16 %v1316, %v1314
        %1321 = vmatpush.bf16.msra.mxu0 0
        %1322 = vmatpush.bf16.msra.mxu0 0
        %1323 = vmatpush.bf16.msra.mxu0 0
        %1324 = vmatpush.bf16.msra.mxu0 0
        %1325 = vmatpush.bf16.msra.mxu0 0
        %1326 = vmatpush.bf16.msra.mxu0 0
        %1327 = vmatpush.bf16.msra.mxu0 %v1320
        %1328 = vmatpush.bf16.msra.mxu0 %v1319
        %1329 = vmatmul.bf16.gmra.mxu0 %v365
        %v1330 = vpop.f32.mrf.mxu0
        %v1331 = vadd.f32 %v351, %v1330
        %v1332 = vpop.f32.mrf.mxu0
        %v1333 = vadd.f32 %v356, %v1332
        %1334 = vdwg.mxu0
        %v1335 = vmax.f32 %v1331, 0.0
        %v1336 = vmax.f32 %v1333, 0.0
        %s1337 = scalar_lea.vmem %s177, 96 [#allocation2]
        %1338 = vst.msk [vmem:[%s1337] sm:$0xff] %vm383, %v1335
        %1339 = vst.msk [vmem:[%s1337 + $0x8] sm:$0xff] %vm383, %v1336
        %v1340 = vld [vmem:[%s1025] sm:$0x1]
        %v1341 = vld [vmem:[%s1184] sm:$0x1]
        %s1342 = sadd.s32 %s185, 9
        %s1343 = scalar_lea.vmem %s182, %s1342
        %v1344 = vld [vmem:[%s1343] sm:$0x1]
        %v1345 = vld [vmem:[%s1030] sm:$0x1]
        %v1346 = vld [vmem:[%s1189] sm:$0x1]
        %s1347 = sadd.s32 %s1342, 24
        %s1348 = scalar_lea.vmem %s182, %s1347
        %v1349 = vld [vmem:[%s1348] sm:$0x1]
        %v1350 = vld [vmem:[%s1035] sm:$0x1]
        %v1351 = vld [vmem:[%s1194] sm:$0x1]
        %s1352 = sadd.s32 %s1342, 48
        %s1353 = scalar_lea.vmem %s182, %s1352
        %v1354 = vld [vmem:[%s1353] sm:$0x1]
        %v1356 = vrot.slane %v1340, 7
        %1357 = vrot.lane.b32.xlu0 %v1356, 127
        %v1358 = vpop.permute.xlu0 %1357
        %v1360 = vrot.slane %v1340, 6
        %1361 = vrot.lane.b32.xlu0 %v1360, 126
        %v1362 = vpop.permute.xlu0 %1361
        %v1365 = vrot.slane %v1341, 5
        %v1367 = vrot.slane %v1341, 4
        %1368 = vrot.lane.b32.xlu0 %v1367, 127
        %v1369 = vpop.permute.xlu0 %1368
        %v1371 = vrot.slane %v1341, 3
        %1372 = vrot.lane.b32.xlu0 %v1371, 126
        %v1373 = vpop.permute.xlu0 %1372
        %v1376 = vrot.slane %v1344, 2
        %v1378 = vrot.slane %v1344, 1
        %1379 = vrot.lane.b32.xlu0 %v1378, 127
        %v1380 = vpop.permute.xlu0 %1379
        %1382 = vrot.lane.b32.xlu0 %v1344, 126
        %v1383 = vpop.permute.xlu0 %1382
        %v1386 = vrot.slane %v1345, 7
        %v1388 = vrot.slane %v1345, 6
        %1389 = vrot.lane.b32.xlu0 %v1388, 127
        %v1390 = vpop.permute.xlu0 %1389
        %v1392 = vrot.slane %v1345, 5
        %1393 = vrot.lane.b32.xlu0 %v1392, 126
        %v1394 = vpop.permute.xlu0 %1393
        %v1397 = vrot.slane %v1346, 4
        %v1399 = vrot.slane %v1346, 3
        %1400 = vrot.lane.b32.xlu0 %v1399, 127
        %v1401 = vpop.permute.xlu0 %1400
        %v1403 = vrot.slane %v1346, 2
        %1404 = vrot.lane.b32.xlu0 %v1403, 126
        %v1405 = vpop.permute.xlu0 %1404
        %v1408 = vrot.slane %v1349, 1
        %v1410 = vsel %vm271, %v1340, %v1358
        %v1411 = vsel %vm273, %v1410, %v1362
        %v1412 = vsel %vm275, %v1411, %v1365
        %v1413 = vsel %vm277, %v1412, %v1369
        %v1414 = vsel %vm279, %v1413, %v1373
        %v1415 = vsel %vm281, %v1414, %v1376
        %v1416 = vsel %vm283, %v1415, %v1380
        %v1417 = vsel %vm271, %v1383, %v1386
        %v1418 = vsel %vm273, %v1417, %v1390
        %v1419 = vsel %vm275, %v1418, %v1394
        %v1420 = vsel %vm277, %v1419, %v1397
        %v1421 = vsel %vm279, %v1420, %v1401
        %v1422 = vsel %vm281, %v1421, %v1405
        %v1423 = vsel %vm283, %v1422, %v1408
        %v1424 = vrot.slane %v1349, 7
        %1425 = vrot.lane.b32.xlu0 %v1424, 127
        %v1426 = vpop.permute.xlu0 %1425
        %v1429 = vrot.slane %v1350, 6
        %1430 = vrot.lane.b32.xlu0 %v1429, 1
        %v1431 = vpop.permute.xlu0 %1430
        %v1433 = vrot.slane %v1350, 5
        %v1435 = vrot.slane %v1350, 4
        %1436 = vrot.lane.b32.xlu0 %v1435, 127
        %v1437 = vpop.permute.xlu0 %1436
        %v1440 = vrot.slane %v1351, 3
        %1441 = vrot.lane.b32.xlu0 %v1440, 1
        %v1442 = vpop.permute.xlu0 %1441
        %v1444 = vrot.slane %v1351, 2
        %v1446 = vrot.slane %v1351, 1
        %1447 = vrot.lane.b32.xlu0 %v1446, 127
        %v1448 = vpop.permute.xlu0 %1447
        %1451 = vrot.lane.b32.xlu0 %v1354, 1
        %v1452 = vpop.permute.xlu0 %1451
        %v1454 = vrot.slane %v1354, 7
        %v1456 = vrot.slane %v1354, 6
        %1457 = vrot.lane.b32.xlu0 %v1456, 127
        %v1458 = vpop.permute.xlu0 %1457
        %v1460 = vsel %vm271, %v1349, %v1426
        %v1461 = vsel %vm273, %v1460, %v1431
        %v1462 = vsel %vm275, %v1461, %v1433
        %v1463 = vsel %vm277, %v1462, %v1437
        %v1464 = vsel %vm279, %v1463, %v1442
        %v1465 = vsel %vm281, %v1464, %v1444
        %v1466 = vsel %vm283, %v1465, %v1448
        %v1467 = vsel %vm271, %v1452, %v1454
        %v1468 = vsel %vm273, %v1467, %v1458
        %v1469 = vsel %vm275, %v1468, 0.0
        %1472 = vrot.lane.b32.xlu0 %v1466, 127
        %v1473 = vpop.permute.xlu0 %1472
        %1474 = vrot.lane.b32.xlu0 %v1469, 127
        %v1475 = vpop.permute.xlu0 %1474
        %v1478 = vpack.c.bf16 %v1423, %v1416
        %v1479 = vpack.c.bf16 %v1475, %v1473
        %1480 = vmatpush.bf16.msra.mxu0 0
        %1481 = vmatpush.bf16.msra.mxu0 0
        %1482 = vmatpush.bf16.msra.mxu0 0
        %1483 = vmatpush.bf16.msra.mxu0 0
        %1484 = vmatpush.bf16.msra.mxu0 0
        %1485 = vmatpush.bf16.msra.mxu0 0
        %1486 = vmatpush.bf16.msra.mxu0 %v1479
        %1487 = vmatpush.bf16.msra.mxu0 %v1478
        %1488 = vmatmul.bf16.gmra.mxu0 %v365
        %v1489 = vpop.f32.mrf.mxu0
        %v1490 = vadd.f32 %v351, %v1489
        %v1491 = vpop.f32.mrf.mxu0
        %v1492 = vadd.f32 %v356, %v1491
        %1493 = vdwg.mxu0
        %v1494 = vmax.f32 %v1490, 0.0
        %v1495 = vmax.f32 %v1492, 0.0
        %s1496 = scalar_lea.vmem %s177, 112 [#allocation2]
        %1497 = vst.msk [vmem:[%s1496] sm:$0xff] %vm383, %v1494
        %1498 = vst.msk [vmem:[%s1496 + $0x8] sm:$0xff] %vm383, %v1495
        %s1499 = sand.u32 %s107, 1
        %s1500 = scalar_lea.sflag [#allocation3], %s1499
        %s1501 = sand.u32 %s107, 1
        %s1502 = smul.addr %s1501, 128
        %s1503 = scalar_lea.vmem [#allocation2], %s1502
        // Predicated region
        $region33: #{panovit_forward.2} parent=31 // pred_check
          %p1504 = pneg %p117
        $region34: #{panovit_forward.2} parent=31 // pred_check_branch
          %1506 = sbr.rel (%p1504) target = $region36
        $region35: #{panovit_forward.2} parent=31 // pred_region
          %s1507 = smul.u32 8, %s22
          %1509 = vsyncadd %s1500, 0
          %s1510 = smul.addr %s1507, 2
          %s1511 = smul.addr %s21, 32
          %s1512 = sadd.s32 %s1510, %s1511
          %s1513 = smul.addr %s1512, 8
          %s1514 = scalar_lea.hbm %s3, %s1513
          %s1515 = sshll.u32 %s1503, 4
          %s1516 = int_to_ptr.vmem [resolvable:$true] %s1515
          %s1517 = sshll.u32 %s1514, 4
          %s1518 = int_to_ptr.hbm [resolvable:$true] %s1517
          %1523 = dma.vmem_to_hbm [thread:$0]  %s1516, 2048, %s1518, %s1500, 128, 128, 8
        $region36: #{panovit_forward.2} parent=31 // pred_fallthru
          _
      $region32: #{panovit_forward.2} parent=5 // pred_fallthru
        _
      %p1524 = scmp.le.s32.totalorder 2, %s12
      // Predicated region
      $region37: #{panovit_forward.2} parent=5 // pred_check
        %p1525 = pneg %p1524
      $region38: #{panovit_forward.2} parent=5 // pred_check_branch
        %1527 = sbr.rel (%p1525) target = $region40
      $region39: #{panovit_forward.2} parent=5 // pred_region
        %s1528 = ssub.s32 %s12, 2
        // Predicated region
        $region41: #{panovit_forward.2} parent=39 // pred_check
          %p1529 = pneg %p123
        $region42: #{panovit_forward.2} parent=39 // pred_check_branch
          %1531 = sbr.rel (%p1529) target = $region44
        $region43: #{panovit_forward.2} parent=39 // pred_region
          %s1532 = sand.u32 %s108, 1
          %s1533 = scalar_lea.sflag [#allocation3], %s1532
          %s1534 = sand.u32 %s108, 1
          %s1535 = smul.addr %s1534, 128
          %s1536 = scalar_lea.vmem [#allocation2], %s1535
          %1538 = dma.done %s1533, 2048
        $region44: #{panovit_forward.2} parent=39 // pred_fallthru
          _
      $region40: #{panovit_forward.2} parent=5 // pred_fallthru
        _
    $region6: #{panovit_forward.2} parent=1 // loop_footer
      %s16 = sadd.s32 1, %s12
    $region7: #{panovit_forward.2} parent=1 // loop_footer_branch
      %11 = sbr.rel target = $region3
    $region8: #{panovit_forward.2} parent=1 // loop_exit
      _
    %1539 = vsyncpa [#allocation3], 1
    %s1540 = scalar_lea.sflag [#allocation3], 1
    %1541 = vsyncpa %s1540, 1

</llo_original>
